<compile_context>
chip_gen: v6e
topology: v6e:2x2x1
jax: 0.10.0
libtpu: 0.0.40
codegen_flags: <defaults>
</compile_context>

<pallas_src>
import functools

import jax
import jax.numpy as jnp
from jax import lax
from jax.experimental import pallas as pl
from jax.experimental.pallas import tpu as pltpu


# ------------------------------ fused kernel --------------------------------

def _decoder_kernel(
    tgt_ref, mem_ref, pos_ref, qpos_ref,
    w_qk_s_ref, b_qk_s_ref, w_v_s_ref, b_v_s_ref, wo_s_ref, bo_s_ref,
    w_q_c_ref, b_q_c_ref, w_k_c_ref, b_k_c_ref, w_v_c_ref, b_v_c_ref,
    wo_c_ref, bo_c_ref,
    w1_ref, b1_ref, w2_ref, b2_ref,
    n1w_ref, n1b_ref, n2w_ref, n2b_ref, n3w_ref, n3b_ref,
    nfw_ref, nfb_ref,
    out_ref,
    *, H, num_layers,
):
    f32 = jnp.float32
    bf16 = jnp.bfloat16
    D = out_ref.shape[-1]
    dh = D // H
    scale = 1.0 / float(dh) ** 0.5

    # ---- per-batch activation block + weights, loaded once ----
    x = tgt_ref[...]          # (Lq, D) f32
    qpos = qpos_ref[...]      # (Lq, D)
    mem = mem_ref[...]        # (Lk, D)
    pos = pos_ref[...]        # (Lk, D)

    # MXU operands in bf16 (f32 accumulation); biases / LN params stay f32.
    w_qk_s = w_qk_s_ref[...].astype(bf16)   # (D, 2D) fused self-attn Q+K
    w_v_s = w_v_s_ref[...].astype(bf16)     # (D, D)
    wo_s = wo_s_ref[...].astype(bf16)       # (D, D)
    w_q_c = w_q_c_ref[...].astype(bf16)
    w_k_c = w_k_c_ref[...].astype(bf16)
    w_v_c = w_v_c_ref[...].astype(bf16)
    wo_c = wo_c_ref[...].astype(bf16)
    w1 = w1_ref[...].astype(bf16)           # (D, F)
    w2 = w2_ref[...].astype(bf16)           # (F, D)

    b_qk_s = b_qk_s_ref[...]; b_v_s = b_v_s_ref[...]; bo_s = bo_s_ref[...]
    b_q_c = b_q_c_ref[...]; b_k_c = b_k_c_ref[...]; b_v_c = b_v_c_ref[...]
    bo_c = bo_c_ref[...]
    b1 = b1_ref[...]; b2 = b2_ref[...]
    n1w = n1w_ref[...]; n1b = n1b_ref[...]
    n2w = n2w_ref[...]; n2b = n2b_ref[...]
    n3w = n3w_ref[...]; n3b = n3b_ref[...]
    nfw = nfw_ref[...]; nfb = nfb_ref[...]

    def layer_norm(y, g, b):
        mean = jnp.mean(y, axis=-1, keepdims=True)
        var = jnp.mean(jnp.square(y - mean), axis=-1, keepdims=True)
        return (y - mean) * lax.rsqrt(var + 1e-5) * g + b

    def split_heads(t):
        # (L, D) -> (H, L, dh) bf16 : head dim becomes a leading batch axis so
        # the attention einsums use the MXU-friendly leading-batch form.
        return jnp.stack([t[:, h * dh:(h + 1) * dh] for h in range(H)],
                         axis=0).astype(bf16)

    def attend(q3, k3, v3, wo, bo):
        # Head-batched scores / softmax / PV, then ONE D-wide output projection
        # (no per-head serial accumulate).  q3 is pre-scaled by 1/sqrt(dh).
        s = jnp.einsum("hqd,hkd->hqk", q3, k3, preferred_element_type=f32)
        m = jnp.max(s, axis=-1, keepdims=True)
        p = jnp.exp(s - m)
        p = p * (1.0 / jnp.sum(p, axis=-1, keepdims=True))      # exact softmax
        o = jnp.einsum("hqk,hkd->hqd", p.astype(bf16), v3,
                       preferred_element_type=f32)               # (H, Lq, dh)
        o2 = jnp.concatenate([o[h] for h in range(H)], axis=-1)  # (Lq, D)
        return jnp.dot(o2.astype(bf16), wo, preferred_element_type=f32) + bo

    # Cross-attention K/V are layer-invariant (shared weights, fixed memory),
    # so compute them once and keep them packed in bf16.
    mem_pos = mem + pos
    k_cross = split_heads(
        jnp.dot(mem_pos.astype(bf16), w_k_c, preferred_element_type=f32) + b_k_c)
    v_cross = split_heads(
        jnp.dot(mem.astype(bf16), w_v_c, preferred_element_type=f32) + b_v_c)

    def one_layer(x):
        # ---- self attention (post-norm, DETR forward_post) ----
        q_in = (x + qpos).astype(bf16)                       # q and k share input
        qk = jnp.dot(q_in, w_qk_s, preferred_element_type=f32) + b_qk_s  # (Lq,2D)
        q = qk[:, :D] * scale          # fold 1/sqrt(dh) into q, not into scores
        k = qk[:, D:]
        v = jnp.dot(x.astype(bf16), w_v_s, preferred_element_type=f32) + b_v_s
        sa = attend(split_heads(q), split_heads(k), split_heads(v), wo_s, bo_s)
        x = layer_norm(x + sa, n1w, n1b)

        # ---- cross attention ----
        q_c = jnp.dot((x + qpos).astype(bf16), w_q_c,
                      preferred_element_type=f32) + b_q_c
        ca = attend(split_heads(q_c * scale), k_cross, v_cross, wo_c, bo_c)
        x = layer_norm(x + ca, n2w, n2b)

        # ---- feed-forward ----
        h1 = jnp.maximum(
            jnp.dot(x.astype(bf16), w1, preferred_element_type=f32) + b1, 0.0)
        y = jnp.dot(h1.astype(bf16), w2, preferred_element_type=f32) + b2
        return layer_norm(x + y, n3w, n3b)

    # All layers share one parameter set -> the carry is just x; fori_loop
    # bounds live ranges (vs. a statically unrolled Python loop).
    x = lax.fori_loop(0, num_layers, lambda i, xv: one_layer(xv), x)

    out_ref[...] = layer_norm(x, nfw, nfb).astype(out_ref.dtype)


# ------------------------------ JAX wrapper ----------------------------------

def transformer_decoder(tgt, memory, params, final_norm, pos, query_pos,
                        *, nhead, num_layers):
    """tgt/memory/pos/query_pos in PyTorch (seq, batch, d_model) layout."""
    L, B, D = tgt.shape
    S = memory.shape[0]

    to_b = lambda a: a.transpose(1, 0, 2)          # (batch, seq, D)
    row = lambda v: v.reshape(1, -1)
    sa, ca = params["self_attn"], params["cross_attn"]
    w_s, bi_s = sa["in_proj_weight"], sa["in_proj_bias"]
    w_c, bi_c = ca["in_proj_weight"], ca["in_proj_bias"]

    # torch stores y = x @ W^T + b; transpose / split once at trace time.
    inputs = (
        to_b(tgt), to_b(memory), to_b(pos), to_b(query_pos),
        w_s[:2 * D].T, row(bi_s[:2 * D]),          # fused self-attn Q+K
        w_s[2 * D:].T, row(bi_s[2 * D:]),          # self-attn V
        sa["out_proj_weight"].T, row(sa["out_proj_bias"]),
        w_c[:D].T, row(bi_c[:D]),                  # cross Q
        w_c[D:2 * D].T, row(bi_c[D:2 * D]),        # cross K
        w_c[2 * D:].T, row(bi_c[2 * D:]),          # cross V
        ca["out_proj_weight"].T, row(ca["out_proj_bias"]),
        params["lin1_w"].T, row(params["lin1_b"]),
        params["lin2_w"].T, row(params["lin2_b"]),
        row(params["norm1_w"]), row(params["norm1_b"]),
        row(params["norm2_w"]), row(params["norm2_b"]),
        row(params["norm3_w"]), row(params["norm3_b"]),
        row(final_norm[0]), row(final_norm[1]),
    )

    def batched(seq_len):                           # per-batch activation block
        return pl.BlockSpec((None, seq_len, D), lambda b: (b, 0, 0))

    def resident(arr):                              # whole array, stays in VMEM
        return pl.BlockSpec(arr.shape, lambda b: (0, 0))

    in_specs = [batched(L), batched(S), batched(S), batched(L)]
    in_specs += [resident(a) for a in inputs[4:]]

    kernel = functools.partial(_decoder_kernel, H=nhead, num_layers=num_layers)

    out = pl.pallas_call(
        kernel,
        out_shape=jax.ShapeDtypeStruct((B, L, D), jnp.float32),
        grid_spec=pltpu.PrefetchScalarGridSpec(
            num_scalar_prefetch=0,
            grid=(B,),
            in_specs=in_specs,
            out_specs=pl.BlockSpec((None, L, D), lambda b: (b, 0, 0)),
        ),
        compiler_params=pltpu.CompilerParams(
            dimension_semantics=("parallel",),
            vmem_limit_bytes=64 * 1024 * 1024,
        ),
    )(*inputs)
    return out.transpose(1, 0, 2)                   # back to (seq, batch, D)


# ---------------------- pure-JAX reference (for checking) --------------------

def reference_decoder(tgt, memory, p, final_norm, pos, query_pos, nhead, num_layers):
    D = tgt.shape[-1]
    dh = D // nhead

    def ln(x, g, b):
        mean = x.mean(-1, keepdims=True)
        var = ((x - mean) ** 2).mean(-1, keepdims=True)
        return (x - mean) * lax.rsqrt(var + 1e-5) * g + b

    def mha(q_in, k_in, v_in, mp):
        L, B, _ = q_in.shape
        S = k_in.shape[0]
        w, bias = mp["in_proj_weight"], mp["in_proj_bias"]
        q = (q_in @ w[:D].T + bias[:D]).reshape(L, B, nhead, dh)
        k = (k_in @ w[D:2 * D].T + bias[D:2 * D]).reshape(S, B, nhead, dh)
        v = (v_in @ w[2 * D:].T + bias[2 * D:]).reshape(S, B, nhead, dh)
        s = jnp.einsum("qbhd,kbhd->bhqk", q, k) / (dh ** 0.5)
        a = jax.nn.softmax(s, axis=-1)
        o = jnp.einsum("bhqk,kbhd->qbhd", a, v).reshape(L, B, D)
        return o @ mp["out_proj_weight"].T + mp["out_proj_bias"]

    x = tgt
    for _ in range(num_layers):
        q = x + query_pos
        x = ln(x + mha(q, q, x, p["self_attn"]), p["norm1_w"], p["norm1_b"])
        x = ln(x + mha(x + query_pos, memory + pos, memory, p["cross_attn"]),
               p["norm2_w"], p["norm2_b"])
        h = jnp.maximum(x @ p["lin1_w"].T + p["lin1_b"], 0.0)
        x = ln(x + (h @ p["lin2_w"].T + p["lin2_b"]), p["norm3_w"], p["norm3_b"])
    return ln(x, final_norm[0], final_norm[1])


# ------------------------------- param init ----------------------------------

def init_params(key, d_model, nhead, dim_ffn):
    ks = list(jax.random.split(key, 20))
    nrm = lambda k, shape: 0.02 * jax.random.normal(k, shape, jnp.float32)

    def mha_params(k0, k1, k2, k3):
        return {
            "in_proj_weight": nrm(k0, (3 * d_model, d_model)),   # torch layout
            "in_proj_bias": nrm(k1, (3 * d_model,)),
            "out_proj_weight": nrm(k2, (d_model, d_model)),
            "out_proj_bias": nrm(k3, (d_model,)),
        }

    params = {
        "self_attn": mha_params(*ks[0:4]),
        "cross_attn": mha_params(*ks[4:8]),
        "lin1_w": nrm(ks[8], (dim_ffn, d_model)),    # torch (out, in)
        "lin1_b": nrm(ks[9], (dim_ffn,)),
        "lin2_w": nrm(ks[10], (d_model, dim_ffn)),
        "lin2_b": nrm(ks[11], (d_model,)),
        "norm1_w": 1.0 + nrm(ks[12], (d_model,)), "norm1_b": nrm(ks[13], (d_model,)),
        "norm2_w": 1.0 + nrm(ks[14], (d_model,)), "norm2_b": nrm(ks[15], (d_model,)),
        "norm3_w": 1.0 + nrm(ks[16], (d_model,)), "norm3_b": nrm(ks[17], (d_model,)),
    }
    final_norm = (1.0 + nrm(ks[18], (d_model,)), nrm(ks[19], (d_model,)))
    return params, final_norm


# ---------------------------------- main --------------------------------------

if __name__ == "__main__":
    d_model, nhead, dim_ffn, num_layers = 32, 4, 64, 2
    L_tgt, L_mem, B = 8, 16, 2

    key = jax.random.PRNGKey(0)
    k_tgt, k_mem, k_pos, k_qpos, k_par = jax.random.split(key, 5)

    tgt = jax.random.normal(k_tgt, (L_tgt, B, d_model), jnp.float32)
    memory = jax.random.normal(k_mem, (L_mem, B, d_model), jnp.float32)
    pos = jax.random.normal(k_pos, (L_mem, B, d_model), jnp.float32)
    query_pos = jax.random.normal(k_qpos, (L_tgt, B, d_model), jnp.float32)

    params, final_norm = init_params(k_par, d_model, nhead, dim_ffn)

    fwd = jax.jit(functools.partial(transformer_decoder,
                                    nhead=nhead, num_layers=num_layers))
    out = jax.block_until_ready(fwd(tgt, memory, params, final_norm, pos, query_pos))

    assert out.shape == (L_tgt, B, d_model)
    assert bool(jnp.all(jnp.isfinite(out)))

    # Correctness check against a plain-JAX/XLA reference of the same module
    # (kernel uses bf16 MXU operands with f32 accumulation -> loose tolerance).
    with jax.default_matmul_precision("highest"):
        ref = reference_decoder(tgt, memory, params, final_norm, pos, query_pos,
                                nhead, num_layers)
    max_err = float(jnp.max(jnp.abs(out - ref)))
    assert max_err < 5e-2, f"kernel/reference mismatch: max|diff|={max_err}"

    print("KERNEL_OK")
</pallas_src>

<mosaic_0001>
module attributes {stable_mosaic.version = 11 : i64} {
  func.func @_decoder_kernel(%arg0: i32, %arg1: memref<1x8x32xf32, #tpu.memory_space<vmem>>, %arg2: memref<1x16x32xf32, #tpu.memory_space<vmem>>, %arg3: memref<1x16x32xf32, #tpu.memory_space<vmem>>, %arg4: memref<1x8x32xf32, #tpu.memory_space<vmem>>, %arg5: memref<32x64xf32, #tpu.memory_space<vmem>>, %arg6: memref<1x64xf32, #tpu.memory_space<vmem>>, %arg7: memref<32x32xf32, #tpu.memory_space<vmem>>, %arg8: memref<1x32xf32, #tpu.memory_space<vmem>>, %arg9: memref<32x32xf32, #tpu.memory_space<vmem>>, %arg10: memref<1x32xf32, #tpu.memory_space<vmem>>, %arg11: memref<32x32xf32, #tpu.memory_space<vmem>>, %arg12: memref<1x32xf32, #tpu.memory_space<vmem>>, %arg13: memref<32x32xf32, #tpu.memory_space<vmem>>, %arg14: memref<1x32xf32, #tpu.memory_space<vmem>>, %arg15: memref<32x32xf32, #tpu.memory_space<vmem>>, %arg16: memref<1x32xf32, #tpu.memory_space<vmem>>, %arg17: memref<32x32xf32, #tpu.memory_space<vmem>>, %arg18: memref<1x32xf32, #tpu.memory_space<vmem>>, %arg19: memref<32x64xf32, #tpu.memory_space<vmem>>, %arg20: memref<1x64xf32, #tpu.memory_space<vmem>>, %arg21: memref<64x32xf32, #tpu.memory_space<vmem>>, %arg22: memref<1x32xf32, #tpu.memory_space<vmem>>, %arg23: memref<1x32xf32, #tpu.memory_space<vmem>>, %arg24: memref<1x32xf32, #tpu.memory_space<vmem>>, %arg25: memref<1x32xf32, #tpu.memory_space<vmem>>, %arg26: memref<1x32xf32, #tpu.memory_space<vmem>>, %arg27: memref<1x32xf32, #tpu.memory_space<vmem>>, %arg28: memref<1x32xf32, #tpu.memory_space<vmem>>, %arg29: memref<1x32xf32, #tpu.memory_space<vmem>>, %arg30: memref<1x32xf32, #tpu.memory_space<vmem>>, %arg31: memref<1x8x32xf32, #tpu.memory_space<vmem>>) attributes {dimension_semantics = [#tpu.dimension_semantics<parallel>], iteration_bounds = array<i64: 2>, scalar_prefetch = 0 : i64, scratch_operands = 0 : i64, tpu.core_type = #tpu.core_type<tc>, window_params = [{transform_indices = @transform_0, window_bounds = array<i64: 1, 8, 32>}, {transform_indices = @transform_1, window_bounds = array<i64: 1, 16, 32>}, {transform_indices = @transform_2, window_bounds = array<i64: 1, 16, 32>}, {transform_indices = @transform_3, window_bounds = array<i64: 1, 8, 32>}, {pipeline_mode = #tpu.pipeline_mode<synchronous>, transform_indices = @transform_4, window_bounds = array<i64: 32, 64>}, {pipeline_mode = #tpu.pipeline_mode<synchronous>, transform_indices = @transform_5, window_bounds = array<i64: 1, 64>}, {pipeline_mode = #tpu.pipeline_mode<synchronous>, transform_indices = @transform_6, window_bounds = array<i64: 32, 32>}, {pipeline_mode = #tpu.pipeline_mode<synchronous>, transform_indices = @transform_7, window_bounds = array<i64: 1, 32>}, {pipeline_mode = #tpu.pipeline_mode<synchronous>, transform_indices = @transform_8, window_bounds = array<i64: 32, 32>}, {pipeline_mode = #tpu.pipeline_mode<synchronous>, transform_indices = @transform_9, window_bounds = array<i64: 1, 32>}, {pipeline_mode = #tpu.pipeline_mode<synchronous>, transform_indices = @transform_10, window_bounds = array<i64: 32, 32>}, {pipeline_mode = #tpu.pipeline_mode<synchronous>, transform_indices = @transform_11, window_bounds = array<i64: 1, 32>}, {pipeline_mode = #tpu.pipeline_mode<synchronous>, transform_indices = @transform_12, window_bounds = array<i64: 32, 32>}, {pipeline_mode = #tpu.pipeline_mode<synchronous>, transform_indices = @transform_13, window_bounds = array<i64: 1, 32>}, {pipeline_mode = #tpu.pipeline_mode<synchronous>, transform_indices = @transform_14, window_bounds = array<i64: 32, 32>}, {pipeline_mode = #tpu.pipeline_mode<synchronous>, transform_indices = @transform_15, window_bounds = array<i64: 1, 32>}, {pipeline_mode = #tpu.pipeline_mode<synchronous>, transform_indices = @transform_16, window_bounds = array<i64: 32, 32>}, {pipeline_mode = #tpu.pipeline_mode<synchronous>, transform_indices = @transform_17, window_bounds = array<i64: 1, 32>}, {pipeline_mode = #tpu.pipeline_mode<synchronous>, transform_indices = @transform_18, window_bounds = array<i64: 32, 64>}, {pipeline_mode = #tpu.pipeline_mode<synchronous>, transform_indices = @transform_19, window_bounds = array<i64: 1, 64>}, {pipeline_mode = #tpu.pipeline_mode<synchronous>, transform_indices = @transform_20, window_bounds = array<i64: 64, 32>}, {pipeline_mode = #tpu.pipeline_mode<synchronous>, transform_indices = @transform_21, window_bounds = array<i64: 1, 32>}, {pipeline_mode = #tpu.pipeline_mode<synchronous>, transform_indices = @transform_22, window_bounds = array<i64: 1, 32>}, {pipeline_mode = #tpu.pipeline_mode<synchronous>, transform_indices = @transform_23, window_bounds = array<i64: 1, 32>}, {pipeline_mode = #tpu.pipeline_mode<synchronous>, transform_indices = @transform_24, window_bounds = array<i64: 1, 32>}, {pipeline_mode = #tpu.pipeline_mode<synchronous>, transform_indices = @transform_25, window_bounds = array<i64: 1, 32>}, {pipeline_mode = #tpu.pipeline_mode<synchronous>, transform_indices = @transform_26, window_bounds = array<i64: 1, 32>}, {pipeline_mode = #tpu.pipeline_mode<synchronous>, transform_indices = @transform_27, window_bounds = array<i64: 1, 32>}, {pipeline_mode = #tpu.pipeline_mode<synchronous>, transform_indices = @transform_28, window_bounds = array<i64: 1, 32>}, {pipeline_mode = #tpu.pipeline_mode<synchronous>, transform_indices = @transform_29, window_bounds = array<i64: 1, 32>}, {transform_indices = @transform_30, window_bounds = array<i64: 1, 8, 32>}]} {
    %c0 = arith.constant 0 : index
    %c0_0 = arith.constant 0 : index
    %c0_1 = arith.constant 0 : index
    %0 = vector.load %arg1[%c0, %c0_0, %c0_1] : memref<1x8x32xf32, #tpu.memory_space<vmem>>, vector<1x8x32xf32>
    %1 = vector.shape_cast %0 : vector<1x8x32xf32> to vector<8x32xf32>
    %c0_2 = arith.constant 0 : index
    %c0_3 = arith.constant 0 : index
    %c0_4 = arith.constant 0 : index
    %2 = vector.load %arg4[%c0_2, %c0_3, %c0_4] : memref<1x8x32xf32, #tpu.memory_space<vmem>>, vector<1x8x32xf32>
    %3 = vector.shape_cast %2 : vector<1x8x32xf32> to vector<8x32xf32>
    %c0_5 = arith.constant 0 : index
    %c0_6 = arith.constant 0 : index
    %c0_7 = arith.constant 0 : index
    %4 = vector.load %arg2[%c0_5, %c0_6, %c0_7] : memref<1x16x32xf32, #tpu.memory_space<vmem>>, vector<1x16x32xf32>
    %5 = vector.shape_cast %4 : vector<1x16x32xf32> to vector<16x32xf32>
    %c0_8 = arith.constant 0 : index
    %c0_9 = arith.constant 0 : index
    %c0_10 = arith.constant 0 : index
    %6 = vector.load %arg3[%c0_8, %c0_9, %c0_10] : memref<1x16x32xf32, #tpu.memory_space<vmem>>, vector<1x16x32xf32>
    %7 = vector.shape_cast %6 : vector<1x16x32xf32> to vector<16x32xf32>
    %c0_11 = arith.constant 0 : index
    %c0_12 = arith.constant 0 : index
    %8 = vector.load %arg5[%c0_11, %c0_12] : memref<32x64xf32, #tpu.memory_space<vmem>>, vector<32x64xf32>
    %9 = arith.truncf %8 : vector<32x64xf32> to vector<32x64xbf16>
    %c0_13 = arith.constant 0 : index
    %c0_14 = arith.constant 0 : index
    %10 = vector.load %arg7[%c0_13, %c0_14] : memref<32x32xf32, #tpu.memory_space<vmem>>, vector<32x32xf32>
    %11 = arith.truncf %10 : vector<32x32xf32> to vector<32x32xbf16>
    %c0_15 = arith.constant 0 : index
    %c0_16 = arith.constant 0 : index
    %12 = vector.load %arg9[%c0_15, %c0_16] : memref<32x32xf32, #tpu.memory_space<vmem>>, vector<32x32xf32>
    %13 = arith.truncf %12 : vector<32x32xf32> to vector<32x32xbf16>
    %c0_17 = arith.constant 0 : index
    %c0_18 = arith.constant 0 : index
    %14 = vector.load %arg11[%c0_17, %c0_18] : memref<32x32xf32, #tpu.memory_space<vmem>>, vector<32x32xf32>
    %15 = arith.truncf %14 : vector<32x32xf32> to vector<32x32xbf16>
    %c0_19 = arith.constant 0 : index
    %c0_20 = arith.constant 0 : index
    %16 = vector.load %arg13[%c0_19, %c0_20] : memref<32x32xf32, #tpu.memory_space<vmem>>, vector<32x32xf32>
    %17 = arith.truncf %16 : vector<32x32xf32> to vector<32x32xbf16>
    %c0_21 = arith.constant 0 : index
    %c0_22 = arith.constant 0 : index
    %18 = vector.load %arg15[%c0_21, %c0_22] : memref<32x32xf32, #tpu.memory_space<vmem>>, vector<32x32xf32>
    %19 = arith.truncf %18 : vector<32x32xf32> to vector<32x32xbf16>
    %c0_23 = arith.constant 0 : index
    %c0_24 = arith.constant 0 : index
    %20 = vector.load %arg17[%c0_23, %c0_24] : memref<32x32xf32, #tpu.memory_space<vmem>>, vector<32x32xf32>
    %21 = arith.truncf %20 : vector<32x32xf32> to vector<32x32xbf16>
    %c0_25 = arith.constant 0 : index
    %c0_26 = arith.constant 0 : index
    %22 = vector.load %arg19[%c0_25, %c0_26] : memref<32x64xf32, #tpu.memory_space<vmem>>, vector<32x64xf32>
    %23 = arith.truncf %22 : vector<32x64xf32> to vector<32x64xbf16>
    %c0_27 = arith.constant 0 : index
    %c0_28 = arith.constant 0 : index
    %24 = vector.load %arg21[%c0_27, %c0_28] : memref<64x32xf32, #tpu.memory_space<vmem>>, vector<64x32xf32>
    %25 = arith.truncf %24 : vector<64x32xf32> to vector<64x32xbf16>
    %c0_29 = arith.constant 0 : index
    %c0_30 = arith.constant 0 : index
    %26 = vector.load %arg6[%c0_29, %c0_30] : memref<1x64xf32, #tpu.memory_space<vmem>>, vector<1x64xf32>
    %c0_31 = arith.constant 0 : index
    %c0_32 = arith.constant 0 : index
    %27 = vector.load %arg8[%c0_31, %c0_32] : memref<1x32xf32, #tpu.memory_space<vmem>>, vector<1x32xf32>
    %c0_33 = arith.constant 0 : index
    %c0_34 = arith.constant 0 : index
    %28 = vector.load %arg10[%c0_33, %c0_34] : memref<1x32xf32, #tpu.memory_space<vmem>>, vector<1x32xf32>
    %c0_35 = arith.constant 0 : index
    %c0_36 = arith.constant 0 : index
    %29 = vector.load %arg12[%c0_35, %c0_36] : memref<1x32xf32, #tpu.memory_space<vmem>>, vector<1x32xf32>
    %c0_37 = arith.constant 0 : index
    %c0_38 = arith.constant 0 : index
    %30 = vector.load %arg14[%c0_37, %c0_38] : memref<1x32xf32, #tpu.memory_space<vmem>>, vector<1x32xf32>
    %c0_39 = arith.constant 0 : index
    %c0_40 = arith.constant 0 : index
    %31 = vector.load %arg16[%c0_39, %c0_40] : memref<1x32xf32, #tpu.memory_space<vmem>>, vector<1x32xf32>
    %c0_41 = arith.constant 0 : index
    %c0_42 = arith.constant 0 : index
    %32 = vector.load %arg18[%c0_41, %c0_42] : memref<1x32xf32, #tpu.memory_space<vmem>>, vector<1x32xf32>
    %c0_43 = arith.constant 0 : index
    %c0_44 = arith.constant 0 : index
    %33 = vector.load %arg20[%c0_43, %c0_44] : memref<1x64xf32, #tpu.memory_space<vmem>>, vector<1x64xf32>
    %c0_45 = arith.constant 0 : index
    %c0_46 = arith.constant 0 : index
    %34 = vector.load %arg22[%c0_45, %c0_46] : memref<1x32xf32, #tpu.memory_space<vmem>>, vector<1x32xf32>
    %c0_47 = arith.constant 0 : index
    %c0_48 = arith.constant 0 : index
    %35 = vector.load %arg23[%c0_47, %c0_48] : memref<1x32xf32, #tpu.memory_space<vmem>>, vector<1x32xf32>
    %c0_49 = arith.constant 0 : index
    %c0_50 = arith.constant 0 : index
    %36 = vector.load %arg24[%c0_49, %c0_50] : memref<1x32xf32, #tpu.memory_space<vmem>>, vector<1x32xf32>
    %c0_51 = arith.constant 0 : index
    %c0_52 = arith.constant 0 : index
    %37 = vector.load %arg25[%c0_51, %c0_52] : memref<1x32xf32, #tpu.memory_space<vmem>>, vector<1x32xf32>
    %c0_53 = arith.constant 0 : index
    %c0_54 = arith.constant 0 : index
    %38 = vector.load %arg26[%c0_53, %c0_54] : memref<1x32xf32, #tpu.memory_space<vmem>>, vector<1x32xf32>
    %c0_55 = arith.constant 0 : index
    %c0_56 = arith.constant 0 : index
    %39 = vector.load %arg27[%c0_55, %c0_56] : memref<1x32xf32, #tpu.memory_space<vmem>>, vector<1x32xf32>
    %c0_57 = arith.constant 0 : index
    %c0_58 = arith.constant 0 : index
    %40 = vector.load %arg28[%c0_57, %c0_58] : memref<1x32xf32, #tpu.memory_space<vmem>>, vector<1x32xf32>
    %c0_59 = arith.constant 0 : index
    %c0_60 = arith.constant 0 : index
    %41 = vector.load %arg29[%c0_59, %c0_60] : memref<1x32xf32, #tpu.memory_space<vmem>>, vector<1x32xf32>
    %c0_61 = arith.constant 0 : index
    %c0_62 = arith.constant 0 : index
    %42 = vector.load %arg30[%c0_61, %c0_62] : memref<1x32xf32, #tpu.memory_space<vmem>>, vector<1x32xf32>
    %43 = arith.addf %5, %7 : vector<16x32xf32>
    %44 = arith.truncf %43 : vector<16x32xf32> to vector<16x32xbf16>
    %cst = arith.constant dense<0.000000e+00> : vector<16x32xf32>
    %45 = tpu.matmul %44, %17, %cst {dimension_numbers = #tpu.dot_dimension_numbers<[1], [0], [0], [1], [0, 0, 1, 1], [], []>} : vector<16x32xbf16>, vector<32x32xbf16>, vector<16x32xf32> -> vector<16x32xf32>
    %46 = vector.broadcast %30 : vector<1x32xf32> to vector<16x32xf32>
    %47 = arith.addf %45, %46 : vector<16x32xf32>
    %48 = vector.extract_strided_slice %47 {offsets = [0, 0], sizes = [16, 8], strides = [1, 1]} : vector<16x32xf32> to vector<16x8xf32>
    %49 = vector.extract_strided_slice %47 {offsets = [0, 8], sizes = [16, 8], strides = [1, 1]} : vector<16x32xf32> to vector<16x8xf32>
    %50 = vector.extract_strided_slice %47 {offsets = [0, 16], sizes = [16, 8], strides = [1, 1]} : vector<16x32xf32> to vector<16x8xf32>
    %51 = vector.extract_strided_slice %47 {offsets = [0, 24], sizes = [16, 8], strides = [1, 1]} : vector<16x32xf32> to vector<16x8xf32>
    %52 = vector.shape_cast %48 : vector<16x8xf32> to vector<1x16x8xf32>
    %53 = vector.shape_cast %49 : vector<16x8xf32> to vector<1x16x8xf32>
    %54 = vector.shape_cast %50 : vector<16x8xf32> to vector<1x16x8xf32>
    %55 = vector.shape_cast %51 : vector<16x8xf32> to vector<1x16x8xf32>
    %56 = tpu.concatenate %52, %53, %54, %55 in 0 : vector<1x16x8xf32>, vector<1x16x8xf32>, vector<1x16x8xf32>, vector<1x16x8xf32> -> vector<4x16x8xf32>
    %57 = arith.truncf %56 : vector<4x16x8xf32> to vector<4x16x8xbf16>
    %58 = arith.truncf %5 : vector<16x32xf32> to vector<16x32xbf16>
    %cst_63 = arith.constant dense<0.000000e+00> : vector<16x32xf32>
    %59 = tpu.matmul %58, %19, %cst_63 {dimension_numbers = #tpu.dot_dimension_numbers<[1], [0], [0], [1], [0, 0, 1, 1], [], []>} : vector<16x32xbf16>, vector<32x32xbf16>, vector<16x32xf32> -> vector<16x32xf32>
    %60 = vector.broadcast %31 : vector<1x32xf32> to vector<16x32xf32>
    %61 = arith.addf %59, %60 : vector<16x32xf32>
    %62 = vector.extract_strided_slice %61 {offsets = [0, 0], sizes = [16, 8], strides = [1, 1]} : vector<16x32xf32> to vector<16x8xf32>
    %63 = vector.extract_strided_slice %61 {offsets = [0, 8], sizes = [16, 8], strides = [1, 1]} : vector<16x32xf32> to vector<16x8xf32>
    %64 = vector.extract_strided_slice %61 {offsets = [0, 16], sizes = [16, 8], strides = [1, 1]} : vector<16x32xf32> to vector<16x8xf32>
    %65 = vector.extract_strided_slice %61 {offsets = [0, 24], sizes = [16, 8], strides = [1, 1]} : vector<16x32xf32> to vector<16x8xf32>
    %66 = vector.shape_cast %62 : vector<16x8xf32> to vector<1x16x8xf32>
    %67 = vector.shape_cast %63 : vector<16x8xf32> to vector<1x16x8xf32>
    %68 = vector.shape_cast %64 : vector<16x8xf32> to vector<1x16x8xf32>
    %69 = vector.shape_cast %65 : vector<16x8xf32> to vector<1x16x8xf32>
    %70 = tpu.concatenate %66, %67, %68, %69 in 0 : vector<1x16x8xf32>, vector<1x16x8xf32>, vector<1x16x8xf32>, vector<1x16x8xf32> -> vector<4x16x8xf32>
    %71 = arith.truncf %70 : vector<4x16x8xf32> to vector<4x16x8xbf16>
    %c0_i32 = arith.constant 0 : i32
    %c2_i32 = arith.constant 2 : i32
    %72 = arith.addi %c0_i32, %c2_i32 : i32
    %c1_i32 = arith.constant 1 : i32
    %73 = scf.for %arg32 = %c0_i32 to %72 step %c1_i32 iter_args(%arg33 = %1) -> (vector<8x32xf32>)  : i32 {
      %99 = arith.addf %arg33, %3 : vector<8x32xf32>
      %100 = arith.truncf %99 : vector<8x32xf32> to vector<8x32xbf16>
      %cst_72 = arith.constant dense<0.000000e+00> : vector<8x64xf32>
      %101 = tpu.matmul %100, %9, %cst_72 {dimension_numbers = #tpu.dot_dimension_numbers<[1], [0], [0], [1], [0, 0, 1, 1], [], []>} : vector<8x32xbf16>, vector<32x64xbf16>, vector<8x64xf32> -> vector<8x64xf32>
      %102 = vector.broadcast %26 : vector<1x64xf32> to vector<8x64xf32>
      %103 = arith.addf %101, %102 : vector<8x64xf32>
      %104 = vector.extract_strided_slice %103 {offsets = [0, 0], sizes = [8, 32], strides = [1, 1]} : vector<8x64xf32> to vector<8x32xf32>
      %cst_73 = arith.constant 0.353553385 : f32
      %105 = vector.broadcast %cst_73 : f32 to vector<8x32xf32>
      %106 = arith.mulf %104, %105 : vector<8x32xf32>
      %107 = vector.extract_strided_slice %103 {offsets = [0, 32], sizes = [8, 32], strides = [1, 1]} : vector<8x64xf32> to vector<8x32xf32>
      %108 = arith.truncf %arg33 : vector<8x32xf32> to vector<8x32xbf16>
      %cst_74 = arith.constant dense<0.000000e+00> : vector<8x32xf32>
      %109 = tpu.matmul %108, %11, %cst_74 {dimension_numbers = #tpu.dot_dimension_numbers<[1], [0], [0], [1], [0, 0, 1, 1], [], []>} : vector<8x32xbf16>, vector<32x32xbf16>, vector<8x32xf32> -> vector<8x32xf32>
      %110 = vector.broadcast %27 : vector<1x32xf32> to vector<8x32xf32>
      %111 = arith.addf %109, %110 : vector<8x32xf32>
      %112 = vector.extract_strided_slice %106 {offsets = [0, 0], sizes = [8, 8], strides = [1, 1]} : vector<8x32xf32> to vector<8x8xf32>
      %113 = vector.extract_strided_slice %106 {offsets = [0, 8], sizes = [8, 8], strides = [1, 1]} : vector<8x32xf32> to vector<8x8xf32>
      %114 = vector.extract_strided_slice %106 {offsets = [0, 16], sizes = [8, 8], strides = [1, 1]} : vector<8x32xf32> to vector<8x8xf32>
      %115 = vector.extract_strided_slice %106 {offsets = [0, 24], sizes = [8, 8], strides = [1, 1]} : vector<8x32xf32> to vector<8x8xf32>
      %116 = vector.shape_cast %112 : vector<8x8xf32> to vector<1x8x8xf32>
      %117 = vector.shape_cast %113 : vector<8x8xf32> to vector<1x8x8xf32>
      %118 = vector.shape_cast %114 : vector<8x8xf32> to vector<1x8x8xf32>
      %119 = vector.shape_cast %115 : vector<8x8xf32> to vector<1x8x8xf32>
      %120 = tpu.concatenate %116, %117, %118, %119 in 0 : vector<1x8x8xf32>, vector<1x8x8xf32>, vector<1x8x8xf32>, vector<1x8x8xf32> -> vector<4x8x8xf32>
      %121 = arith.truncf %120 : vector<4x8x8xf32> to vector<4x8x8xbf16>
      %122 = vector.extract_strided_slice %107 {offsets = [0, 0], sizes = [8, 8], strides = [1, 1]} : vector<8x32xf32> to vector<8x8xf32>
      %123 = vector.extract_strided_slice %107 {offsets = [0, 8], sizes = [8, 8], strides = [1, 1]} : vector<8x32xf32> to vector<8x8xf32>
      %124 = vector.extract_strided_slice %107 {offsets = [0, 16], sizes = [8, 8], strides = [1, 1]} : vector<8x32xf32> to vector<8x8xf32>
      %125 = vector.extract_strided_slice %107 {offsets = [0, 24], sizes = [8, 8], strides = [1, 1]} : vector<8x32xf32> to vector<8x8xf32>
      %126 = vector.shape_cast %122 : vector<8x8xf32> to vector<1x8x8xf32>
      %127 = vector.shape_cast %123 : vector<8x8xf32> to vector<1x8x8xf32>
      %128 = vector.shape_cast %124 : vector<8x8xf32> to vector<1x8x8xf32>
      %129 = vector.shape_cast %125 : vector<8x8xf32> to vector<1x8x8xf32>
      %130 = tpu.concatenate %126, %127, %128, %129 in 0 : vector<1x8x8xf32>, vector<1x8x8xf32>, vector<1x8x8xf32>, vector<1x8x8xf32> -> vector<4x8x8xf32>
      %131 = arith.truncf %130 : vector<4x8x8xf32> to vector<4x8x8xbf16>
      %132 = vector.extract_strided_slice %111 {offsets = [0, 0], sizes = [8, 8], strides = [1, 1]} : vector<8x32xf32> to vector<8x8xf32>
      %133 = vector.extract_strided_slice %111 {offsets = [0, 8], sizes = [8, 8], strides = [1, 1]} : vector<8x32xf32> to vector<8x8xf32>
      %134 = vector.extract_strided_slice %111 {offsets = [0, 16], sizes = [8, 8], strides = [1, 1]} : vector<8x32xf32> to vector<8x8xf32>
      %135 = vector.extract_strided_slice %111 {offsets = [0, 24], sizes = [8, 8], strides = [1, 1]} : vector<8x32xf32> to vector<8x8xf32>
      %136 = vector.shape_cast %132 : vector<8x8xf32> to vector<1x8x8xf32>
      %137 = vector.shape_cast %133 : vector<8x8xf32> to vector<1x8x8xf32>
      %138 = vector.shape_cast %134 : vector<8x8xf32> to vector<1x8x8xf32>
      %139 = vector.shape_cast %135 : vector<8x8xf32> to vector<1x8x8xf32>
      %140 = tpu.concatenate %136, %137, %138, %139 in 0 : vector<1x8x8xf32>, vector<1x8x8xf32>, vector<1x8x8xf32>, vector<1x8x8xf32> -> vector<4x8x8xf32>
      %141 = arith.truncf %140 : vector<4x8x8xf32> to vector<4x8x8xbf16>
      "tpu.trace_start"() <{level = 10 : i32, message = "hqd,hkd->hqk"}> : () -> ()
      %cst_75 = arith.constant dense<0.000000e+00> : vector<4x8x8xf32>
      %142 = tpu.matmul %121, %131, %cst_75 {dimension_numbers = #tpu.dot_dimension_numbers<[2], [2], [1], [1], [0, 0, 0, 1, 1, 1], [0], [0]>} : vector<4x8x8xbf16>, vector<4x8x8xbf16>, vector<4x8x8xf32> -> vector<4x8x8xf32>
      "tpu.trace_stop"() : () -> ()
      %cst_76 = arith.constant dense<0xFF800000> : vector<4x8xf32>
      %143 = vector.multi_reduction <maximumf>, %142, %cst_76 [2] : vector<4x8x8xf32> to vector<4x8xf32>
      %144 = vector.shape_cast %143 : vector<4x8xf32> to vector<4x8x1xf32>
      %145 = vector.broadcast %144 : vector<4x8x1xf32> to vector<4x8x8xf32>
      %146 = arith.subf %142, %145 : vector<4x8x8xf32>
      %147 = math.exp %146 : vector<4x8x8xf32>
      %cst_77 = arith.constant dense<0.000000e+00> : vector<4x8xf32>
      %148 = vector.multi_reduction <add>, %147, %cst_77 [2] : vector<4x8x8xf32> to vector<4x8xf32>
      %149 = vector.shape_cast %148 : vector<4x8xf32> to vector<4x8x1xf32>
      %cst_78 = arith.constant 1.000000e+00 : f32
      %150 = vector.broadcast %cst_78 : f32 to vector<4x8x1xf32>
      %151 = arith.divf %150, %149 : vector<4x8x1xf32>
      %152 = vector.broadcast %151 : vector<4x8x1xf32> to vector<4x8x8xf32>
      %153 = arith.mulf %147, %152 : vector<4x8x8xf32>
      %154 = arith.truncf %153 : vector<4x8x8xf32> to vector<4x8x8xbf16>
      "tpu.trace_start"() <{level = 10 : i32, message = "hqk,hkd->hqd"}> : () -> ()
      %cst_79 = arith.constant dense<0.000000e+00> : vector<4x8x8xf32>
      %155 = tpu.matmul %154, %141, %cst_79 {dimension_numbers = #tpu.dot_dimension_numbers<[2], [1], [1], [2], [0, 0, 0, 1, 1, 2], [0], [0]>} : vector<4x8x8xbf16>, vector<4x8x8xbf16>, vector<4x8x8xf32> -> vector<4x8x8xf32>
      "tpu.trace_stop"() : () -> ()
      %156 = vector.extract_strided_slice %155 {offsets = [0, 0, 0], sizes = [1, 8, 8], strides = [1, 1, 1]} : vector<4x8x8xf32> to vector<1x8x8xf32>
      %157 = vector.shape_cast %156 : vector<1x8x8xf32> to vector<8x8xf32>
      %158 = vector.extract_strided_slice %155 {offsets = [1, 0, 0], sizes = [1, 8, 8], strides = [1, 1, 1]} : vector<4x8x8xf32> to vector<1x8x8xf32>
      %159 = vector.shape_cast %158 : vector<1x8x8xf32> to vector<8x8xf32>
      %160 = vector.extract_strided_slice %155 {offsets = [2, 0, 0], sizes = [1, 8, 8], strides = [1, 1, 1]} : vector<4x8x8xf32> to vector<1x8x8xf32>
      %161 = vector.shape_cast %160 : vector<1x8x8xf32> to vector<8x8xf32>
      %162 = vector.extract_strided_slice %155 {offsets = [3, 0, 0], sizes = [1, 8, 8], strides = [1, 1, 1]} : vector<4x8x8xf32> to vector<1x8x8xf32>
      %163 = vector.shape_cast %162 : vector<1x8x8xf32> to vector<8x8xf32>
      %164 = tpu.concatenate %157, %159, %161, %163 in 1 : vector<8x8xf32>, vector<8x8xf32>, vector<8x8xf32>, vector<8x8xf32> -> vector<8x32xf32>
      %165 = arith.truncf %164 : vector<8x32xf32> to vector<8x32xbf16>
      %cst_80 = arith.constant dense<0.000000e+00> : vector<8x32xf32>
      %166 = tpu.matmul %165, %13, %cst_80 {dimension_numbers = #tpu.dot_dimension_numbers<[1], [0], [0], [1], [0, 0, 1, 1], [], []>} : vector<8x32xbf16>, vector<32x32xbf16>, vector<8x32xf32> -> vector<8x32xf32>
      %167 = vector.broadcast %28 : vector<1x32xf32> to vector<8x32xf32>
      %168 = arith.addf %166, %167 : vector<8x32xf32>
      %169 = arith.addf %arg33, %168 : vector<8x32xf32>
      %cst_81 = arith.constant dense<0.000000e+00> : vector<8xf32>
      %170 = vector.multi_reduction <add>, %169, %cst_81 [1] : vector<8x32xf32> to vector<8xf32>
      %171 = vector.shape_cast %170 : vector<8xf32> to vector<8x1xf32>
      %cst_82 = arith.constant 3.200000e+01 : f32
      %172 = vector.broadcast %cst_82 : f32 to vector<8x1xf32>
      %173 = arith.divf %171, %172 : vector<8x1xf32>
      %174 = vector.broadcast %173 : vector<8x1xf32> to vector<8x32xf32>
      %175 = arith.subf %169, %174 : vector<8x32xf32>
      %176 = arith.mulf %175, %175 : vector<8x32xf32>
      %cst_83 = arith.constant dense<0.000000e+00> : vector<8xf32>
      %177 = vector.multi_reduction <add>, %176, %cst_83 [1] : vector<8x32xf32> to vector<8xf32>
      %178 = vector.shape_cast %177 : vector<8xf32> to vector<8x1xf32>
      %cst_84 = arith.constant 3.200000e+01 : f32
      %179 = vector.broadcast %cst_84 : f32 to vector<8x1xf32>
      %180 = arith.divf %178, %179 : vector<8x1xf32>
      %181 = vector.broadcast %173 : vector<8x1xf32> to vector<8x32xf32>
      %182 = arith.subf %169, %181 : vector<8x32xf32>
      %cst_85 = arith.constant 9.99999974E-6 : f32
      %183 = vector.broadcast %cst_85 : f32 to vector<8x1xf32>
      %184 = arith.addf %180, %183 : vector<8x1xf32>
      %185 = math.rsqrt %184 : vector<8x1xf32>
      %186 = vector.broadcast %185 : vector<8x1xf32> to vector<8x32xf32>
      %187 = arith.mulf %182, %186 : vector<8x32xf32>
      %188 = vector.broadcast %35 : vector<1x32xf32> to vector<8x32xf32>
      %189 = arith.mulf %187, %188 : vector<8x32xf32>
      %190 = vector.broadcast %36 : vector<1x32xf32> to vector<8x32xf32>
      %191 = arith.addf %189, %190 : vector<8x32xf32>
      %192 = arith.addf %191, %3 : vector<8x32xf32>
      %193 = arith.truncf %192 : vector<8x32xf32> to vector<8x32xbf16>
      %cst_86 = arith.constant dense<0.000000e+00> : vector<8x32xf32>
      %194 = tpu.matmul %193, %15, %cst_86 {dimension_numbers = #tpu.dot_dimension_numbers<[1], [0], [0], [1], [0, 0, 1, 1], [], []>} : vector<8x32xbf16>, vector<32x32xbf16>, vector<8x32xf32> -> vector<8x32xf32>
      %195 = vector.broadcast %29 : vector<1x32xf32> to vector<8x32xf32>
      %196 = arith.addf %194, %195 : vector<8x32xf32>
      %cst_87 = arith.constant 0.353553385 : f32
      %197 = vector.broadcast %cst_87 : f32 to vector<8x32xf32>
      %198 = arith.mulf %196, %197 : vector<8x32xf32>
      %199 = vector.extract_strided_slice %198 {offsets = [0, 0], sizes = [8, 8], strides = [1, 1]} : vector<8x32xf32> to vector<8x8xf32>
      %200 = vector.extract_strided_slice %198 {offsets = [0, 8], sizes = [8, 8], strides = [1, 1]} : vector<8x32xf32> to vector<8x8xf32>
      %201 = vector.extract_strided_slice %198 {offsets = [0, 16], sizes = [8, 8], strides = [1, 1]} : vector<8x32xf32> to vector<8x8xf32>
      %202 = vector.extract_strided_slice %198 {offsets = [0, 24], sizes = [8, 8], strides = [1, 1]} : vector<8x32xf32> to vector<8x8xf32>
      %203 = vector.shape_cast %199 : vector<8x8xf32> to vector<1x8x8xf32>
      %204 = vector.shape_cast %200 : vector<8x8xf32> to vector<1x8x8xf32>
      %205 = vector.shape_cast %201 : vector<8x8xf32> to vector<1x8x8xf32>
      %206 = vector.shape_cast %202 : vector<8x8xf32> to vector<1x8x8xf32>
      %207 = tpu.concatenate %203, %204, %205, %206 in 0 : vector<1x8x8xf32>, vector<1x8x8xf32>, vector<1x8x8xf32>, vector<1x8x8xf32> -> vector<4x8x8xf32>
      %208 = arith.truncf %207 : vector<4x8x8xf32> to vector<4x8x8xbf16>
      "tpu.trace_start"() <{level = 10 : i32, message = "hqd,hkd->hqk"}> : () -> ()
      %cst_88 = arith.constant dense<0.000000e+00> : vector<4x8x16xf32>
      %209 = tpu.matmul %208, %57, %cst_88 {dimension_numbers = #tpu.dot_dimension_numbers<[2], [2], [1], [1], [0, 0, 0, 1, 1, 1], [0], [0]>} : vector<4x8x8xbf16>, vector<4x16x8xbf16>, vector<4x8x16xf32> -> vector<4x8x16xf32>
      "tpu.trace_stop"() : () -> ()
      %cst_89 = arith.constant dense<0xFF800000> : vector<4x8xf32>
      %210 = vector.multi_reduction <maximumf>, %209, %cst_89 [2] : vector<4x8x16xf32> to vector<4x8xf32>
      %211 = vector.shape_cast %210 : vector<4x8xf32> to vector<4x8x1xf32>
      %212 = vector.broadcast %211 : vector<4x8x1xf32> to vector<4x8x16xf32>
      %213 = arith.subf %209, %212 : vector<4x8x16xf32>
      %214 = math.exp %213 : vector<4x8x16xf32>
      %cst_90 = arith.constant dense<0.000000e+00> : vector<4x8xf32>
      %215 = vector.multi_reduction <add>, %214, %cst_90 [2] : vector<4x8x16xf32> to vector<4x8xf32>
      %216 = vector.shape_cast %215 : vector<4x8xf32> to vector<4x8x1xf32>
      %cst_91 = arith.constant 1.000000e+00 : f32
      %217 = vector.broadcast %cst_91 : f32 to vector<4x8x1xf32>
      %218 = arith.divf %217, %216 : vector<4x8x1xf32>
      %219 = vector.broadcast %218 : vector<4x8x1xf32> to vector<4x8x16xf32>
      %220 = arith.mulf %214, %219 : vector<4x8x16xf32>
      %221 = arith.truncf %220 : vector<4x8x16xf32> to vector<4x8x16xbf16>
      "tpu.trace_start"() <{level = 10 : i32, message = "hqk,hkd->hqd"}> : () -> ()
      %cst_92 = arith.constant dense<0.000000e+00> : vector<4x8x8xf32>
      %222 = tpu.matmul %221, %71, %cst_92 {dimension_numbers = #tpu.dot_dimension_numbers<[2], [1], [1], [2], [0, 0, 0, 1, 1, 2], [0], [0]>} : vector<4x8x16xbf16>, vector<4x16x8xbf16>, vector<4x8x8xf32> -> vector<4x8x8xf32>
      "tpu.trace_stop"() : () -> ()
      %223 = vector.extract_strided_slice %222 {offsets = [0, 0, 0], sizes = [1, 8, 8], strides = [1, 1, 1]} : vector<4x8x8xf32> to vector<1x8x8xf32>
      %224 = vector.shape_cast %223 : vector<1x8x8xf32> to vector<8x8xf32>
      %225 = vector.extract_strided_slice %222 {offsets = [1, 0, 0], sizes = [1, 8, 8], strides = [1, 1, 1]} : vector<4x8x8xf32> to vector<1x8x8xf32>
      %226 = vector.shape_cast %225 : vector<1x8x8xf32> to vector<8x8xf32>
      %227 = vector.extract_strided_slice %222 {offsets = [2, 0, 0], sizes = [1, 8, 8], strides = [1, 1, 1]} : vector<4x8x8xf32> to vector<1x8x8xf32>
      %228 = vector.shape_cast %227 : vector<1x8x8xf32> to vector<8x8xf32>
      %229 = vector.extract_strided_slice %222 {offsets = [3, 0, 0], sizes = [1, 8, 8], strides = [1, 1, 1]} : vector<4x8x8xf32> to vector<1x8x8xf32>
      %230 = vector.shape_cast %229 : vector<1x8x8xf32> to vector<8x8xf32>
      %231 = tpu.concatenate %224, %226, %228, %230 in 1 : vector<8x8xf32>, vector<8x8xf32>, vector<8x8xf32>, vector<8x8xf32> -> vector<8x32xf32>
      %232 = arith.truncf %231 : vector<8x32xf32> to vector<8x32xbf16>
      %cst_93 = arith.constant dense<0.000000e+00> : vector<8x32xf32>
      %233 = tpu.matmul %232, %21, %cst_93 {dimension_numbers = #tpu.dot_dimension_numbers<[1], [0], [0], [1], [0, 0, 1, 1], [], []>} : vector<8x32xbf16>, vector<32x32xbf16>, vector<8x32xf32> -> vector<8x32xf32>
      %234 = vector.broadcast %32 : vector<1x32xf32> to vector<8x32xf32>
      %235 = arith.addf %233, %234 : vector<8x32xf32>
      %236 = arith.addf %191, %235 : vector<8x32xf32>
      %cst_94 = arith.constant dense<0.000000e+00> : vector<8xf32>
      %237 = vector.multi_reduction <add>, %236, %cst_94 [1] : vector<8x32xf32> to vector<8xf32>
      %238 = vector.shape_cast %237 : vector<8xf32> to vector<8x1xf32>
      %cst_95 = arith.constant 3.200000e+01 : f32
      %239 = vector.broadcast %cst_95 : f32 to vector<8x1xf32>
      %240 = arith.divf %238, %239 : vector<8x1xf32>
      %241 = vector.broadcast %240 : vector<8x1xf32> to vector<8x32xf32>
      %242 = arith.subf %236, %241 : vector<8x32xf32>
      %243 = arith.mulf %242, %242 : vector<8x32xf32>
      %cst_96 = arith.constant dense<0.000000e+00> : vector<8xf32>
      %244 = vector.multi_reduction <add>, %243, %cst_96 [1] : vector<8x32xf32> to vector<8xf32>
      %245 = vector.shape_cast %244 : vector<8xf32> to vector<8x1xf32>
      %cst_97 = arith.constant 3.200000e+01 : f32
      %246 = vector.broadcast %cst_97 : f32 to vector<8x1xf32>
      %247 = arith.divf %245, %246 : vector<8x1xf32>
      %248 = vector.broadcast %240 : vector<8x1xf32> to vector<8x32xf32>
      %249 = arith.subf %236, %248 : vector<8x32xf32>
      %cst_98 = arith.constant 9.99999974E-6 : f32
      %250 = vector.broadcast %cst_98 : f32 to vector<8x1xf32>
      %251 = arith.addf %247, %250 : vector<8x1xf32>
      %252 = math.rsqrt %251 : vector<8x1xf32>
      %253 = vector.broadcast %252 : vector<8x1xf32> to vector<8x32xf32>
      %254 = arith.mulf %249, %253 : vector<8x32xf32>
      %255 = vector.broadcast %37 : vector<1x32xf32> to vector<8x32xf32>
      %256 = arith.mulf %254, %255 : vector<8x32xf32>
      %257 = vector.broadcast %38 : vector<1x32xf32> to vector<8x32xf32>
      %258 = arith.addf %256, %257 : vector<8x32xf32>
      %259 = arith.truncf %258 : vector<8x32xf32> to vector<8x32xbf16>
      %cst_99 = arith.constant dense<0.000000e+00> : vector<8x64xf32>
      %260 = tpu.matmul %259, %23, %cst_99 {dimension_numbers = #tpu.dot_dimension_numbers<[1], [0], [0], [1], [0, 0, 1, 1], [], []>} : vector<8x32xbf16>, vector<32x64xbf16>, vector<8x64xf32> -> vector<8x64xf32>
      %261 = vector.broadcast %33 : vector<1x64xf32> to vector<8x64xf32>
      %262 = arith.addf %260, %261 : vector<8x64xf32>
      %cst_100 = arith.constant 0.000000e+00 : f32
      %263 = vector.broadcast %cst_100 : f32 to vector<8x64xf32>
      %264 = arith.maximumf %262, %263 : vector<8x64xf32>
      %265 = arith.truncf %264 : vector<8x64xf32> to vector<8x64xbf16>
      %cst_101 = arith.constant dense<0.000000e+00> : vector<8x32xf32>
      %266 = tpu.matmul %265, %25, %cst_101 {dimension_numbers = #tpu.dot_dimension_numbers<[1], [0], [0], [1], [0, 0, 1, 1], [], []>} : vector<8x64xbf16>, vector<64x32xbf16>, vector<8x32xf32> -> vector<8x32xf32>
      %267 = vector.broadcast %34 : vector<1x32xf32> to vector<8x32xf32>
      %268 = arith.addf %266, %267 : vector<8x32xf32>
      %269 = arith.addf %258, %268 : vector<8x32xf32>
      %cst_102 = arith.constant dense<0.000000e+00> : vector<8xf32>
      %270 = vector.multi_reduction <add>, %269, %cst_102 [1] : vector<8x32xf32> to vector<8xf32>
      %271 = vector.shape_cast %270 : vector<8xf32> to vector<8x1xf32>
      %cst_103 = arith.constant 3.200000e+01 : f32
      %272 = vector.broadcast %cst_103 : f32 to vector<8x1xf32>
      %273 = arith.divf %271, %272 : vector<8x1xf32>
      %274 = vector.broadcast %273 : vector<8x1xf32> to vector<8x32xf32>
      %275 = arith.subf %269, %274 : vector<8x32xf32>
      %276 = arith.mulf %275, %275 : vector<8x32xf32>
      %cst_104 = arith.constant dense<0.000000e+00> : vector<8xf32>
      %277 = vector.multi_reduction <add>, %276, %cst_104 [1] : vector<8x32xf32> to vector<8xf32>
      %278 = vector.shape_cast %277 : vector<8xf32> to vector<8x1xf32>
      %cst_105 = arith.constant 3.200000e+01 : f32
      %279 = vector.broadcast %cst_105 : f32 to vector<8x1xf32>
      %280 = arith.divf %278, %279 : vector<8x1xf32>
      %281 = vector.broadcast %273 : vector<8x1xf32> to vector<8x32xf32>
      %282 = arith.subf %269, %281 : vector<8x32xf32>
      %cst_106 = arith.constant 9.99999974E-6 : f32
      %283 = vector.broadcast %cst_106 : f32 to vector<8x1xf32>
      %284 = arith.addf %280, %283 : vector<8x1xf32>
      %285 = math.rsqrt %284 : vector<8x1xf32>
      %286 = vector.broadcast %285 : vector<8x1xf32> to vector<8x32xf32>
      %287 = arith.mulf %282, %286 : vector<8x32xf32>
      %288 = vector.broadcast %39 : vector<1x32xf32> to vector<8x32xf32>
      %289 = arith.mulf %287, %288 : vector<8x32xf32>
      %290 = vector.broadcast %40 : vector<1x32xf32> to vector<8x32xf32>
      %291 = arith.addf %289, %290 : vector<8x32xf32>
      scf.yield %291 : vector<8x32xf32>
    }
    %cst_64 = arith.constant dense<0.000000e+00> : vector<8xf32>
    %74 = vector.multi_reduction <add>, %73, %cst_64 [1] : vector<8x32xf32> to vector<8xf32>
    %75 = vector.shape_cast %74 : vector<8xf32> to vector<8x1xf32>
    %cst_65 = arith.constant 3.200000e+01 : f32
    %76 = vector.broadcast %cst_65 : f32 to vector<8x1xf32>
    %77 = arith.divf %75, %76 : vector<8x1xf32>
    %78 = vector.broadcast %77 : vector<8x1xf32> to vector<8x32xf32>
    %79 = arith.subf %73, %78 : vector<8x32xf32>
    %80 = arith.mulf %79, %79 : vector<8x32xf32>
    %cst_66 = arith.constant dense<0.000000e+00> : vector<8xf32>
    %81 = vector.multi_reduction <add>, %80, %cst_66 [1] : vector<8x32xf32> to vector<8xf32>
    %82 = vector.shape_cast %81 : vector<8xf32> to vector<8x1xf32>
    %cst_67 = arith.constant 3.200000e+01 : f32
    %83 = vector.broadcast %cst_67 : f32 to vector<8x1xf32>
    %84 = arith.divf %82, %83 : vector<8x1xf32>
    %85 = vector.broadcast %77 : vector<8x1xf32> to vector<8x32xf32>
    %86 = arith.subf %73, %85 : vector<8x32xf32>
    %cst_68 = arith.constant 9.99999974E-6 : f32
    %87 = vector.broadcast %cst_68 : f32 to vector<8x1xf32>
    %88 = arith.addf %84, %87 : vector<8x1xf32>
    %89 = math.rsqrt %88 : vector<8x1xf32>
    %90 = vector.broadcast %89 : vector<8x1xf32> to vector<8x32xf32>
    %91 = arith.mulf %86, %90 : vector<8x32xf32>
    %92 = vector.broadcast %41 : vector<1x32xf32> to vector<8x32xf32>
    %93 = arith.mulf %91, %92 : vector<8x32xf32>
    %94 = vector.broadcast %42 : vector<1x32xf32> to vector<8x32xf32>
    %95 = arith.addf %93, %94 : vector<8x32xf32>
    %c0_69 = arith.constant 0 : index
    %c0_70 = arith.constant 0 : index
    %c0_71 = arith.constant 0 : index
    %96 = vector.load %arg31[%c0_69, %c0_70, %c0_71] : memref<1x8x32xf32, #tpu.memory_space<vmem>>, vector<1x8x32xf32>
    %97 = vector.shape_cast %96 : vector<1x8x32xf32> to vector<8x32xf32>
    %98 = vector.shape_cast %95 : vector<8x32xf32> to vector<1x8x32xf32>
    tpu.vector_store %arg31[%c0_69, %c0_70, %c0_71], %98 {strides = array<i32>} : memref<1x8x32xf32, #tpu.memory_space<vmem>>, vector<1x8x32xf32>,
    return
  }
  func.func @transform_0(%arg0: i32) -> (i32, i32, i32) {
    %c0_i32 = arith.constant 0 : i32
    %c0_i32_0 = arith.constant 0 : i32
    %c0_i32_1 = arith.constant 0 : i32
    return %arg0, %c0_i32, %c0_i32_0 : i32, i32, i32
  }
  func.func @transform_1(%arg0: i32) -> (i32, i32, i32) {
    %c0_i32 = arith.constant 0 : i32
    %c0_i32_0 = arith.constant 0 : i32
    %c0_i32_1 = arith.constant 0 : i32
    return %arg0, %c0_i32, %c0_i32_0 : i32, i32, i32
  }
  func.func @transform_2(%arg0: i32) -> (i32, i32, i32) {
    %c0_i32 = arith.constant 0 : i32
    %c0_i32_0 = arith.constant 0 : i32
    %c0_i32_1 = arith.constant 0 : i32
    return %arg0, %c0_i32, %c0_i32_0 : i32, i32, i32
  }
  func.func @transform_3(%arg0: i32) -> (i32, i32, i32) {
    %c0_i32 = arith.constant 0 : i32
    %c0_i32_0 = arith.constant 0 : i32
    %c0_i32_1 = arith.constant 0 : i32
    return %arg0, %c0_i32, %c0_i32_0 : i32, i32, i32
  }
  func.func @transform_4(%arg0: i32) -> (i32, i32) {
    %c0_i32 = arith.constant 0 : i32
    %c0_i32_0 = arith.constant 0 : i32
    %c0_i32_1 = arith.constant 0 : i32
    return %c0_i32, %c0_i32_0 : i32, i32
  }
  func.func @transform_5(%arg0: i32) -> (i32, i32) {
    %c0_i32 = arith.constant 0 : i32
    %c0_i32_0 = arith.constant 0 : i32
    %c0_i32_1 = arith.constant 0 : i32
    return %c0_i32, %c0_i32_0 : i32, i32
  }
  func.func @transform_6(%arg0: i32) -> (i32, i32) {
    %c0_i32 = arith.constant 0 : i32
    %c0_i32_0 = arith.constant 0 : i32
    %c0_i32_1 = arith.constant 0 : i32
    return %c0_i32, %c0_i32_0 : i32, i32
  }
  func.func @transform_7(%arg0: i32) -> (i32, i32) {
    %c0_i32 = arith.constant 0 : i32
    %c0_i32_0 = arith.constant 0 : i32
    %c0_i32_1 = arith.constant 0 : i32
    return %c0_i32, %c0_i32_0 : i32, i32
  }
  func.func @transform_8(%arg0: i32) -> (i32, i32) {
    %c0_i32 = arith.constant 0 : i32
    %c0_i32_0 = arith.constant 0 : i32
    %c0_i32_1 = arith.constant 0 : i32
    return %c0_i32, %c0_i32_0 : i32, i32
  }
  func.func @transform_9(%arg0: i32) -> (i32, i32) {
    %c0_i32 = arith.constant 0 : i32
    %c0_i32_0 = arith.constant 0 : i32
    %c0_i32_1 = arith.constant 0 : i32
    return %c0_i32, %c0_i32_0 : i32, i32
  }
  func.func @transform_10(%arg0: i32) -> (i32, i32) {
    %c0_i32 = arith.constant 0 : i32
    %c0_i32_0 = arith.constant 0 : i32
    %c0_i32_1 = arith.constant 0 : i32
    return %c0_i32, %c0_i32_0 : i32, i32
  }
  func.func @transform_11(%arg0: i32) -> (i32, i32) {
    %c0_i32 = arith.constant 0 : i32
    %c0_i32_0 = arith.constant 0 : i32
    %c0_i32_1 = arith.constant 0 : i32
    return %c0_i32, %c0_i32_0 : i32, i32
  }
  func.func @transform_12(%arg0: i32) -> (i32, i32) {
    %c0_i32 = arith.constant 0 : i32
    %c0_i32_0 = arith.constant 0 : i32
    %c0_i32_1 = arith.constant 0 : i32
    return %c0_i32, %c0_i32_0 : i32, i32
  }
  func.func @transform_13(%arg0: i32) -> (i32, i32) {
    %c0_i32 = arith.constant 0 : i32
    %c0_i32_0 = arith.constant 0 : i32
    %c0_i32_1 = arith.constant 0 : i32
    return %c0_i32, %c0_i32_0 : i32, i32
  }
  func.func @transform_14(%arg0: i32) -> (i32, i32) {
    %c0_i32 = arith.constant 0 : i32
    %c0_i32_0 = arith.constant 0 : i32
    %c0_i32_1 = arith.constant 0 : i32
    return %c0_i32, %c0_i32_0 : i32, i32
  }
  func.func @transform_15(%arg0: i32) -> (i32, i32) {
    %c0_i32 = arith.constant 0 : i32
    %c0_i32_0 = arith.constant 0 : i32
    %c0_i32_1 = arith.constant 0 : i32
    return %c0_i32, %c0_i32_0 : i32, i32
  }
  func.func @transform_16(%arg0: i32) -> (i32, i32) {
    %c0_i32 = arith.constant 0 : i32
    %c0_i32_0 = arith.constant 0 : i32
    %c0_i32_1 = arith.constant 0 : i32
    return %c0_i32, %c0_i32_0 : i32, i32
  }
  func.func @transform_17(%arg0: i32) -> (i32, i32) {
    %c0_i32 = arith.constant 0 : i32
    %c0_i32_0 = arith.constant 0 : i32
    %c0_i32_1 = arith.constant 0 : i32
    return %c0_i32, %c0_i32_0 : i32, i32
  }
  func.func @transform_18(%arg0: i32) -> (i32, i32) {
    %c0_i32 = arith.constant 0 : i32
    %c0_i32_0 = arith.constant 0 : i32
    %c0_i32_1 = arith.constant 0 : i32
    return %c0_i32, %c0_i32_0 : i32, i32
  }
  func.func @transform_19(%arg0: i32) -> (i32, i32) {
    %c0_i32 = arith.constant 0 : i32
    %c0_i32_0 = arith.constant 0 : i32
    %c0_i32_1 = arith.constant 0 : i32
    return %c0_i32, %c0_i32_0 : i32, i32
  }
  func.func @transform_20(%arg0: i32) -> (i32, i32) {
    %c0_i32 = arith.constant 0 : i32
    %c0_i32_0 = arith.constant 0 : i32
    %c0_i32_1 = arith.constant 0 : i32
    return %c0_i32, %c0_i32_0 : i32, i32
  }
  func.func @transform_21(%arg0: i32) -> (i32, i32) {
    %c0_i32 = arith.constant 0 : i32
    %c0_i32_0 = arith.constant 0 : i32
    %c0_i32_1 = arith.constant 0 : i32
    return %c0_i32, %c0_i32_0 : i32, i32
  }
  func.func @transform_22(%arg0: i32) -> (i32, i32) {
    %c0_i32 = arith.constant 0 : i32
    %c0_i32_0 = arith.constant 0 : i32
    %c0_i32_1 = arith.constant 0 : i32
    return %c0_i32, %c0_i32_0 : i32, i32
  }
  func.func @transform_23(%arg0: i32) -> (i32, i32) {
    %c0_i32 = arith.constant 0 : i32
    %c0_i32_0 = arith.constant 0 : i32
    %c0_i32_1 = arith.constant 0 : i32
    return %c0_i32, %c0_i32_0 : i32, i32
  }
  func.func @transform_24(%arg0: i32) -> (i32, i32) {
    %c0_i32 = arith.constant 0 : i32
    %c0_i32_0 = arith.constant 0 : i32
    %c0_i32_1 = arith.constant 0 : i32
    return %c0_i32, %c0_i32_0 : i32, i32
  }
  func.func @transform_25(%arg0: i32) -> (i32, i32) {
    %c0_i32 = arith.constant 0 : i32
    %c0_i32_0 = arith.constant 0 : i32
    %c0_i32_1 = arith.constant 0 : i32
    return %c0_i32, %c0_i32_0 : i32, i32
  }
  func.func @transform_26(%arg0: i32) -> (i32, i32) {
    %c0_i32 = arith.constant 0 : i32
    %c0_i32_0 = arith.constant 0 : i32
    %c0_i32_1 = arith.constant 0 : i32
    return %c0_i32, %c0_i32_0 : i32, i32
  }
  func.func @transform_27(%arg0: i32) -> (i32, i32) {
    %c0_i32 = arith.constant 0 : i32
    %c0_i32_0 = arith.constant 0 : i32
    %c0_i32_1 = arith.constant 0 : i32
    return %c0_i32, %c0_i32_0 : i32, i32
  }
  func.func @transform_28(%arg0: i32) -> (i32, i32) {
    %c0_i32 = arith.constant 0 : i32
    %c0_i32_0 = arith.constant 0 : i32
    %c0_i32_1 = arith.constant 0 : i32
    return %c0_i32, %c0_i32_0 : i32, i32
  }
  func.func @transform_29(%arg0: i32) -> (i32, i32) {
    %c0_i32 = arith.constant 0 : i32
    %c0_i32_0 = arith.constant 0 : i32
    %c0_i32_1 = arith.constant 0 : i32
    return %c0_i32, %c0_i32_0 : i32, i32
  }
  func.func @transform_30(%arg0: i32) -> (i32, i32, i32) {
    %c0_i32 = arith.constant 0 : i32
    %c0_i32_0 = arith.constant 0 : i32
    %c0_i32_1 = arith.constant 0 : i32
    return %arg0, %c0_i32, %c0_i32_0 : i32, i32, i32
  }
}

</mosaic_0001>

<llo_original>
// kernel: transformer_decoder.1
$region0: #{transformer_decoder.1}
  #allocation0 [shape = 'u32[]', space=smem, size = 0x4, offset = 0x4, fixed_abs, tag = 'smem constant byte address 0x4 - core index']
  #allocation1 [shape = 'u32[144,128]{1,0:T(1,128)}', space=vmem, size = 0x12000, scoped, tag = 'internal scratch']
  %s0 = inlined_call_operand.smem [shape: u32[31], index: -1, kind: input, shape index: {}]
  %s1 = sld [smem:[%s0]]
  %s2 = scalar_lea.smem %s0, 1
  %s3 = sld [smem:[%s2]]
  %s4 = scalar_lea.smem %s0, 2
  %s5 = sld [smem:[%s4]]
  %s6 = scalar_lea.smem %s0, 3
  %s7 = sld [smem:[%s6]]
  %s8 = scalar_lea.smem %s0, 4
  %s9 = sld [smem:[%s8]]
  %s10 = scalar_lea.smem %s0, 5
  %s11 = sld [smem:[%s10]]
  %s12 = scalar_lea.smem %s0, 6
  %s13 = sld [smem:[%s12]]
  %s14 = scalar_lea.smem %s0, 7
  %s15 = sld [smem:[%s14]]
  %s16 = scalar_lea.smem %s0, 8
  %s17 = sld [smem:[%s16]]
  %s18 = scalar_lea.smem %s0, 9
  %s19 = sld [smem:[%s18]]
  %s20 = scalar_lea.smem %s0, 10
  %s21 = sld [smem:[%s20]]
  %s22 = scalar_lea.smem %s0, 11
  %s23 = sld [smem:[%s22]]
  %s24 = scalar_lea.smem %s0, 12
  %s25 = sld [smem:[%s24]]
  %s26 = scalar_lea.smem %s0, 13
  %s27 = sld [smem:[%s26]]
  %s28 = scalar_lea.smem %s0, 14
  %s29 = sld [smem:[%s28]]
  %s30 = scalar_lea.smem %s0, 15
  %s31 = sld [smem:[%s30]]
  %s32 = scalar_lea.smem %s0, 16
  %s33 = sld [smem:[%s32]]
  %s34 = scalar_lea.smem %s0, 17
  %s35 = sld [smem:[%s34]]
  %s36 = scalar_lea.smem %s0, 18
  %s37 = sld [smem:[%s36]]
  %s38 = scalar_lea.smem %s0, 19
  %s39 = sld [smem:[%s38]]
  %s40 = scalar_lea.smem %s0, 20
  %s41 = sld [smem:[%s40]]
  %s42 = scalar_lea.smem %s0, 21
  %s43 = sld [smem:[%s42]]
  %s44 = scalar_lea.smem %s0, 22
  %s45 = sld [smem:[%s44]]
  %s46 = scalar_lea.smem %s0, 23
  %s47 = sld [smem:[%s46]]
  %s48 = scalar_lea.smem %s0, 24
  %s49 = sld [smem:[%s48]]
  %s50 = scalar_lea.smem %s0, 25
  %s51 = sld [smem:[%s50]]
  %s52 = scalar_lea.smem %s0, 26
  %s53 = sld [smem:[%s52]]
  %s54 = scalar_lea.smem %s0, 27
  %s55 = sld [smem:[%s54]]
  %s56 = scalar_lea.smem %s0, 28
  %s57 = sld [smem:[%s56]]
  %s58 = scalar_lea.smem %s0, 29
  %s59 = sld [smem:[%s58]]
  %s60 = scalar_lea.smem %s0, 30
  %s61 = sld [smem:[%s60]]
  %s62 = sld [smem:[#allocation0]]
  $region160: #{transformer_decoder.1} parent=0
    _
  %s64 = ssub.s32 1, %s62
  %s65 = scalar_select 0, %s64, %s62
  loop: start=0, step=1, limit=4
  $region2: #{transformer_decoder.1} parent=0 // loop_pre_header
    _
  $region3: #{transformer_decoder.1} parent=0 // loop_header
    %s67 = sphi 0, %s71
    %p68 = scmp.ge.s32.totalorder %s67, 4
    %s77 = sphi 0, %s79
    %s80 = sphi 0, %s77
    %s81 = sphi 0, %s80
    %s97 = sphi 0, %s81
    %s103 = sphi 0, %s105
    %s106 = sphi 0, %s103
    %s107 = sphi 0, %s106
    %s123 = sphi 0, %s107
    %s129 = sphi 0, %s131
    %s132 = sphi 0, %s129
    %s133 = sphi 0, %s132
    %s149 = sphi 0, %s133
    %s155 = sphi 0, %s157
    %s158 = sphi 0, %s155
    %s159 = sphi 0, %s158
    %s175 = sphi 0, %s159
    %s179 = sphi 0, %s179
    %s181 = sphi 0, %s179
    %s182 = sphi 0, %s181
    %s196 = sphi 0, %s182
    %s200 = sphi 0, %s200
    %s202 = sphi 0, %s200
    %s203 = sphi 0, %s202
    %s217 = sphi 0, %s203
    %s221 = sphi 0, %s221
    %s223 = sphi 0, %s221
    %s224 = sphi 0, %s223
    %s238 = sphi 0, %s224
    %s242 = sphi 0, %s242
    %s244 = sphi 0, %s242
    %s245 = sphi 0, %s244
    %s259 = sphi 0, %s245
    %s263 = sphi 0, %s263
    %s265 = sphi 0, %s263
    %s266 = sphi 0, %s265
    %s280 = sphi 0, %s266
    %s284 = sphi 0, %s284
    %s286 = sphi 0, %s284
    %s287 = sphi 0, %s286
    %s301 = sphi 0, %s287
    %s305 = sphi 0, %s305
    %s307 = sphi 0, %s305
    %s308 = sphi 0, %s307
    %s322 = sphi 0, %s308
    %s326 = sphi 0, %s326
    %s328 = sphi 0, %s326
    %s329 = sphi 0, %s328
    %s343 = sphi 0, %s329
    %s347 = sphi 0, %s347
    %s349 = sphi 0, %s347
    %s350 = sphi 0, %s349
    %s364 = sphi 0, %s350
    %s368 = sphi 0, %s368
    %s370 = sphi 0, %s368
    %s371 = sphi 0, %s370
    %s385 = sphi 0, %s371
    %s389 = sphi 0, %s389
    %s391 = sphi 0, %s389
    %s392 = sphi 0, %s391
    %s406 = sphi 0, %s392
    %s410 = sphi 0, %s410
    %s412 = sphi 0, %s410
    %s413 = sphi 0, %s412
    %s427 = sphi 0, %s413
    %s431 = sphi 0, %s431
    %s433 = sphi 0, %s431
    %s434 = sphi 0, %s433
    %s448 = sphi 0, %s434
    %s452 = sphi 0, %s452
    %s454 = sphi 0, %s452
    %s455 = sphi 0, %s454
    %s469 = sphi 0, %s455
    %s473 = sphi 0, %s473
    %s475 = sphi 0, %s473
    %s476 = sphi 0, %s475
    %s490 = sphi 0, %s476
    %s494 = sphi 0, %s494
    %s496 = sphi 0, %s494
    %s497 = sphi 0, %s496
    %s511 = sphi 0, %s497
    %s515 = sphi 0, %s515
    %s517 = sphi 0, %s515
    %s518 = sphi 0, %s517
    %s532 = sphi 0, %s518
    %s536 = sphi 0, %s536
    %s538 = sphi 0, %s536
    %s539 = sphi 0, %s538
    %s553 = sphi 0, %s539
    %s557 = sphi 0, %s557
    %s559 = sphi 0, %s557
    %s560 = sphi 0, %s559
    %s574 = sphi 0, %s560
    %s578 = sphi 0, %s578
    %s580 = sphi 0, %s578
    %s581 = sphi 0, %s580
    %s595 = sphi 0, %s581
    %s599 = sphi 0, %s599
    %s601 = sphi 0, %s599
    %s602 = sphi 0, %s601
    %s616 = sphi 0, %s602
    %s620 = sphi 0, %s620
    %s622 = sphi 0, %s620
    %s623 = sphi 0, %s622
    %s637 = sphi 0, %s623
    %s641 = sphi 0, %s641
    %s643 = sphi 0, %s641
    %s644 = sphi 0, %s643
    %s658 = sphi 0, %s644
    %s662 = sphi 0, %s662
    %s664 = sphi 0, %s662
    %s665 = sphi 0, %s664
    %s679 = sphi 0, %s665
    %s683 = sphi 0, %s683
    %s685 = sphi 0, %s683
    %s686 = sphi 0, %s685
    %s700 = sphi 0, %s686
    %s704 = sphi 0, %s704
    %s706 = sphi 0, %s704
    %s707 = sphi 0, %s706
    %s721 = sphi 0, %s707
    %s727 = sphi 0, %s729
    %s730 = sphi 0, %s727
    %s731 = sphi 0, %s730
    %s747 = sphi 0, %s731
  $region4: #{transformer_decoder.1} parent=0 // loop_header_branch
    %70 = sbr.rel (%p68) target = $region8
  $region5: #{transformer_decoder.1} parent=0 // loop_body
    %s72 = ssub.s32 %s67, 1
    %s73 = ssub.s32 %s67, 2
    %s74 = sadd.s32 %s67, 1
    %s75 = ssub.s32 %s67, %s74
    %p76 = scmp.eq.s32.totalorder %s75, 0
    %s78 = sadd.s32 %s77, 1
    %s79 = scalar_select %p76, %s77, %s78
    %p82 = pneg %p76
    %p83 = scmp.eq.s32.totalorder %s67, 1
    %p84 = por %p82, %p83
    %p85 = scmp.ne.s32.totalorder %s77, %s80
    %p86 = scmp.eq.s32.totalorder %s67, 0
    %p87 = por %p85, %p86
    %p88 = scmp.ne.s32.totalorder %s77, %s80
    %p89 = scmp.eq.s32.totalorder %s72, 1
    %p90 = por %p88, %p89
    %p91 = scmp.ne.s32.totalorder %s80, %s81
    %p92 = scmp.eq.s32.totalorder %s72, 0
    %p93 = por %p91, %p92
    %p94 = scmp.ne.s32.totalorder %s80, %s81
    %p95 = scmp.eq.s32.totalorder %s73, 1
    %p96 = por %p94, %p95
    %p98 = scmp.ne.s32.totalorder %s81, %s97
    %p99 = scmp.eq.s32.totalorder %s73, 0
    %p100 = por %p98, %p99
    %s101 = ssub.s32 %s67, %s74
    %p102 = scmp.eq.s32.totalorder %s101, 0
    %s104 = sadd.s32 %s103, 1
    %s105 = scalar_select %p102, %s103, %s104
    %p108 = pneg %p102
    %p109 = scmp.eq.s32.totalorder %s67, 1
    %p110 = por %p108, %p109
    %p111 = scmp.ne.s32.totalorder %s103, %s106
    %p112 = scmp.eq.s32.totalorder %s67, 0
    %p113 = por %p111, %p112
    %p114 = scmp.ne.s32.totalorder %s103, %s106
    %p115 = scmp.eq.s32.totalorder %s72, 1
    %p116 = por %p114, %p115
    %p117 = scmp.ne.s32.totalorder %s106, %s107
    %p118 = scmp.eq.s32.totalorder %s72, 0
    %p119 = por %p117, %p118
    %p120 = scmp.ne.s32.totalorder %s106, %s107
    %p121 = scmp.eq.s32.totalorder %s73, 1
    %p122 = por %p120, %p121
    %p124 = scmp.ne.s32.totalorder %s107, %s123
    %p125 = scmp.eq.s32.totalorder %s73, 0
    %p126 = por %p124, %p125
    %s127 = ssub.s32 %s67, %s74
    %p128 = scmp.eq.s32.totalorder %s127, 0
    %s130 = sadd.s32 %s129, 1
    %s131 = scalar_select %p128, %s129, %s130
    %p134 = pneg %p128
    %p135 = scmp.eq.s32.totalorder %s67, 1
    %p136 = por %p134, %p135
    %p137 = scmp.ne.s32.totalorder %s129, %s132
    %p138 = scmp.eq.s32.totalorder %s67, 0
    %p139 = por %p137, %p138
    %p140 = scmp.ne.s32.totalorder %s129, %s132
    %p141 = scmp.eq.s32.totalorder %s72, 1
    %p142 = por %p140, %p141
    %p143 = scmp.ne.s32.totalorder %s132, %s133
    %p144 = scmp.eq.s32.totalorder %s72, 0
    %p145 = por %p143, %p144
    %p146 = scmp.ne.s32.totalorder %s132, %s133
    %p147 = scmp.eq.s32.totalorder %s73, 1
    %p148 = por %p146, %p147
    %p150 = scmp.ne.s32.totalorder %s133, %s149
    %p151 = scmp.eq.s32.totalorder %s73, 0
    %p152 = por %p150, %p151
    %s153 = ssub.s32 %s67, %s74
    %p154 = scmp.eq.s32.totalorder %s153, 0
    %s156 = sadd.s32 %s155, 1
    %s157 = scalar_select %p154, %s155, %s156
    %p160 = pneg %p154
    %p161 = scmp.eq.s32.totalorder %s67, 1
    %p162 = por %p160, %p161
    %p163 = scmp.ne.s32.totalorder %s155, %s158
    %p164 = scmp.eq.s32.totalorder %s67, 0
    %p165 = por %p163, %p164
    %p166 = scmp.ne.s32.totalorder %s155, %s158
    %p167 = scmp.eq.s32.totalorder %s72, 1
    %p168 = por %p166, %p167
    %p169 = scmp.ne.s32.totalorder %s158, %s159
    %p170 = scmp.eq.s32.totalorder %s72, 0
    %p171 = por %p169, %p170
    %p172 = scmp.ne.s32.totalorder %s158, %s159
    %p173 = scmp.eq.s32.totalorder %s73, 1
    %p174 = por %p172, %p173
    %p176 = scmp.ne.s32.totalorder %s159, %s175
    %p177 = scmp.eq.s32.totalorder %s73, 0
    %p178 = por %p176, %p177
    %s180 = sadd.s32 %s179, 1
    %p183 = scmp.eq.s32.totalorder %s67, 1
    %p184 = scmp.ne.s32.totalorder %s179, %s181
    %p185 = scmp.eq.s32.totalorder %s67, 0
    %p186 = por %p184, %p185
    %p187 = scmp.ne.s32.totalorder %s179, %s181
    %p188 = scmp.eq.s32.totalorder %s72, 1
    %p189 = por %p187, %p188
    %p190 = scmp.ne.s32.totalorder %s181, %s182
    %p191 = scmp.eq.s32.totalorder %s72, 0
    %p192 = por %p190, %p191
    %p193 = scmp.ne.s32.totalorder %s181, %s182
    %p194 = scmp.eq.s32.totalorder %s73, 1
    %p195 = por %p193, %p194
    %p197 = scmp.ne.s32.totalorder %s182, %s196
    %p198 = scmp.eq.s32.totalorder %s73, 0
    %p199 = por %p197, %p198
    %s201 = sadd.s32 %s200, 1
    %p204 = scmp.eq.s32.totalorder %s67, 1
    %p205 = scmp.ne.s32.totalorder %s200, %s202
    %p206 = scmp.eq.s32.totalorder %s67, 0
    %p207 = por %p205, %p206
    %p208 = scmp.ne.s32.totalorder %s200, %s202
    %p209 = scmp.eq.s32.totalorder %s72, 1
    %p210 = por %p208, %p209
    %p211 = scmp.ne.s32.totalorder %s202, %s203
    %p212 = scmp.eq.s32.totalorder %s72, 0
    %p213 = por %p211, %p212
    %p214 = scmp.ne.s32.totalorder %s202, %s203
    %p215 = scmp.eq.s32.totalorder %s73, 1
    %p216 = por %p214, %p215
    %p218 = scmp.ne.s32.totalorder %s203, %s217
    %p219 = scmp.eq.s32.totalorder %s73, 0
    %p220 = por %p218, %p219
    %s222 = sadd.s32 %s221, 1
    %p225 = scmp.eq.s32.totalorder %s67, 1
    %p226 = scmp.ne.s32.totalorder %s221, %s223
    %p227 = scmp.eq.s32.totalorder %s67, 0
    %p228 = por %p226, %p227
    %p229 = scmp.ne.s32.totalorder %s221, %s223
    %p230 = scmp.eq.s32.totalorder %s72, 1
    %p231 = por %p229, %p230
    %p232 = scmp.ne.s32.totalorder %s223, %s224
    %p233 = scmp.eq.s32.totalorder %s72, 0
    %p234 = por %p232, %p233
    %p235 = scmp.ne.s32.totalorder %s223, %s224
    %p236 = scmp.eq.s32.totalorder %s73, 1
    %p237 = por %p235, %p236
    %p239 = scmp.ne.s32.totalorder %s224, %s238
    %p240 = scmp.eq.s32.totalorder %s73, 0
    %p241 = por %p239, %p240
    %s243 = sadd.s32 %s242, 1
    %p246 = scmp.eq.s32.totalorder %s67, 1
    %p247 = scmp.ne.s32.totalorder %s242, %s244
    %p248 = scmp.eq.s32.totalorder %s67, 0
    %p249 = por %p247, %p248
    %p250 = scmp.ne.s32.totalorder %s242, %s244
    %p251 = scmp.eq.s32.totalorder %s72, 1
    %p252 = por %p250, %p251
    %p253 = scmp.ne.s32.totalorder %s244, %s245
    %p254 = scmp.eq.s32.totalorder %s72, 0
    %p255 = por %p253, %p254
    %p256 = scmp.ne.s32.totalorder %s244, %s245
    %p257 = scmp.eq.s32.totalorder %s73, 1
    %p258 = por %p256, %p257
    %p260 = scmp.ne.s32.totalorder %s245, %s259
    %p261 = scmp.eq.s32.totalorder %s73, 0
    %p262 = por %p260, %p261
    %s264 = sadd.s32 %s263, 1
    %p267 = scmp.eq.s32.totalorder %s67, 1
    %p268 = scmp.ne.s32.totalorder %s263, %s265
    %p269 = scmp.eq.s32.totalorder %s67, 0
    %p270 = por %p268, %p269
    %p271 = scmp.ne.s32.totalorder %s263, %s265
    %p272 = scmp.eq.s32.totalorder %s72, 1
    %p273 = por %p271, %p272
    %p274 = scmp.ne.s32.totalorder %s265, %s266
    %p275 = scmp.eq.s32.totalorder %s72, 0
    %p276 = por %p274, %p275
    %p277 = scmp.ne.s32.totalorder %s265, %s266
    %p278 = scmp.eq.s32.totalorder %s73, 1
    %p279 = por %p277, %p278
    %p281 = scmp.ne.s32.totalorder %s266, %s280
    %p282 = scmp.eq.s32.totalorder %s73, 0
    %p283 = por %p281, %p282
    %s285 = sadd.s32 %s284, 1
    %p288 = scmp.eq.s32.totalorder %s67, 1
    %p289 = scmp.ne.s32.totalorder %s284, %s286
    %p290 = scmp.eq.s32.totalorder %s67, 0
    %p291 = por %p289, %p290
    %p292 = scmp.ne.s32.totalorder %s284, %s286
    %p293 = scmp.eq.s32.totalorder %s72, 1
    %p294 = por %p292, %p293
    %p295 = scmp.ne.s32.totalorder %s286, %s287
    %p296 = scmp.eq.s32.totalorder %s72, 0
    %p297 = por %p295, %p296
    %p298 = scmp.ne.s32.totalorder %s286, %s287
    %p299 = scmp.eq.s32.totalorder %s73, 1
    %p300 = por %p298, %p299
    %p302 = scmp.ne.s32.totalorder %s287, %s301
    %p303 = scmp.eq.s32.totalorder %s73, 0
    %p304 = por %p302, %p303
    %s306 = sadd.s32 %s305, 1
    %p309 = scmp.eq.s32.totalorder %s67, 1
    %p310 = scmp.ne.s32.totalorder %s305, %s307
    %p311 = scmp.eq.s32.totalorder %s67, 0
    %p312 = por %p310, %p311
    %p313 = scmp.ne.s32.totalorder %s305, %s307
    %p314 = scmp.eq.s32.totalorder %s72, 1
    %p315 = por %p313, %p314
    %p316 = scmp.ne.s32.totalorder %s307, %s308
    %p317 = scmp.eq.s32.totalorder %s72, 0
    %p318 = por %p316, %p317
    %p319 = scmp.ne.s32.totalorder %s307, %s308
    %p320 = scmp.eq.s32.totalorder %s73, 1
    %p321 = por %p319, %p320
    %p323 = scmp.ne.s32.totalorder %s308, %s322
    %p324 = scmp.eq.s32.totalorder %s73, 0
    %p325 = por %p323, %p324
    %s327 = sadd.s32 %s326, 1
    %p330 = scmp.eq.s32.totalorder %s67, 1
    %p331 = scmp.ne.s32.totalorder %s326, %s328
    %p332 = scmp.eq.s32.totalorder %s67, 0
    %p333 = por %p331, %p332
    %p334 = scmp.ne.s32.totalorder %s326, %s328
    %p335 = scmp.eq.s32.totalorder %s72, 1
    %p336 = por %p334, %p335
    %p337 = scmp.ne.s32.totalorder %s328, %s329
    %p338 = scmp.eq.s32.totalorder %s72, 0
    %p339 = por %p337, %p338
    %p340 = scmp.ne.s32.totalorder %s328, %s329
    %p341 = scmp.eq.s32.totalorder %s73, 1
    %p342 = por %p340, %p341
    %p344 = scmp.ne.s32.totalorder %s329, %s343
    %p345 = scmp.eq.s32.totalorder %s73, 0
    %p346 = por %p344, %p345
    %s348 = sadd.s32 %s347, 1
    %p351 = scmp.eq.s32.totalorder %s67, 1
    %p352 = scmp.ne.s32.totalorder %s347, %s349
    %p353 = scmp.eq.s32.totalorder %s67, 0
    %p354 = por %p352, %p353
    %p355 = scmp.ne.s32.totalorder %s347, %s349
    %p356 = scmp.eq.s32.totalorder %s72, 1
    %p357 = por %p355, %p356
    %p358 = scmp.ne.s32.totalorder %s349, %s350
    %p359 = scmp.eq.s32.totalorder %s72, 0
    %p360 = por %p358, %p359
    %p361 = scmp.ne.s32.totalorder %s349, %s350
    %p362 = scmp.eq.s32.totalorder %s73, 1
    %p363 = por %p361, %p362
    %p365 = scmp.ne.s32.totalorder %s350, %s364
    %p366 = scmp.eq.s32.totalorder %s73, 0
    %p367 = por %p365, %p366
    %s369 = sadd.s32 %s368, 1
    %p372 = scmp.eq.s32.totalorder %s67, 1
    %p373 = scmp.ne.s32.totalorder %s368, %s370
    %p374 = scmp.eq.s32.totalorder %s67, 0
    %p375 = por %p373, %p374
    %p376 = scmp.ne.s32.totalorder %s368, %s370
    %p377 = scmp.eq.s32.totalorder %s72, 1
    %p378 = por %p376, %p377
    %p379 = scmp.ne.s32.totalorder %s370, %s371
    %p380 = scmp.eq.s32.totalorder %s72, 0
    %p381 = por %p379, %p380
    %p382 = scmp.ne.s32.totalorder %s370, %s371
    %p383 = scmp.eq.s32.totalorder %s73, 1
    %p384 = por %p382, %p383
    %p386 = scmp.ne.s32.totalorder %s371, %s385
    %p387 = scmp.eq.s32.totalorder %s73, 0
    %p388 = por %p386, %p387
    %s390 = sadd.s32 %s389, 1
    %p393 = scmp.eq.s32.totalorder %s67, 1
    %p394 = scmp.ne.s32.totalorder %s389, %s391
    %p395 = scmp.eq.s32.totalorder %s67, 0
    %p396 = por %p394, %p395
    %p397 = scmp.ne.s32.totalorder %s389, %s391
    %p398 = scmp.eq.s32.totalorder %s72, 1
    %p399 = por %p397, %p398
    %p400 = scmp.ne.s32.totalorder %s391, %s392
    %p401 = scmp.eq.s32.totalorder %s72, 0
    %p402 = por %p400, %p401
    %p403 = scmp.ne.s32.totalorder %s391, %s392
    %p404 = scmp.eq.s32.totalorder %s73, 1
    %p405 = por %p403, %p404
    %p407 = scmp.ne.s32.totalorder %s392, %s406
    %p408 = scmp.eq.s32.totalorder %s73, 0
    %p409 = por %p407, %p408
    %s411 = sadd.s32 %s410, 1
    %p414 = scmp.eq.s32.totalorder %s67, 1
    %p415 = scmp.ne.s32.totalorder %s410, %s412
    %p416 = scmp.eq.s32.totalorder %s67, 0
    %p417 = por %p415, %p416
    %p418 = scmp.ne.s32.totalorder %s410, %s412
    %p419 = scmp.eq.s32.totalorder %s72, 1
    %p420 = por %p418, %p419
    %p421 = scmp.ne.s32.totalorder %s412, %s413
    %p422 = scmp.eq.s32.totalorder %s72, 0
    %p423 = por %p421, %p422
    %p424 = scmp.ne.s32.totalorder %s412, %s413
    %p425 = scmp.eq.s32.totalorder %s73, 1
    %p426 = por %p424, %p425
    %p428 = scmp.ne.s32.totalorder %s413, %s427
    %p429 = scmp.eq.s32.totalorder %s73, 0
    %p430 = por %p428, %p429
    %s432 = sadd.s32 %s431, 1
    %p435 = scmp.eq.s32.totalorder %s67, 1
    %p436 = scmp.ne.s32.totalorder %s431, %s433
    %p437 = scmp.eq.s32.totalorder %s67, 0
    %p438 = por %p436, %p437
    %p439 = scmp.ne.s32.totalorder %s431, %s433
    %p440 = scmp.eq.s32.totalorder %s72, 1
    %p441 = por %p439, %p440
    %p442 = scmp.ne.s32.totalorder %s433, %s434
    %p443 = scmp.eq.s32.totalorder %s72, 0
    %p444 = por %p442, %p443
    %p445 = scmp.ne.s32.totalorder %s433, %s434
    %p446 = scmp.eq.s32.totalorder %s73, 1
    %p447 = por %p445, %p446
    %p449 = scmp.ne.s32.totalorder %s434, %s448
    %p450 = scmp.eq.s32.totalorder %s73, 0
    %p451 = por %p449, %p450
    %s453 = sadd.s32 %s452, 1
    %p456 = scmp.eq.s32.totalorder %s67, 1
    %p457 = scmp.ne.s32.totalorder %s452, %s454
    %p458 = scmp.eq.s32.totalorder %s67, 0
    %p459 = por %p457, %p458
    %p460 = scmp.ne.s32.totalorder %s452, %s454
    %p461 = scmp.eq.s32.totalorder %s72, 1
    %p462 = por %p460, %p461
    %p463 = scmp.ne.s32.totalorder %s454, %s455
    %p464 = scmp.eq.s32.totalorder %s72, 0
    %p465 = por %p463, %p464
    %p466 = scmp.ne.s32.totalorder %s454, %s455
    %p467 = scmp.eq.s32.totalorder %s73, 1
    %p468 = por %p466, %p467
    %p470 = scmp.ne.s32.totalorder %s455, %s469
    %p471 = scmp.eq.s32.totalorder %s73, 0
    %p472 = por %p470, %p471
    %s474 = sadd.s32 %s473, 1
    %p477 = scmp.eq.s32.totalorder %s67, 1
    %p478 = scmp.ne.s32.totalorder %s473, %s475
    %p479 = scmp.eq.s32.totalorder %s67, 0
    %p480 = por %p478, %p479
    %p481 = scmp.ne.s32.totalorder %s473, %s475
    %p482 = scmp.eq.s32.totalorder %s72, 1
    %p483 = por %p481, %p482
    %p484 = scmp.ne.s32.totalorder %s475, %s476
    %p485 = scmp.eq.s32.totalorder %s72, 0
    %p486 = por %p484, %p485
    %p487 = scmp.ne.s32.totalorder %s475, %s476
    %p488 = scmp.eq.s32.totalorder %s73, 1
    %p489 = por %p487, %p488
    %p491 = scmp.ne.s32.totalorder %s476, %s490
    %p492 = scmp.eq.s32.totalorder %s73, 0
    %p493 = por %p491, %p492
    %s495 = sadd.s32 %s494, 1
    %p498 = scmp.eq.s32.totalorder %s67, 1
    %p499 = scmp.ne.s32.totalorder %s494, %s496
    %p500 = scmp.eq.s32.totalorder %s67, 0
    %p501 = por %p499, %p500
    %p502 = scmp.ne.s32.totalorder %s494, %s496
    %p503 = scmp.eq.s32.totalorder %s72, 1
    %p504 = por %p502, %p503
    %p505 = scmp.ne.s32.totalorder %s496, %s497
    %p506 = scmp.eq.s32.totalorder %s72, 0
    %p507 = por %p505, %p506
    %p508 = scmp.ne.s32.totalorder %s496, %s497
    %p509 = scmp.eq.s32.totalorder %s73, 1
    %p510 = por %p508, %p509
    %p512 = scmp.ne.s32.totalorder %s497, %s511
    %p513 = scmp.eq.s32.totalorder %s73, 0
    %p514 = por %p512, %p513
    %s516 = sadd.s32 %s515, 1
    %p519 = scmp.eq.s32.totalorder %s67, 1
    %p520 = scmp.ne.s32.totalorder %s515, %s517
    %p521 = scmp.eq.s32.totalorder %s67, 0
    %p522 = por %p520, %p521
    %p523 = scmp.ne.s32.totalorder %s515, %s517
    %p524 = scmp.eq.s32.totalorder %s72, 1
    %p525 = por %p523, %p524
    %p526 = scmp.ne.s32.totalorder %s517, %s518
    %p527 = scmp.eq.s32.totalorder %s72, 0
    %p528 = por %p526, %p527
    %p529 = scmp.ne.s32.totalorder %s517, %s518
    %p530 = scmp.eq.s32.totalorder %s73, 1
    %p531 = por %p529, %p530
    %p533 = scmp.ne.s32.totalorder %s518, %s532
    %p534 = scmp.eq.s32.totalorder %s73, 0
    %p535 = por %p533, %p534
    %s537 = sadd.s32 %s536, 1
    %p540 = scmp.eq.s32.totalorder %s67, 1
    %p541 = scmp.ne.s32.totalorder %s536, %s538
    %p542 = scmp.eq.s32.totalorder %s67, 0
    %p543 = por %p541, %p542
    %p544 = scmp.ne.s32.totalorder %s536, %s538
    %p545 = scmp.eq.s32.totalorder %s72, 1
    %p546 = por %p544, %p545
    %p547 = scmp.ne.s32.totalorder %s538, %s539
    %p548 = scmp.eq.s32.totalorder %s72, 0
    %p549 = por %p547, %p548
    %p550 = scmp.ne.s32.totalorder %s538, %s539
    %p551 = scmp.eq.s32.totalorder %s73, 1
    %p552 = por %p550, %p551
    %p554 = scmp.ne.s32.totalorder %s539, %s553
    %p555 = scmp.eq.s32.totalorder %s73, 0
    %p556 = por %p554, %p555
    %s558 = sadd.s32 %s557, 1
    %p561 = scmp.eq.s32.totalorder %s67, 1
    %p562 = scmp.ne.s32.totalorder %s557, %s559
    %p563 = scmp.eq.s32.totalorder %s67, 0
    %p564 = por %p562, %p563
    %p565 = scmp.ne.s32.totalorder %s557, %s559
    %p566 = scmp.eq.s32.totalorder %s72, 1
    %p567 = por %p565, %p566
    %p568 = scmp.ne.s32.totalorder %s559, %s560
    %p569 = scmp.eq.s32.totalorder %s72, 0
    %p570 = por %p568, %p569
    %p571 = scmp.ne.s32.totalorder %s559, %s560
    %p572 = scmp.eq.s32.totalorder %s73, 1
    %p573 = por %p571, %p572
    %p575 = scmp.ne.s32.totalorder %s560, %s574
    %p576 = scmp.eq.s32.totalorder %s73, 0
    %p577 = por %p575, %p576
    %s579 = sadd.s32 %s578, 1
    %p582 = scmp.eq.s32.totalorder %s67, 1
    %p583 = scmp.ne.s32.totalorder %s578, %s580
    %p584 = scmp.eq.s32.totalorder %s67, 0
    %p585 = por %p583, %p584
    %p586 = scmp.ne.s32.totalorder %s578, %s580
    %p587 = scmp.eq.s32.totalorder %s72, 1
    %p588 = por %p586, %p587
    %p589 = scmp.ne.s32.totalorder %s580, %s581
    %p590 = scmp.eq.s32.totalorder %s72, 0
    %p591 = por %p589, %p590
    %p592 = scmp.ne.s32.totalorder %s580, %s581
    %p593 = scmp.eq.s32.totalorder %s73, 1
    %p594 = por %p592, %p593
    %p596 = scmp.ne.s32.totalorder %s581, %s595
    %p597 = scmp.eq.s32.totalorder %s73, 0
    %p598 = por %p596, %p597
    %s600 = sadd.s32 %s599, 1
    %p603 = scmp.eq.s32.totalorder %s67, 1
    %p604 = scmp.ne.s32.totalorder %s599, %s601
    %p605 = scmp.eq.s32.totalorder %s67, 0
    %p606 = por %p604, %p605
    %p607 = scmp.ne.s32.totalorder %s599, %s601
    %p608 = scmp.eq.s32.totalorder %s72, 1
    %p609 = por %p607, %p608
    %p610 = scmp.ne.s32.totalorder %s601, %s602
    %p611 = scmp.eq.s32.totalorder %s72, 0
    %p612 = por %p610, %p611
    %p613 = scmp.ne.s32.totalorder %s601, %s602
    %p614 = scmp.eq.s32.totalorder %s73, 1
    %p615 = por %p613, %p614
    %p617 = scmp.ne.s32.totalorder %s602, %s616
    %p618 = scmp.eq.s32.totalorder %s73, 0
    %p619 = por %p617, %p618
    %s621 = sadd.s32 %s620, 1
    %p624 = scmp.eq.s32.totalorder %s67, 1
    %p625 = scmp.ne.s32.totalorder %s620, %s622
    %p626 = scmp.eq.s32.totalorder %s67, 0
    %p627 = por %p625, %p626
    %p628 = scmp.ne.s32.totalorder %s620, %s622
    %p629 = scmp.eq.s32.totalorder %s72, 1
    %p630 = por %p628, %p629
    %p631 = scmp.ne.s32.totalorder %s622, %s623
    %p632 = scmp.eq.s32.totalorder %s72, 0
    %p633 = por %p631, %p632
    %p634 = scmp.ne.s32.totalorder %s622, %s623
    %p635 = scmp.eq.s32.totalorder %s73, 1
    %p636 = por %p634, %p635
    %p638 = scmp.ne.s32.totalorder %s623, %s637
    %p639 = scmp.eq.s32.totalorder %s73, 0
    %p640 = por %p638, %p639
    %s642 = sadd.s32 %s641, 1
    %p645 = scmp.eq.s32.totalorder %s67, 1
    %p646 = scmp.ne.s32.totalorder %s641, %s643
    %p647 = scmp.eq.s32.totalorder %s67, 0
    %p648 = por %p646, %p647
    %p649 = scmp.ne.s32.totalorder %s641, %s643
    %p650 = scmp.eq.s32.totalorder %s72, 1
    %p651 = por %p649, %p650
    %p652 = scmp.ne.s32.totalorder %s643, %s644
    %p653 = scmp.eq.s32.totalorder %s72, 0
    %p654 = por %p652, %p653
    %p655 = scmp.ne.s32.totalorder %s643, %s644
    %p656 = scmp.eq.s32.totalorder %s73, 1
    %p657 = por %p655, %p656
    %p659 = scmp.ne.s32.totalorder %s644, %s658
    %p660 = scmp.eq.s32.totalorder %s73, 0
    %p661 = por %p659, %p660
    %s663 = sadd.s32 %s662, 1
    %p666 = scmp.eq.s32.totalorder %s67, 1
    %p667 = scmp.ne.s32.totalorder %s662, %s664
    %p668 = scmp.eq.s32.totalorder %s67, 0
    %p669 = por %p667, %p668
    %p670 = scmp.ne.s32.totalorder %s662, %s664
    %p671 = scmp.eq.s32.totalorder %s72, 1
    %p672 = por %p670, %p671
    %p673 = scmp.ne.s32.totalorder %s664, %s665
    %p674 = scmp.eq.s32.totalorder %s72, 0
    %p675 = por %p673, %p674
    %p676 = scmp.ne.s32.totalorder %s664, %s665
    %p677 = scmp.eq.s32.totalorder %s73, 1
    %p678 = por %p676, %p677
    %p680 = scmp.ne.s32.totalorder %s665, %s679
    %p681 = scmp.eq.s32.totalorder %s73, 0
    %p682 = por %p680, %p681
    %s684 = sadd.s32 %s683, 1
    %p687 = scmp.eq.s32.totalorder %s67, 1
    %p688 = scmp.ne.s32.totalorder %s683, %s685
    %p689 = scmp.eq.s32.totalorder %s67, 0
    %p690 = por %p688, %p689
    %p691 = scmp.ne.s32.totalorder %s683, %s685
    %p692 = scmp.eq.s32.totalorder %s72, 1
    %p693 = por %p691, %p692
    %p694 = scmp.ne.s32.totalorder %s685, %s686
    %p695 = scmp.eq.s32.totalorder %s72, 0
    %p696 = por %p694, %p695
    %p697 = scmp.ne.s32.totalorder %s685, %s686
    %p698 = scmp.eq.s32.totalorder %s73, 1
    %p699 = por %p697, %p698
    %p701 = scmp.ne.s32.totalorder %s686, %s700
    %p702 = scmp.eq.s32.totalorder %s73, 0
    %p703 = por %p701, %p702
    %s705 = sadd.s32 %s704, 1
    %p708 = scmp.eq.s32.totalorder %s67, 1
    %p709 = scmp.ne.s32.totalorder %s704, %s706
    %p710 = scmp.eq.s32.totalorder %s67, 0
    %p711 = por %p709, %p710
    %p712 = scmp.ne.s32.totalorder %s704, %s706
    %p713 = scmp.eq.s32.totalorder %s72, 1
    %p714 = por %p712, %p713
    %p715 = scmp.ne.s32.totalorder %s706, %s707
    %p716 = scmp.eq.s32.totalorder %s72, 0
    %p717 = por %p715, %p716
    %p718 = scmp.ne.s32.totalorder %s706, %s707
    %p719 = scmp.eq.s32.totalorder %s73, 1
    %p720 = por %p718, %p719
    %p722 = scmp.ne.s32.totalorder %s707, %s721
    %p723 = scmp.eq.s32.totalorder %s73, 0
    %p724 = por %p722, %p723
    %s725 = ssub.s32 %s67, %s74
    %p726 = scmp.eq.s32.totalorder %s725, 0
    %s728 = sadd.s32 %s727, 1
    %s729 = scalar_select %p726, %s727, %s728
    %p732 = pneg %p726
    %p733 = scmp.eq.s32.totalorder %s67, 1
    %p734 = por %p732, %p733
    %p735 = scmp.ne.s32.totalorder %s727, %s730
    %p736 = scmp.eq.s32.totalorder %s67, 0
    %p737 = por %p735, %p736
    %p738 = scmp.ne.s32.totalorder %s727, %s730
    %p739 = scmp.eq.s32.totalorder %s72, 1
    %p740 = por %p738, %p739
    %p741 = scmp.ne.s32.totalorder %s730, %s731
    %p742 = scmp.eq.s32.totalorder %s72, 0
    %p743 = por %p741, %p742
    %p744 = scmp.ne.s32.totalorder %s730, %s731
    %p745 = scmp.eq.s32.totalorder %s73, 1
    %p746 = por %p744, %p745
    %p748 = scmp.ne.s32.totalorder %s731, %s747
    %p749 = scmp.eq.s32.totalorder %s73, 0
    %p750 = por %p748, %p749
    %p751 = scmp.le.s32.totalorder 1, %s67
    %p752 = scmp.lt.s32.totalorder %s67, 3
    %p753 = pnand %p751, %p752
    %p754 = pneg %p753
    // Predicated region
    $region9: #{transformer_decoder.1} parent=5 // pred_check
      _
    $region10: #{transformer_decoder.1} parent=5 // pred_check_branch
      %756 = sbr.rel (%p753) target = $region12
    $region11: #{transformer_decoder.1} parent=5 // pred_region
      %s757 = ssub.s32 %s67, 1
      // Predicated region
      $region13: #{transformer_decoder.1} parent=11 // pred_check
        %p758 = pneg %p192
      $region14: #{transformer_decoder.1} parent=11 // pred_check_branch
        %760 = sbr.rel (%p758) target = $region16
      $region15: #{transformer_decoder.1} parent=11 // pred_region
        _
      $region16: #{transformer_decoder.1} parent=11 // pred_fallthru
        _
      // Predicated region
      $region17: #{transformer_decoder.1} parent=11 // pred_check
        %p761 = pneg %p213
      $region18: #{transformer_decoder.1} parent=11 // pred_check_branch
        %763 = sbr.rel (%p761) target = $region20
      $region19: #{transformer_decoder.1} parent=11 // pred_region
        _
      $region20: #{transformer_decoder.1} parent=11 // pred_fallthru
        _
      // Predicated region
      $region21: #{transformer_decoder.1} parent=11 // pred_check
        %p764 = pneg %p234
      $region22: #{transformer_decoder.1} parent=11 // pred_check_branch
        %766 = sbr.rel (%p764) target = $region24
      $region23: #{transformer_decoder.1} parent=11 // pred_region
        _
      $region24: #{transformer_decoder.1} parent=11 // pred_fallthru
        _
      // Predicated region
      $region25: #{transformer_decoder.1} parent=11 // pred_check
        %p767 = pneg %p255
      $region26: #{transformer_decoder.1} parent=11 // pred_check_branch
        %769 = sbr.rel (%p767) target = $region28
      $region27: #{transformer_decoder.1} parent=11 // pred_region
        _
      $region28: #{transformer_decoder.1} parent=11 // pred_fallthru
        _
      // Predicated region
      $region29: #{transformer_decoder.1} parent=11 // pred_check
        %p770 = pneg %p276
      $region30: #{transformer_decoder.1} parent=11 // pred_check_branch
        %772 = sbr.rel (%p770) target = $region32
      $region31: #{transformer_decoder.1} parent=11 // pred_region
        _
      $region32: #{transformer_decoder.1} parent=11 // pred_fallthru
        _
      // Predicated region
      $region33: #{transformer_decoder.1} parent=11 // pred_check
        %p773 = pneg %p297
      $region34: #{transformer_decoder.1} parent=11 // pred_check_branch
        %775 = sbr.rel (%p773) target = $region36
      $region35: #{transformer_decoder.1} parent=11 // pred_region
        _
      $region36: #{transformer_decoder.1} parent=11 // pred_fallthru
        _
      // Predicated region
      $region37: #{transformer_decoder.1} parent=11 // pred_check
        %p776 = pneg %p318
      $region38: #{transformer_decoder.1} parent=11 // pred_check_branch
        %778 = sbr.rel (%p776) target = $region40
      $region39: #{transformer_decoder.1} parent=11 // pred_region
        _
      $region40: #{transformer_decoder.1} parent=11 // pred_fallthru
        _
      // Predicated region
      $region41: #{transformer_decoder.1} parent=11 // pred_check
        %p779 = pneg %p339
      $region42: #{transformer_decoder.1} parent=11 // pred_check_branch
        %781 = sbr.rel (%p779) target = $region44
      $region43: #{transformer_decoder.1} parent=11 // pred_region
        _
      $region44: #{transformer_decoder.1} parent=11 // pred_fallthru
        _
      // Predicated region
      $region45: #{transformer_decoder.1} parent=11 // pred_check
        %p782 = pneg %p360
      $region46: #{transformer_decoder.1} parent=11 // pred_check_branch
        %784 = sbr.rel (%p782) target = $region48
      $region47: #{transformer_decoder.1} parent=11 // pred_region
        _
      $region48: #{transformer_decoder.1} parent=11 // pred_fallthru
        _
      // Predicated region
      $region49: #{transformer_decoder.1} parent=11 // pred_check
        %p785 = pneg %p381
      $region50: #{transformer_decoder.1} parent=11 // pred_check_branch
        %787 = sbr.rel (%p785) target = $region52
      $region51: #{transformer_decoder.1} parent=11 // pred_region
        _
      $region52: #{transformer_decoder.1} parent=11 // pred_fallthru
        _
      // Predicated region
      $region53: #{transformer_decoder.1} parent=11 // pred_check
        %p788 = pneg %p402
      $region54: #{transformer_decoder.1} parent=11 // pred_check_branch
        %790 = sbr.rel (%p788) target = $region56
      $region55: #{transformer_decoder.1} parent=11 // pred_region
        _
      $region56: #{transformer_decoder.1} parent=11 // pred_fallthru
        _
      // Predicated region
      $region57: #{transformer_decoder.1} parent=11 // pred_check
        %p791 = pneg %p423
      $region58: #{transformer_decoder.1} parent=11 // pred_check_branch
        %793 = sbr.rel (%p791) target = $region60
      $region59: #{transformer_decoder.1} parent=11 // pred_region
        _
      $region60: #{transformer_decoder.1} parent=11 // pred_fallthru
        _
      // Predicated region
      $region61: #{transformer_decoder.1} parent=11 // pred_check
        %p794 = pneg %p444
      $region62: #{transformer_decoder.1} parent=11 // pred_check_branch
        %796 = sbr.rel (%p794) target = $region64
      $region63: #{transformer_decoder.1} parent=11 // pred_region
        _
      $region64: #{transformer_decoder.1} parent=11 // pred_fallthru
        _
      // Predicated region
      $region65: #{transformer_decoder.1} parent=11 // pred_check
        %p797 = pneg %p465
      $region66: #{transformer_decoder.1} parent=11 // pred_check_branch
        %799 = sbr.rel (%p797) target = $region68
      $region67: #{transformer_decoder.1} parent=11 // pred_region
        _
      $region68: #{transformer_decoder.1} parent=11 // pred_fallthru
        _
      // Predicated region
      $region69: #{transformer_decoder.1} parent=11 // pred_check
        %p800 = pneg %p486
      $region70: #{transformer_decoder.1} parent=11 // pred_check_branch
        %802 = sbr.rel (%p800) target = $region72
      $region71: #{transformer_decoder.1} parent=11 // pred_region
        _
      $region72: #{transformer_decoder.1} parent=11 // pred_fallthru
        _
      // Predicated region
      $region73: #{transformer_decoder.1} parent=11 // pred_check
        %p803 = pneg %p507
      $region74: #{transformer_decoder.1} parent=11 // pred_check_branch
        %805 = sbr.rel (%p803) target = $region76
      $region75: #{transformer_decoder.1} parent=11 // pred_region
        _
      $region76: #{transformer_decoder.1} parent=11 // pred_fallthru
        _
      // Predicated region
      $region77: #{transformer_decoder.1} parent=11 // pred_check
        %p806 = pneg %p528
      $region78: #{transformer_decoder.1} parent=11 // pred_check_branch
        %808 = sbr.rel (%p806) target = $region80
      $region79: #{transformer_decoder.1} parent=11 // pred_region
        _
      $region80: #{transformer_decoder.1} parent=11 // pred_fallthru
        _
      // Predicated region
      $region81: #{transformer_decoder.1} parent=11 // pred_check
        %p809 = pneg %p549
      $region82: #{transformer_decoder.1} parent=11 // pred_check_branch
        %811 = sbr.rel (%p809) target = $region84
      $region83: #{transformer_decoder.1} parent=11 // pred_region
        _
      $region84: #{transformer_decoder.1} parent=11 // pred_fallthru
        _
      // Predicated region
      $region85: #{transformer_decoder.1} parent=11 // pred_check
        %p812 = pneg %p570
      $region86: #{transformer_decoder.1} parent=11 // pred_check_branch
        %814 = sbr.rel (%p812) target = $region88
      $region87: #{transformer_decoder.1} parent=11 // pred_region
        _
      $region88: #{transformer_decoder.1} parent=11 // pred_fallthru
        _
      // Predicated region
      $region89: #{transformer_decoder.1} parent=11 // pred_check
        %p815 = pneg %p591
      $region90: #{transformer_decoder.1} parent=11 // pred_check_branch
        %817 = sbr.rel (%p815) target = $region92
      $region91: #{transformer_decoder.1} parent=11 // pred_region
        _
      $region92: #{transformer_decoder.1} parent=11 // pred_fallthru
        _
      // Predicated region
      $region93: #{transformer_decoder.1} parent=11 // pred_check
        %p818 = pneg %p612
      $region94: #{transformer_decoder.1} parent=11 // pred_check_branch
        %820 = sbr.rel (%p818) target = $region96
      $region95: #{transformer_decoder.1} parent=11 // pred_region
        _
      $region96: #{transformer_decoder.1} parent=11 // pred_fallthru
        _
      // Predicated region
      $region97: #{transformer_decoder.1} parent=11 // pred_check
        %p821 = pneg %p633
      $region98: #{transformer_decoder.1} parent=11 // pred_check_branch
        %823 = sbr.rel (%p821) target = $region100
      $region99: #{transformer_decoder.1} parent=11 // pred_region
        _
      $region100: #{transformer_decoder.1} parent=11 // pred_fallthru
        _
      // Predicated region
      $region101: #{transformer_decoder.1} parent=11 // pred_check
        %p824 = pneg %p654
      $region102: #{transformer_decoder.1} parent=11 // pred_check_branch
        %826 = sbr.rel (%p824) target = $region104
      $region103: #{transformer_decoder.1} parent=11 // pred_region
        _
      $region104: #{transformer_decoder.1} parent=11 // pred_fallthru
        _
      // Predicated region
      $region105: #{transformer_decoder.1} parent=11 // pred_check
        %p827 = pneg %p675
      $region106: #{transformer_decoder.1} parent=11 // pred_check_branch
        %829 = sbr.rel (%p827) target = $region108
      $region107: #{transformer_decoder.1} parent=11 // pred_region
        _
      $region108: #{transformer_decoder.1} parent=11 // pred_fallthru
        _
      // Predicated region
      $region109: #{transformer_decoder.1} parent=11 // pred_check
        %p830 = pneg %p696
      $region110: #{transformer_decoder.1} parent=11 // pred_check_branch
        %832 = sbr.rel (%p830) target = $region112
      $region111: #{transformer_decoder.1} parent=11 // pred_region
        _
      $region112: #{transformer_decoder.1} parent=11 // pred_fallthru
        _
      // Predicated region
      $region113: #{transformer_decoder.1} parent=11 // pred_check
        %p833 = pneg %p717
      $region114: #{transformer_decoder.1} parent=11 // pred_check_branch
        %835 = sbr.rel (%p833) target = $region116
      $region115: #{transformer_decoder.1} parent=11 // pred_region
        _
      $region116: #{transformer_decoder.1} parent=11 // pred_fallthru
        _
    $region12: #{transformer_decoder.1} parent=5 // pred_fallthru
      _
    %p836 = scmp.lt.s32.totalorder %s67, 2
    // Predicated region
    $region117: #{transformer_decoder.1} parent=5 // pred_check
      %p837 = pneg %p836
    $region118: #{transformer_decoder.1} parent=5 // pred_check_branch
      %839 = sbr.rel (%p837) target = $region120
    $region119: #{transformer_decoder.1} parent=5 // pred_region
      // Predicated region
      $region121: #{transformer_decoder.1} parent=119 // pred_check
        %p840 = pneg %p87
      $region122: #{transformer_decoder.1} parent=119 // pred_check_branch
        %842 = sbr.rel (%p840) target = $region124
      $region123: #{transformer_decoder.1} parent=119 // pred_region
        %p843 = scmp.lt.s32.totalorder %s67, 1
        %s844 = scalar_select %p843, %s67, 1
        %s845 = smul.addr %s844, 8
        %s846 = scalar_lea.vmem %s1, %s845
      $region124: #{transformer_decoder.1} parent=119 // pred_fallthru
        _
      // Predicated region
      $region125: #{transformer_decoder.1} parent=119 // pred_check
        %p847 = pneg %p113
      $region126: #{transformer_decoder.1} parent=119 // pred_check_branch
        %849 = sbr.rel (%p847) target = $region128
      $region127: #{transformer_decoder.1} parent=119 // pred_region
        %p850 = scmp.lt.s32.totalorder %s67, 1
        %s851 = scalar_select %p850, %s67, 1
        %s852 = smul.addr %s851, 2
        %s853 = smul.addr %s852, 8
        %s854 = scalar_lea.vmem %s3, %s853
      $region128: #{transformer_decoder.1} parent=119 // pred_fallthru
        _
      // Predicated region
      $region129: #{transformer_decoder.1} parent=119 // pred_check
        %p855 = pneg %p139
      $region130: #{transformer_decoder.1} parent=119 // pred_check_branch
        %857 = sbr.rel (%p855) target = $region132
      $region131: #{transformer_decoder.1} parent=119 // pred_region
        %p858 = scmp.lt.s32.totalorder %s67, 1
        %s859 = scalar_select %p858, %s67, 1
        %s860 = smul.addr %s859, 2
        %s861 = smul.addr %s860, 8
        %s862 = scalar_lea.vmem %s5, %s861
      $region132: #{transformer_decoder.1} parent=119 // pred_fallthru
        _
      // Predicated region
      $region133: #{transformer_decoder.1} parent=119 // pred_check
        %p863 = pneg %p165
      $region134: #{transformer_decoder.1} parent=119 // pred_check_branch
        %865 = sbr.rel (%p863) target = $region136
      $region135: #{transformer_decoder.1} parent=119 // pred_region
        %p866 = scmp.lt.s32.totalorder %s67, 1
        %s867 = scalar_select %p866, %s67, 1
        %s868 = smul.addr %s867, 8
        %s869 = scalar_lea.vmem %s7, %s868
      $region136: #{transformer_decoder.1} parent=119 // pred_fallthru
        _
    $region120: #{transformer_decoder.1} parent=5 // pred_fallthru
      _
    %p870 = scmp.le.s32.totalorder 1, %s67
    %p871 = scmp.lt.s32.totalorder %s67, 3
    %p872 = pnand %p870, %p871
    %p873 = pneg %p872
    // Predicated region
    $region137: #{transformer_decoder.1} parent=5 // pred_check
      _
    $region138: #{transformer_decoder.1} parent=5 // pred_check_branch
      %875 = sbr.rel (%p872) target = $region140
    $region139: #{transformer_decoder.1} parent=5 // pred_region
      %s876 = ssub.s32 %s67, 1
      %p877 = scmp.lt.s32.totalorder %s72, 1
      %s878 = scalar_select %p877, %s72, 1
      %s879 = smul.addr %s878, 8
      %s880 = scalar_lea.vmem %s1, %s879
      %p881 = pneg %p93
      %p882 = pneg %p90
      %p883 = scmp.lt.s32.totalorder %s72, 1
      %s884 = scalar_select %p883, %s72, 1
      %s885 = smul.addr %s884, 2
      %s886 = smul.addr %s885, 8
      %s887 = scalar_lea.vmem %s3, %s886
      %p888 = pneg %p119
      %p889 = pneg %p116
      %p890 = scmp.lt.s32.totalorder %s72, 1
      %s891 = scalar_select %p890, %s72, 1
      %s892 = smul.addr %s891, 2
      %s893 = smul.addr %s892, 8
      %s894 = scalar_lea.vmem %s5, %s893
      %p895 = pneg %p145
      %p896 = pneg %p142
      %p897 = scmp.lt.s32.totalorder %s72, 1
      %s898 = scalar_select %p897, %s72, 1
      %s899 = smul.addr %s898, 8
      %s900 = scalar_lea.vmem %s7, %s899
      %p901 = pneg %p171
      %p902 = pneg %p168
      %p903 = pneg %p192
      %p904 = pneg %p189
      %p905 = pneg %p213
      %p906 = pneg %p210
      %p907 = pneg %p234
      %p908 = pneg %p231
      %p909 = pneg %p255
      %p910 = pneg %p252
      %p911 = pneg %p276
      %p912 = pneg %p273
      %p913 = pneg %p297
      %p914 = pneg %p294
      %p915 = pneg %p318
      %p916 = pneg %p315
      %p917 = pneg %p339
      %p918 = pneg %p336
      %p919 = pneg %p360
      %p920 = pneg %p357
      %p921 = pneg %p381
      %p922 = pneg %p378
      %p923 = pneg %p402
      %p924 = pneg %p399
      %p925 = pneg %p423
      %p926 = pneg %p420
      %p927 = pneg %p444
      %p928 = pneg %p441
      %p929 = pneg %p465
      %p930 = pneg %p462
      %p931 = pneg %p486
      %p932 = pneg %p483
      %p933 = pneg %p507
      %p934 = pneg %p504
      %p935 = pneg %p528
      %p936 = pneg %p525
      %p937 = pneg %p549
      %p938 = pneg %p546
      %p939 = pneg %p570
      %p940 = pneg %p567
      %p941 = pneg %p591
      %p942 = pneg %p588
      %p943 = pneg %p612
      %p944 = pneg %p609
      %p945 = pneg %p633
      %p946 = pneg %p630
      %p947 = pneg %p654
      %p948 = pneg %p651
      %p949 = pneg %p675
      %p950 = pneg %p672
      %p951 = pneg %p696
      %p952 = pneg %p693
      %p953 = pneg %p717
      %p954 = pneg %p714
      %p955 = pneg %p743
      %p956 = pneg %p740
      %p957 = scmp.lt.s32.totalorder %s72, 1
      %s958 = scalar_select %p957, %s72, 1
      %s959 = smul.addr %s958, 8
      %s960 = scalar_lea.vmem %s61, %s959
      %p961 = scmp.lt.s32.totalorder %s72, 1
      %s962 = scalar_select %p961, %s72, 1
      %s963 = smul.addr %s962, 8
      %s964 = scalar_lea.vmem %s1, %s963
      %p965 = scmp.lt.s32.totalorder %s72, 1
      %s966 = scalar_select %p965, %s72, 1
      %s967 = smul.addr %s966, 2
      %s968 = smul.addr %s967, 8
      %s969 = scalar_lea.vmem %s3, %s968
      %p970 = scmp.lt.s32.totalorder %s72, 1
      %s971 = scalar_select %p970, %s72, 1
      %s972 = smul.addr %s971, 2
      %s973 = smul.addr %s972, 8
      %s974 = scalar_lea.vmem %s5, %s973
      %p975 = scmp.lt.s32.totalorder %s72, 1
      %s976 = scalar_select %p975, %s72, 1
      %s977 = smul.addr %s976, 8
      %s978 = scalar_lea.vmem %s7, %s977
      %p979 = scmp.lt.s32.totalorder %s72, 1
      %s980 = scalar_select %p979, %s72, 1
      %s981 = smul.addr %s980, 8
      %s982 = scalar_lea.vmem %s61, %s981
      %v984 = vld [vmem:[%s964] sm:$0xff]
      %v985 = vld [vmem:[%s978] sm:$0xff]
      %v986 = vld [vmem:[%s969] sm:$0xff]
      %v987 = vld [vmem:[%s969 + $0x8] sm:$0xff]
      %v988 = vld [vmem:[%s974] sm:$0xff]
      %v989 = vld [vmem:[%s974 + $0x8] sm:$0xff]
      %v990 = vld [vmem:[%s9] sm:$0xff]
      %v991 = vld [vmem:[%s9 + $0x8] sm:$0xff]
      %v992 = vld [vmem:[%s9 + $0x10] sm:$0xff]
      %v993 = vld [vmem:[%s9 + $0x18] sm:$0xff]
      %v994 = vpack.c.bf16 %v991, %v990
      %v995 = vpack.c.bf16 %v993, %v992
      %v996 = vld [vmem:[%s13] sm:$0xff]
      %v997 = vld [vmem:[%s13 + $0x8] sm:$0xff]
      %v998 = vld [vmem:[%s13 + $0x10] sm:$0xff]
      %v999 = vld [vmem:[%s13 + $0x18] sm:$0xff]
      %v1000 = vpack.c.bf16 %v997, %v996
      %v1001 = vpack.c.bf16 %v999, %v998
      %v1002 = vld [vmem:[%s17] sm:$0xff]
      %v1003 = vld [vmem:[%s17 + $0x8] sm:$0xff]
      %v1004 = vld [vmem:[%s17 + $0x10] sm:$0xff]
      %v1005 = vld [vmem:[%s17 + $0x18] sm:$0xff]
      %v1006 = vpack.c.bf16 %v1003, %v1002
      %v1007 = vpack.c.bf16 %v1005, %v1004
      %v1008 = vld [vmem:[%s21] sm:$0xff]
      %v1009 = vld [vmem:[%s21 + $0x8] sm:$0xff]
      %v1010 = vld [vmem:[%s21 + $0x10] sm:$0xff]
      %v1011 = vld [vmem:[%s21 + $0x18] sm:$0xff]
      %v1012 = vpack.c.bf16 %v1009, %v1008
      %v1013 = vpack.c.bf16 %v1011, %v1010
      %v1014 = vld [vmem:[%s25] sm:$0xff]
      %v1015 = vld [vmem:[%s25 + $0x8] sm:$0xff]
      %v1016 = vld [vmem:[%s25 + $0x10] sm:$0xff]
      %v1017 = vld [vmem:[%s25 + $0x18] sm:$0xff]
      %v1018 = vpack.c.bf16 %v1015, %v1014
      %v1019 = vpack.c.bf16 %v1017, %v1016
      %v1020 = vld [vmem:[%s29] sm:$0xff]
      %v1021 = vld [vmem:[%s29 + $0x8] sm:$0xff]
      %v1022 = vld [vmem:[%s29 + $0x10] sm:$0xff]
      %v1023 = vld [vmem:[%s29 + $0x18] sm:$0xff]
      %v1024 = vpack.c.bf16 %v1021, %v1020
      %v1025 = vpack.c.bf16 %v1023, %v1022
      %v1026 = vld [vmem:[%s33] sm:$0xff]
      %v1027 = vld [vmem:[%s33 + $0x8] sm:$0xff]
      %v1028 = vld [vmem:[%s33 + $0x10] sm:$0xff]
      %v1029 = vld [vmem:[%s33 + $0x18] sm:$0xff]
      %v1030 = vpack.c.bf16 %v1027, %v1026
      %v1031 = vpack.c.bf16 %v1029, %v1028
      %v1032 = vld [vmem:[%s37] sm:$0xff]
      %v1033 = vld [vmem:[%s37 + $0x8] sm:$0xff]
      %v1034 = vld [vmem:[%s37 + $0x10] sm:$0xff]
      %v1035 = vld [vmem:[%s37 + $0x18] sm:$0xff]
      %v1036 = vpack.c.bf16 %v1033, %v1032
      %v1037 = vpack.c.bf16 %v1035, %v1034
      %v1038 = vld [vmem:[%s41] sm:$0xff]
      %v1039 = vld [vmem:[%s41 + $0x8] sm:$0xff]
      %v1040 = vld [vmem:[%s41 + $0x10] sm:$0xff]
      %v1041 = vld [vmem:[%s41 + $0x18] sm:$0xff]
      %v1042 = vld [vmem:[%s41 + $0x20] sm:$0xff]
      %v1043 = vld [vmem:[%s41 + $0x28] sm:$0xff]
      %v1044 = vld [vmem:[%s41 + $0x30] sm:$0xff]
      %v1045 = vld [vmem:[%s41 + $0x38] sm:$0xff]
      %v1046 = vpack.c.bf16 %v1039, %v1038
      %v1047 = vpack.c.bf16 %v1041, %v1040
      %v1048 = vpack.c.bf16 %v1043, %v1042
      %v1049 = vpack.c.bf16 %v1045, %v1044
      %v1050 = vld [vmem:[%s11] sm:$0x1]
      %v1051 = vld [vmem:[%s15] sm:$0x1]
      %v1052 = vld [vmem:[%s19] sm:$0x1]
      %v1053 = vld [vmem:[%s23] sm:$0x1]
      %v1054 = vld [vmem:[%s27] sm:$0x1]
      %v1055 = vld [vmem:[%s31] sm:$0x1]
      %v1056 = vld [vmem:[%s35] sm:$0x1]
      %v1057 = vld [vmem:[%s39] sm:$0x1]
      %v1058 = vld [vmem:[%s43] sm:$0x1]
      %v1059 = vld [vmem:[%s45] sm:$0x1]
      %v1060 = vld [vmem:[%s47] sm:$0x1]
      %v1061 = vld [vmem:[%s49] sm:$0x1]
      %v1062 = vld [vmem:[%s51] sm:$0x1]
      %v1063 = vld [vmem:[%s53] sm:$0x1]
      %v1064 = vld [vmem:[%s55] sm:$0x1]
      %v1065 = vld [vmem:[%s57] sm:$0x1]
      %v1066 = vld [vmem:[%s59] sm:$0x1]
      %v1067 = vadd.f32 %v986, %v988
      %v1068 = vadd.f32 %v987, %v989
      %v1069 = vpack.c.bf16 %v1068, %v1067
      %v1071 = vlaneseq
      %v1072 = vshrl.u32 %v1071, 7
      %v1073 = vsub.s32 0, %v1072
      %v1074 = vrot.slane %v1054, %v1073
      %vm1076 = vcmask 261120
      %v1078 = vsel %vm1076, %v1069, 0
      %1080 = vmatprep.subr.bf16.mxu0 0
      %1081 = vmatpush1.bf16.msra.mxu0 0
      %1082 = vmatprep.subr.bf16.mxu0 0
      %1083 = vmatpush1.bf16.msra.mxu0 0
      %1084 = vmatprep.subr.bf16.mxu0 0
      %1085 = vmatpush1.bf16.msra.mxu0 0
      %1086 = vmatprep.subr.bf16.mxu0 0
      %1087 = vmatpush1.bf16.msra.mxu0 0
      %1088 = vmatprep.subr.bf16.mxu0 0
      %1089 = vmatpush1.bf16.msra.mxu0 0
      %1090 = vmatprep.subr.bf16.mxu0 0
      %1091 = vmatpush1.bf16.msra.mxu0 0
      %1092 = vmatprep.subr.bf16.mxu0 0
      %1093 = vmatpush1.bf16.msra.mxu0 %v1019
      %1094 = vmatprep.subr.bf16.mxu0 0
      %1095 = vmatpush1.bf16.msra.mxu0 %v1018
      %1096 = vmatprep.subr.bf16.mxu0 0
      %1097 = vmatpush2.bf16.msra.mxu0 0
      %1098 = vmatprep.subr.bf16.mxu0 0
      %1099 = vmatpush2.bf16.msra.mxu0 0
      %1100 = vmatprep.subr.bf16.mxu0 0
      %1101 = vmatpush2.bf16.msra.mxu0 0
      %1102 = vmatprep.subr.bf16.mxu0 0
      %1103 = vmatpush2.bf16.msra.mxu0 0
      %1104 = vmatprep.subr.bf16.mxu0 0
      %1105 = vmatpush2.bf16.msra.mxu0 0
      %1106 = vmatprep.subr.bf16.mxu0 0
      %1107 = vmatpush2.bf16.msra.mxu0 0
      %1108 = vmatprep.subr.bf16.mxu0 0
      %1109 = vmatpush2.bf16.msra.mxu0 0
      %1110 = vmatprep.subr.bf16.mxu0 0
      %1111 = vmatpush2.bf16.msra.mxu0 0
      %1112 = vmatprep.mubr.bf16.mxu0 0
      %1113 = vmatmul.mubr.bf16.gmra.mxu0 %v1078
      %v1114 = vpop.f32.mrf.mxu0
      %v1115 = vadd.f32 %v1074, %v1114
      %v1116 = vpop.f32.mrf.mxu0
      %v1117 = vpop.f32.mrf.mxu0
      %v1118 = vadd.f32 %v1074, %v1117
      %v1119 = vpop.f32.mrf.mxu0
      %1120 = vdwg.mxu0
      %1123 = vrot.lane.b32.xlu0 %v1115, 120
      %v1124 = vpop.permute.xlu0 %1123
      %1125 = vrot.lane.b32.xlu0 %v1118, 120
      %v1126 = vpop.permute.xlu0 %1125
      %1129 = vrot.lane.b32.xlu0 %v1115, 112
      %v1130 = vpop.permute.xlu0 %1129
      %1131 = vrot.lane.b32.xlu0 %v1118, 112
      %v1132 = vpop.permute.xlu0 %1131
      %1135 = vrot.lane.b32.xlu0 %v1115, 104
      %v1136 = vpop.permute.xlu0 %1135
      %1137 = vrot.lane.b32.xlu0 %v1118, 104
      %v1138 = vpop.permute.xlu0 %1137
      %v1141 = vpack.c.bf16 %v1118, %v1115
      %v1142 = vpack.c.bf16 %v1126, %v1124
      %v1143 = vpack.c.bf16 %v1132, %v1130
      %v1144 = vpack.c.bf16 %v1138, %v1136
      %v1145 = vpack.c.bf16 %v987, %v986
      %v1147 = vlaneseq
      %v1148 = vshrl.u32 %v1147, 7
      %v1149 = vsub.s32 0, %v1148
      %v1150 = vrot.slane %v1055, %v1149
      %v1153 = vsel %vm1076, %v1145, 0
      %1155 = vmatprep.subr.bf16.mxu0 0
      %1156 = vmatpush1.bf16.msra.mxu0 0
      %1157 = vmatprep.subr.bf16.mxu0 0
      %1158 = vmatpush1.bf16.msra.mxu0 0
      %1159 = vmatprep.subr.bf16.mxu0 0
      %1160 = vmatpush1.bf16.msra.mxu0 0
      %1161 = vmatprep.subr.bf16.mxu0 0
      %1162 = vmatpush1.bf16.msra.mxu0 0
      %1163 = vmatprep.subr.bf16.mxu0 0
      %1164 = vmatpush1.bf16.msra.mxu0 0
      %1165 = vmatprep.subr.bf16.mxu0 0
      %1166 = vmatpush1.bf16.msra.mxu0 0
      %1167 = vmatprep.subr.bf16.mxu0 0
      %1168 = vmatpush1.bf16.msra.mxu0 %v1025
      %1169 = vmatprep.subr.bf16.mxu0 0
      %1170 = vmatpush1.bf16.msra.mxu0 %v1024
      %1171 = vmatprep.subr.bf16.mxu0 0
      %1172 = vmatpush2.bf16.msra.mxu0 0
      %1173 = vmatprep.subr.bf16.mxu0 0
      %1174 = vmatpush2.bf16.msra.mxu0 0
      %1175 = vmatprep.subr.bf16.mxu0 0
      %1176 = vmatpush2.bf16.msra.mxu0 0
      %1177 = vmatprep.subr.bf16.mxu0 0
      %1178 = vmatpush2.bf16.msra.mxu0 0
      %1179 = vmatprep.subr.bf16.mxu0 0
      %1180 = vmatpush2.bf16.msra.mxu0 0
      %1181 = vmatprep.subr.bf16.mxu0 0
      %1182 = vmatpush2.bf16.msra.mxu0 0
      %1183 = vmatprep.subr.bf16.mxu0 0
      %1184 = vmatpush2.bf16.msra.mxu0 0
      %1185 = vmatprep.subr.bf16.mxu0 0
      %1186 = vmatpush2.bf16.msra.mxu0 0
      %1187 = vmatprep.mubr.bf16.mxu0 0
      %1188 = vmatmul.mubr.bf16.gmra.mxu0 %v1153
      %v1189 = vpop.f32.mrf.mxu0
      %v1190 = vadd.f32 %v1150, %v1189
      %v1191 = vpop.f32.mrf.mxu0
      %v1192 = vpop.f32.mrf.mxu0
      %v1193 = vadd.f32 %v1150, %v1192
      %v1194 = vpop.f32.mrf.mxu0
      %1195 = vdwg.mxu0
      %1198 = vrot.lane.b32.xlu0 %v1190, 120
      %v1199 = vpop.permute.xlu0 %1198
      %1200 = vrot.lane.b32.xlu0 %v1193, 120
      %v1201 = vpop.permute.xlu0 %1200
      %1204 = vrot.lane.b32.xlu0 %v1190, 112
      %v1205 = vpop.permute.xlu0 %1204
      %1206 = vrot.lane.b32.xlu0 %v1193, 112
      %v1207 = vpop.permute.xlu0 %1206
      %1210 = vrot.lane.b32.xlu0 %v1190, 104
      %v1211 = vpop.permute.xlu0 %1210
      %1212 = vrot.lane.b32.xlu0 %v1193, 104
      %v1213 = vpop.permute.xlu0 %1212
      %v1216 = vpack.c.bf16 %v1193, %v1190
      %v1217 = vpack.c.bf16 %v1201, %v1199
      %v1218 = vpack.c.bf16 %v1207, %v1205
      %v1219 = vpack.c.bf16 %v1213, %v1211
      loop: start=0, step=1, limit=2
      $region141: #{transformer_decoder.1} parent=139 // loop_pre_header
        _
      $region142: #{transformer_decoder.1} parent=139 // loop_header
        %s1221 = sphi 0, %s1225
        %p1222 = scmp.ge.s32.totalorder %s1221, 2
        %v1226 = vphi %v984, %v2597
      $region143: #{transformer_decoder.1} parent=139 // loop_header_branch
        %1224 = sbr.rel (%p1222) target = $region147
      $region144: #{transformer_decoder.1} parent=139 // loop_body
        %v1227 = vadd.f32 %v1226, %v985
        %v1228 = vpack.c.bf16 %v1227, %v1227
        %v1230 = vlaneseq
        %v1231 = vshrl.u32 %v1230, 7
        %v1232 = vsub.s32 0, %v1231
        %v1233 = vrot.slane %v1050, %v1232
        %v1236 = vsel %vm1076, %v1228, 0
        %1238 = vmatprep.subr.bf16.mxu0 0
        %1239 = vmatpush1.bf16.msra.mxu0 0
        %1240 = vmatprep.subr.bf16.mxu0 0
        %1241 = vmatpush1.bf16.msra.mxu0 0
        %1242 = vmatprep.subr.bf16.mxu0 0
        %1243 = vmatpush1.bf16.msra.mxu0 0
        %1244 = vmatprep.subr.bf16.mxu0 0
        %1245 = vmatpush1.bf16.msra.mxu0 0
        %1246 = vmatprep.subr.bf16.mxu0 0
        %1247 = vmatpush1.bf16.msra.mxu0 0
        %1248 = vmatprep.subr.bf16.mxu0 0
        %1249 = vmatpush1.bf16.msra.mxu0 0
        %1250 = vmatprep.subr.bf16.mxu0 0
        %1251 = vmatpush1.bf16.msra.mxu0 %v995
        %1252 = vmatprep.subr.bf16.mxu0 0
        %1253 = vmatpush1.bf16.msra.mxu0 %v994
        %1254 = vmatprep.subr.bf16.mxu0 0
        %1255 = vmatpush2.bf16.msra.mxu0 0
        %1256 = vmatprep.subr.bf16.mxu0 0
        %1257 = vmatpush2.bf16.msra.mxu0 0
        %1258 = vmatprep.subr.bf16.mxu0 0
        %1259 = vmatpush2.bf16.msra.mxu0 0
        %1260 = vmatprep.subr.bf16.mxu0 0
        %1261 = vmatpush2.bf16.msra.mxu0 0
        %1262 = vmatprep.subr.bf16.mxu0 0
        %1263 = vmatpush2.bf16.msra.mxu0 0
        %1264 = vmatprep.subr.bf16.mxu0 0
        %1265 = vmatpush2.bf16.msra.mxu0 0
        %1266 = vmatprep.subr.bf16.mxu0 0
        %1267 = vmatpush2.bf16.msra.mxu0 0
        %1268 = vmatprep.subr.bf16.mxu0 0
        %1269 = vmatpush2.bf16.msra.mxu0 0
        %1270 = vmatprep.mubr.bf16.mxu0 0
        %1271 = vmatmul.mubr.bf16.gmra.mxu0 %v1236
        %v1272 = vpop.f32.mrf.mxu0
        %v1273 = vadd.f32 %v1233, %v1272
        %v1274 = vpop.f32.mrf.mxu0
        %v1275 = vpop.f32.mrf.mxu0
        %v1276 = vpop.f32.mrf.mxu0
        %1277 = vdwg.mxu0
        %v1278 = vmul.f32 %v1273, 0.35355338
        %v1279 = vpack.c.bf16 %v1226, %v1226
        %v1281 = vlaneseq
        %v1282 = vshrl.u32 %v1281, 7
        %v1283 = vsub.s32 0, %v1282
        %v1284 = vrot.slane %v1051, %v1283
        %v1287 = vsel %vm1076, %v1279, 0
        %1289 = vmatprep.subr.bf16.mxu0 0
        %1290 = vmatpush1.bf16.msra.mxu0 0
        %1291 = vmatprep.subr.bf16.mxu0 0
        %1292 = vmatpush1.bf16.msra.mxu0 0
        %1293 = vmatprep.subr.bf16.mxu0 0
        %1294 = vmatpush1.bf16.msra.mxu0 0
        %1295 = vmatprep.subr.bf16.mxu0 0
        %1296 = vmatpush1.bf16.msra.mxu0 0
        %1297 = vmatprep.subr.bf16.mxu0 0
        %1298 = vmatpush1.bf16.msra.mxu0 0
        %1299 = vmatprep.subr.bf16.mxu0 0
        %1300 = vmatpush1.bf16.msra.mxu0 0
        %1301 = vmatprep.subr.bf16.mxu0 0
        %1302 = vmatpush1.bf16.msra.mxu0 %v1001
        %1303 = vmatprep.subr.bf16.mxu0 0
        %1304 = vmatpush1.bf16.msra.mxu0 %v1000
        %1305 = vmatprep.subr.bf16.mxu0 0
        %1306 = vmatpush2.bf16.msra.mxu0 0
        %1307 = vmatprep.subr.bf16.mxu0 0
        %1308 = vmatpush2.bf16.msra.mxu0 0
        %1309 = vmatprep.subr.bf16.mxu0 0
        %1310 = vmatpush2.bf16.msra.mxu0 0
        %1311 = vmatprep.subr.bf16.mxu0 0
        %1312 = vmatpush2.bf16.msra.mxu0 0
        %1313 = vmatprep.subr.bf16.mxu0 0
        %1314 = vmatpush2.bf16.msra.mxu0 0
        %1315 = vmatprep.subr.bf16.mxu0 0
        %1316 = vmatpush2.bf16.msra.mxu0 0
        %1317 = vmatprep.subr.bf16.mxu0 0
        %1318 = vmatpush2.bf16.msra.mxu0 0
        %1319 = vmatprep.subr.bf16.mxu0 0
        %1320 = vmatpush2.bf16.msra.mxu0 0
        %1321 = vmatprep.mubr.bf16.mxu0 0
        %1322 = vmatmul.mubr.bf16.gmra.mxu0 %v1287
        %v1323 = vpop.f32.mrf.mxu0
        %v1324 = vadd.f32 %v1284, %v1323
        %v1325 = vpop.f32.mrf.mxu0
        %v1326 = vpop.f32.mrf.mxu0
        %v1327 = vpop.f32.mrf.mxu0
        %1328 = vdwg.mxu0
        %1330 = vrot.lane.b32.xlu0 %v1278, 120
        %v1331 = vpop.permute.xlu0 %1330
        %1333 = vrot.lane.b32.xlu0 %v1278, 112
        %v1334 = vpop.permute.xlu0 %1333
        %1336 = vrot.lane.b32.xlu0 %v1278, 104
        %v1337 = vpop.permute.xlu0 %1336
        %v1339 = vpack.c.bf16 %v1278, %v1278
        %v1340 = vpack.c.bf16 %v1331, %v1331
        %v1341 = vpack.c.bf16 %v1334, %v1334
        %v1342 = vpack.c.bf16 %v1337, %v1337
        %1344 = vrot.lane.b32.xlu0 %v1273, 120
        %v1345 = vpop.permute.xlu0 %1344
        %1347 = vrot.lane.b32.xlu0 %v1273, 112
        %v1348 = vpop.permute.xlu0 %1347
        %1350 = vrot.lane.b32.xlu0 %v1273, 104
        %v1351 = vpop.permute.xlu0 %1350
        %v1353 = vpack.c.bf16 %v1273, %v1273
        %v1354 = vpack.c.bf16 %v1345, %v1345
        %v1355 = vpack.c.bf16 %v1348, %v1348
        %v1356 = vpack.c.bf16 %v1351, %v1351
        %1358 = vrot.lane.b32.xlu0 %v1324, 120
        %v1359 = vpop.permute.xlu0 %1358
        %1361 = vrot.lane.b32.xlu0 %v1324, 112
        %v1362 = vpop.permute.xlu0 %1361
        %1364 = vrot.lane.b32.xlu0 %v1324, 104
        %v1365 = vpop.permute.xlu0 %1364
        %v1367 = vpack.c.bf16 %v1324, %v1324
        %v1368 = vpack.c.bf16 %v1359, %v1359
        %v1369 = vpack.c.bf16 %v1362, %v1362
        %v1370 = vpack.c.bf16 %v1365, %v1365
        %1372 = vrot.lane.b32.xlu0 %v1353, 96
        %v1373 = vpop.permute.xlu0 %1372
        %vm1374 = vcmask 64512
        %v1376 = vsel %vm1374, %v1339, 0
        %v1379 = vsel %vm1374, %v1373, 0
        %1381 = vmatprep.subr.bf16.mxu0 0
        %1382 = vmatpush1.bf16.xpose.msra.mxu0 0
        %1383 = vmatprep.subr.bf16.mxu0 0
        %1384 = vmatpush1.bf16.xpose.msra.mxu0 0
        %1385 = vmatprep.subr.bf16.mxu0 0
        %1386 = vmatpush1.bf16.xpose.msra.mxu0 0
        %1387 = vmatprep.subr.bf16.mxu0 0
        %1388 = vmatpush1.bf16.xpose.msra.mxu0 0
        %1389 = vmatprep.subr.bf16.mxu0 0
        %1390 = vmatpush1.bf16.xpose.msra.mxu0 0
        %1391 = vmatprep.subr.bf16.mxu0 0
        %1392 = vmatpush1.bf16.xpose.msra.mxu0 0
        %1393 = vmatprep.subr.bf16.mxu0 0
        %1394 = vmatpush1.bf16.xpose.msra.mxu0 0
        %1395 = vmatprep.subr.bf16.mxu0 0
        %1396 = vmatpush1.bf16.xpose.msra.mxu0 %v1379
        %1397 = vmatprep.subr.bf16.mxu0 0
        %1398 = vmatpush2.bf16.xpose.msra.mxu0 0
        %1399 = vmatprep.subr.bf16.mxu0 0
        %1400 = vmatpush2.bf16.xpose.msra.mxu0 0
        %1401 = vmatprep.subr.bf16.mxu0 0
        %1402 = vmatpush2.bf16.xpose.msra.mxu0 0
        %1403 = vmatprep.subr.bf16.mxu0 0
        %1404 = vmatpush2.bf16.xpose.msra.mxu0 0
        %1405 = vmatprep.subr.bf16.mxu0 0
        %1406 = vmatpush2.bf16.xpose.msra.mxu0 0
        %1407 = vmatprep.subr.bf16.mxu0 0
        %1408 = vmatpush2.bf16.xpose.msra.mxu0 0
        %1409 = vmatprep.subr.bf16.mxu0 0
        %1410 = vmatpush2.bf16.xpose.msra.mxu0 0
        %1411 = vmatprep.subr.bf16.mxu0 0
        %1412 = vmatpush2.bf16.xpose.msra.mxu0 0
        %1413 = vmatprep.mubr.bf16.mxu0 0
        %1414 = vmatmul.mubr.bf16.gmra.mxu0 %v1376
        %v1415 = vpop.f32.mrf.mxu0
        %v1416 = vadd.f32 0.0, %v1415
        %v1417 = vpop.f32.mrf.mxu0
        %v1418 = vpop.f32.mrf.mxu0
        %v1419 = vpop.f32.mrf.mxu0
        %1420 = vdwg.mxu0
        %1422 = vrot.lane.b32.xlu0 %v1354, 96
        %v1423 = vpop.permute.xlu0 %1422
        %v1425 = vsel %vm1374, %v1340, 0
        %v1428 = vsel %vm1374, %v1423, 0
        %1430 = vmatprep.subr.bf16.mxu0 0
        %1431 = vmatpush1.bf16.xpose.msra.mxu0 0
        %1432 = vmatprep.subr.bf16.mxu0 0
        %1433 = vmatpush1.bf16.xpose.msra.mxu0 0
        %1434 = vmatprep.subr.bf16.mxu0 0
        %1435 = vmatpush1.bf16.xpose.msra.mxu0 0
        %1436 = vmatprep.subr.bf16.mxu0 0
        %1437 = vmatpush1.bf16.xpose.msra.mxu0 0
        %1438 = vmatprep.subr.bf16.mxu0 0
        %1439 = vmatpush1.bf16.xpose.msra.mxu0 0
        %1440 = vmatprep.subr.bf16.mxu0 0
        %1441 = vmatpush1.bf16.xpose.msra.mxu0 0
        %1442 = vmatprep.subr.bf16.mxu0 0
        %1443 = vmatpush1.bf16.xpose.msra.mxu0 0
        %1444 = vmatprep.subr.bf16.mxu0 0
        %1445 = vmatpush1.bf16.xpose.msra.mxu0 %v1428
        %1446 = vmatprep.subr.bf16.mxu0 0
        %1447 = vmatpush2.bf16.xpose.msra.mxu0 0
        %1448 = vmatprep.subr.bf16.mxu0 0
        %1449 = vmatpush2.bf16.xpose.msra.mxu0 0
        %1450 = vmatprep.subr.bf16.mxu0 0
        %1451 = vmatpush2.bf16.xpose.msra.mxu0 0
        %1452 = vmatprep.subr.bf16.mxu0 0
        %1453 = vmatpush2.bf16.xpose.msra.mxu0 0
        %1454 = vmatprep.subr.bf16.mxu0 0
        %1455 = vmatpush2.bf16.xpose.msra.mxu0 0
        %1456 = vmatprep.subr.bf16.mxu0 0
        %1457 = vmatpush2.bf16.xpose.msra.mxu0 0
        %1458 = vmatprep.subr.bf16.mxu0 0
        %1459 = vmatpush2.bf16.xpose.msra.mxu0 0
        %1460 = vmatprep.subr.bf16.mxu0 0
        %1461 = vmatpush2.bf16.xpose.msra.mxu0 0
        %1462 = vmatprep.mubr.bf16.mxu0 0
        %1463 = vmatmul.mubr.bf16.gmra.mxu0 %v1425
        %v1464 = vpop.f32.mrf.mxu0
        %v1465 = vadd.f32 0.0, %v1464
        %v1466 = vpop.f32.mrf.mxu0
        %v1467 = vpop.f32.mrf.mxu0
        %v1468 = vpop.f32.mrf.mxu0
        %1469 = vdwg.mxu0
        %1471 = vrot.lane.b32.xlu0 %v1355, 96
        %v1472 = vpop.permute.xlu0 %1471
        %v1474 = vsel %vm1374, %v1341, 0
        %v1477 = vsel %vm1374, %v1472, 0
        %1479 = vmatprep.subr.bf16.mxu0 0
        %1480 = vmatpush1.bf16.xpose.msra.mxu0 0
        %1481 = vmatprep.subr.bf16.mxu0 0
        %1482 = vmatpush1.bf16.xpose.msra.mxu0 0
        %1483 = vmatprep.subr.bf16.mxu0 0
        %1484 = vmatpush1.bf16.xpose.msra.mxu0 0
        %1485 = vmatprep.subr.bf16.mxu0 0
        %1486 = vmatpush1.bf16.xpose.msra.mxu0 0
        %1487 = vmatprep.subr.bf16.mxu0 0
        %1488 = vmatpush1.bf16.xpose.msra.mxu0 0
        %1489 = vmatprep.subr.bf16.mxu0 0
        %1490 = vmatpush1.bf16.xpose.msra.mxu0 0
        %1491 = vmatprep.subr.bf16.mxu0 0
        %1492 = vmatpush1.bf16.xpose.msra.mxu0 0
        %1493 = vmatprep.subr.bf16.mxu0 0
        %1494 = vmatpush1.bf16.xpose.msra.mxu0 %v1477
        %1495 = vmatprep.subr.bf16.mxu0 0
        %1496 = vmatpush2.bf16.xpose.msra.mxu0 0
        %1497 = vmatprep.subr.bf16.mxu0 0
        %1498 = vmatpush2.bf16.xpose.msra.mxu0 0
        %1499 = vmatprep.subr.bf16.mxu0 0
        %1500 = vmatpush2.bf16.xpose.msra.mxu0 0
        %1501 = vmatprep.subr.bf16.mxu0 0
        %1502 = vmatpush2.bf16.xpose.msra.mxu0 0
        %1503 = vmatprep.subr.bf16.mxu0 0
        %1504 = vmatpush2.bf16.xpose.msra.mxu0 0
        %1505 = vmatprep.subr.bf16.mxu0 0
        %1506 = vmatpush2.bf16.xpose.msra.mxu0 0
        %1507 = vmatprep.subr.bf16.mxu0 0
        %1508 = vmatpush2.bf16.xpose.msra.mxu0 0
        %1509 = vmatprep.subr.bf16.mxu0 0
        %1510 = vmatpush2.bf16.xpose.msra.mxu0 0
        %1511 = vmatprep.mubr.bf16.mxu0 0
        %1512 = vmatmul.mubr.bf16.gmra.mxu0 %v1474
        %v1513 = vpop.f32.mrf.mxu0
        %v1514 = vadd.f32 0.0, %v1513
        %v1515 = vpop.f32.mrf.mxu0
        %v1516 = vpop.f32.mrf.mxu0
        %v1517 = vpop.f32.mrf.mxu0
        %1518 = vdwg.mxu0
        %1520 = vrot.lane.b32.xlu0 %v1356, 96
        %v1521 = vpop.permute.xlu0 %1520
        %v1523 = vsel %vm1374, %v1342, 0
        %v1526 = vsel %vm1374, %v1521, 0
        %1528 = vmatprep.subr.bf16.mxu0 0
        %1529 = vmatpush1.bf16.xpose.msra.mxu0 0
        %1530 = vmatprep.subr.bf16.mxu0 0
        %1531 = vmatpush1.bf16.xpose.msra.mxu0 0
        %1532 = vmatprep.subr.bf16.mxu0 0
        %1533 = vmatpush1.bf16.xpose.msra.mxu0 0
        %1534 = vmatprep.subr.bf16.mxu0 0
        %1535 = vmatpush1.bf16.xpose.msra.mxu0 0
        %1536 = vmatprep.subr.bf16.mxu0 0
        %1537 = vmatpush1.bf16.xpose.msra.mxu0 0
        %1538 = vmatprep.subr.bf16.mxu0 0
        %1539 = vmatpush1.bf16.xpose.msra.mxu0 0
        %1540 = vmatprep.subr.bf16.mxu0 0
        %1541 = vmatpush1.bf16.xpose.msra.mxu0 0
        %1542 = vmatprep.subr.bf16.mxu0 0
        %1543 = vmatpush1.bf16.xpose.msra.mxu0 %v1526
        %1544 = vmatprep.subr.bf16.mxu0 0
        %1545 = vmatpush2.bf16.xpose.msra.mxu0 0
        %1546 = vmatprep.subr.bf16.mxu0 0
        %1547 = vmatpush2.bf16.xpose.msra.mxu0 0
        %1548 = vmatprep.subr.bf16.mxu0 0
        %1549 = vmatpush2.bf16.xpose.msra.mxu0 0
        %1550 = vmatprep.subr.bf16.mxu0 0
        %1551 = vmatpush2.bf16.xpose.msra.mxu0 0
        %1552 = vmatprep.subr.bf16.mxu0 0
        %1553 = vmatpush2.bf16.xpose.msra.mxu0 0
        %1554 = vmatprep.subr.bf16.mxu0 0
        %1555 = vmatpush2.bf16.xpose.msra.mxu0 0
        %1556 = vmatprep.subr.bf16.mxu0 0
        %1557 = vmatpush2.bf16.xpose.msra.mxu0 0
        %1558 = vmatprep.subr.bf16.mxu0 0
        %1559 = vmatpush2.bf16.xpose.msra.mxu0 0
        %1560 = vmatprep.mubr.bf16.mxu0 0
        %1561 = vmatmul.mubr.bf16.gmra.mxu0 %v1523
        %v1562 = vpop.f32.mrf.mxu0
        %v1563 = vadd.f32 0.0, %v1562
        %v1564 = vpop.f32.mrf.mxu0
        %v1565 = vpop.f32.mrf.mxu0
        %v1566 = vpop.f32.mrf.mxu0
        %1567 = vdwg.mxu0
        %v1568 = vsel %vm1374, %v1416, -inf
        %1569 = vmax.xlane.f32.xlu0 %v1568
        %v1570 = vpop.xlane.xlu0 %1569
        %v1571 = vsel %vm1374, %v1465, -inf
        %1572 = vmax.xlane.f32.xlu0 %v1571
        %v1573 = vpop.xlane.xlu0 %1572
        %v1574 = vsel %vm1374, %v1514, -inf
        %1575 = vmax.xlane.f32.xlu0 %v1574
        %v1576 = vpop.xlane.xlu0 %1575
        %v1577 = vsel %vm1374, %v1563, -inf
        %1578 = vmax.xlane.f32.xlu0 %v1577
        %v1579 = vpop.xlane.xlu0 %1578
        %v1580 = vsub.f32 %v1416, %v1570
        %v1581 = vsub.f32 %v1465, %v1573
        %v1582 = vsub.f32 %v1514, %v1576
        %v1583 = vsub.f32 %v1563, %v1579
        %v1584 = vmul.f32 %v1580, 1.442695
        %v1585 = vpow.pop %v1584
        %v1586 = vmul.f32 %v1581, 1.442695
        %v1587 = vpow.pop %v1586
        %v1588 = vmul.f32 %v1582, 1.442695
        %v1589 = vpow.pop %v1588
        %v1590 = vmul.f32 %v1583, 1.442695
        %v1591 = vpow.pop %v1590
        %v1592 = vsel %vm1374, %v1585, 0.0
        %1593 = vadd.xlane.f32.xlu0 %v1592
        %v1594 = vpop.xlane.xlu0 %1593
        %v1595 = vsel %vm1374, %v1587, 0.0
        %1596 = vadd.xlane.f32.xlu0 %v1595
        %v1597 = vpop.xlane.xlu0 %1596
        %v1598 = vsel %vm1374, %v1589, 0.0
        %1599 = vadd.xlane.f32.xlu0 %v1598
        %v1600 = vpop.xlane.xlu0 %1599
        %v1601 = vsel %vm1374, %v1591, 0.0
        %1602 = vadd.xlane.f32.xlu0 %v1601
        %v1603 = vpop.xlane.xlu0 %1602
        %v1604 = vrcp.pop %v1594
        %v1605 = vmul.f32 1.0, %v1604
        %v1606 = vrcp.pop %v1597
        %v1607 = vmul.f32 1.0, %v1606
        %v1608 = vrcp.pop %v1600
        %v1609 = vmul.f32 1.0, %v1608
        %v1610 = vrcp.pop %v1603
        %v1611 = vmul.f32 1.0, %v1610
        %v1612 = vmul.f32 %v1585, %v1605
        %v1613 = vmul.f32 %v1587, %v1607
        %v1614 = vmul.f32 %v1589, %v1609
        %v1615 = vmul.f32 %v1591, %v1611
        %v1616 = vpack.c.bf16 %v1612, %v1612
        %v1617 = vpack.c.bf16 %v1613, %v1613
        %v1618 = vpack.c.bf16 %v1614, %v1614
        %v1619 = vpack.c.bf16 %v1615, %v1615
        %v1621 = vsel %vm1374, %v1616, 0
        %vm1623 = vcmask 1043456
        %v1625 = vsel %vm1623, %v1367, 0
        %1627 = vmatprep.subr.bf16.mxu0 0
        %1628 = vmatpush1.bf16.msra.mxu0 0
        %1629 = vmatprep.subr.bf16.mxu0 0
        %1630 = vmatpush1.bf16.msra.mxu0 0
        %1631 = vmatprep.subr.bf16.mxu0 0
        %1632 = vmatpush1.bf16.msra.mxu0 0
        %1633 = vmatprep.subr.bf16.mxu0 0
        %1634 = vmatpush1.bf16.msra.mxu0 0
        %1635 = vmatprep.subr.bf16.mxu0 0
        %1636 = vmatpush1.bf16.msra.mxu0 0
        %1637 = vmatprep.subr.bf16.mxu0 0
        %1638 = vmatpush1.bf16.msra.mxu0 0
        %1639 = vmatprep.subr.bf16.mxu0 0
        %1640 = vmatpush1.bf16.msra.mxu0 0
        %1641 = vmatprep.subr.bf16.mxu0 0
        %1642 = vmatpush1.bf16.msra.mxu0 %v1625
        %1643 = vmatprep.subr.bf16.mxu0 0
        %1644 = vmatpush2.bf16.msra.mxu0 0
        %1645 = vmatprep.subr.bf16.mxu0 0
        %1646 = vmatpush2.bf16.msra.mxu0 0
        %1647 = vmatprep.subr.bf16.mxu0 0
        %1648 = vmatpush2.bf16.msra.mxu0 0
        %1649 = vmatprep.subr.bf16.mxu0 0
        %1650 = vmatpush2.bf16.msra.mxu0 0
        %1651 = vmatprep.subr.bf16.mxu0 0
        %1652 = vmatpush2.bf16.msra.mxu0 0
        %1653 = vmatprep.subr.bf16.mxu0 0
        %1654 = vmatpush2.bf16.msra.mxu0 0
        %1655 = vmatprep.subr.bf16.mxu0 0
        %1656 = vmatpush2.bf16.msra.mxu0 0
        %1657 = vmatprep.subr.bf16.mxu0 0
        %1658 = vmatpush2.bf16.msra.mxu0 0
        %1659 = vmatprep.mubr.bf16.mxu0 0
        %1660 = vmatmul.mubr.bf16.gmra.mxu0 %v1621
        %v1661 = vpop.f32.mrf.mxu0
        %v1662 = vadd.f32 0.0, %v1661
        %v1663 = vpop.f32.mrf.mxu0
        %v1664 = vpop.f32.mrf.mxu0
        %v1665 = vpop.f32.mrf.mxu0
        %1666 = vdwg.mxu0
        %v1668 = vsel %vm1374, %v1617, 0
        %v1671 = vsel %vm1623, %v1368, 0
        %1673 = vmatprep.subr.bf16.mxu0 0
        %1674 = vmatpush1.bf16.msra.mxu0 0
        %1675 = vmatprep.subr.bf16.mxu0 0
        %1676 = vmatpush1.bf16.msra.mxu0 0
        %1677 = vmatprep.subr.bf16.mxu0 0
        %1678 = vmatpush1.bf16.msra.mxu0 0
        %1679 = vmatprep.subr.bf16.mxu0 0
        %1680 = vmatpush1.bf16.msra.mxu0 0
        %1681 = vmatprep.subr.bf16.mxu0 0
        %1682 = vmatpush1.bf16.msra.mxu0 0
        %1683 = vmatprep.subr.bf16.mxu0 0
        %1684 = vmatpush1.bf16.msra.mxu0 0
        %1685 = vmatprep.subr.bf16.mxu0 0
        %1686 = vmatpush1.bf16.msra.mxu0 0
        %1687 = vmatprep.subr.bf16.mxu0 0
        %1688 = vmatpush1.bf16.msra.mxu0 %v1671
        %1689 = vmatprep.subr.bf16.mxu0 0
        %1690 = vmatpush2.bf16.msra.mxu0 0
        %1691 = vmatprep.subr.bf16.mxu0 0
        %1692 = vmatpush2.bf16.msra.mxu0 0
        %1693 = vmatprep.subr.bf16.mxu0 0
        %1694 = vmatpush2.bf16.msra.mxu0 0
        %1695 = vmatprep.subr.bf16.mxu0 0
        %1696 = vmatpush2.bf16.msra.mxu0 0
        %1697 = vmatprep.subr.bf16.mxu0 0
        %1698 = vmatpush2.bf16.msra.mxu0 0
        %1699 = vmatprep.subr.bf16.mxu0 0
        %1700 = vmatpush2.bf16.msra.mxu0 0
        %1701 = vmatprep.subr.bf16.mxu0 0
        %1702 = vmatpush2.bf16.msra.mxu0 0
        %1703 = vmatprep.subr.bf16.mxu0 0
        %1704 = vmatpush2.bf16.msra.mxu0 0
        %1705 = vmatprep.mubr.bf16.mxu0 0
        %1706 = vmatmul.mubr.bf16.gmra.mxu0 %v1668
        %v1707 = vpop.f32.mrf.mxu0
        %v1708 = vadd.f32 0.0, %v1707
        %v1709 = vpop.f32.mrf.mxu0
        %v1710 = vpop.f32.mrf.mxu0
        %v1711 = vpop.f32.mrf.mxu0
        %1712 = vdwg.mxu0
        %v1714 = vsel %vm1374, %v1618, 0
        %v1717 = vsel %vm1623, %v1369, 0
        %1719 = vmatprep.subr.bf16.mxu0 0
        %1720 = vmatpush1.bf16.msra.mxu0 0
        %1721 = vmatprep.subr.bf16.mxu0 0
        %1722 = vmatpush1.bf16.msra.mxu0 0
        %1723 = vmatprep.subr.bf16.mxu0 0
        %1724 = vmatpush1.bf16.msra.mxu0 0
        %1725 = vmatprep.subr.bf16.mxu0 0
        %1726 = vmatpush1.bf16.msra.mxu0 0
        %1727 = vmatprep.subr.bf16.mxu0 0
        %1728 = vmatpush1.bf16.msra.mxu0 0
        %1729 = vmatprep.subr.bf16.mxu0 0
        %1730 = vmatpush1.bf16.msra.mxu0 0
        %1731 = vmatprep.subr.bf16.mxu0 0
        %1732 = vmatpush1.bf16.msra.mxu0 0
        %1733 = vmatprep.subr.bf16.mxu0 0
        %1734 = vmatpush1.bf16.msra.mxu0 %v1717
        %1735 = vmatprep.subr.bf16.mxu0 0
        %1736 = vmatpush2.bf16.msra.mxu0 0
        %1737 = vmatprep.subr.bf16.mxu0 0
        %1738 = vmatpush2.bf16.msra.mxu0 0
        %1739 = vmatprep.subr.bf16.mxu0 0
        %1740 = vmatpush2.bf16.msra.mxu0 0
        %1741 = vmatprep.subr.bf16.mxu0 0
        %1742 = vmatpush2.bf16.msra.mxu0 0
        %1743 = vmatprep.subr.bf16.mxu0 0
        %1744 = vmatpush2.bf16.msra.mxu0 0
        %1745 = vmatprep.subr.bf16.mxu0 0
        %1746 = vmatpush2.bf16.msra.mxu0 0
        %1747 = vmatprep.subr.bf16.mxu0 0
        %1748 = vmatpush2.bf16.msra.mxu0 0
        %1749 = vmatprep.subr.bf16.mxu0 0
        %1750 = vmatpush2.bf16.msra.mxu0 0
        %1751 = vmatprep.mubr.bf16.mxu0 0
        %1752 = vmatmul.mubr.bf16.gmra.mxu0 %v1714
        %v1753 = vpop.f32.mrf.mxu0
        %v1754 = vadd.f32 0.0, %v1753
        %v1755 = vpop.f32.mrf.mxu0
        %v1756 = vpop.f32.mrf.mxu0
        %v1757 = vpop.f32.mrf.mxu0
        %1758 = vdwg.mxu0
        %v1760 = vsel %vm1374, %v1619, 0
        %v1763 = vsel %vm1623, %v1370, 0
        %1765 = vmatprep.subr.bf16.mxu0 0
        %1766 = vmatpush1.bf16.msra.mxu0 0
        %1767 = vmatprep.subr.bf16.mxu0 0
        %1768 = vmatpush1.bf16.msra.mxu0 0
        %1769 = vmatprep.subr.bf16.mxu0 0
        %1770 = vmatpush1.bf16.msra.mxu0 0
        %1771 = vmatprep.subr.bf16.mxu0 0
        %1772 = vmatpush1.bf16.msra.mxu0 0
        %1773 = vmatprep.subr.bf16.mxu0 0
        %1774 = vmatpush1.bf16.msra.mxu0 0
        %1775 = vmatprep.subr.bf16.mxu0 0
        %1776 = vmatpush1.bf16.msra.mxu0 0
        %1777 = vmatprep.subr.bf16.mxu0 0
        %1778 = vmatpush1.bf16.msra.mxu0 0
        %1779 = vmatprep.subr.bf16.mxu0 0
        %1780 = vmatpush1.bf16.msra.mxu0 %v1763
        %1781 = vmatprep.subr.bf16.mxu0 0
        %1782 = vmatpush2.bf16.msra.mxu0 0
        %1783 = vmatprep.subr.bf16.mxu0 0
        %1784 = vmatpush2.bf16.msra.mxu0 0
        %1785 = vmatprep.subr.bf16.mxu0 0
        %1786 = vmatpush2.bf16.msra.mxu0 0
        %1787 = vmatprep.subr.bf16.mxu0 0
        %1788 = vmatpush2.bf16.msra.mxu0 0
        %1789 = vmatprep.subr.bf16.mxu0 0
        %1790 = vmatpush2.bf16.msra.mxu0 0
        %1791 = vmatprep.subr.bf16.mxu0 0
        %1792 = vmatpush2.bf16.msra.mxu0 0
        %1793 = vmatprep.subr.bf16.mxu0 0
        %1794 = vmatpush2.bf16.msra.mxu0 0
        %1795 = vmatprep.subr.bf16.mxu0 0
        %1796 = vmatpush2.bf16.msra.mxu0 0
        %1797 = vmatprep.mubr.bf16.mxu0 0
        %1798 = vmatmul.mubr.bf16.gmra.mxu0 %v1760
        %v1799 = vpop.f32.mrf.mxu0
        %v1800 = vadd.f32 0.0, %v1799
        %v1801 = vpop.f32.mrf.mxu0
        %v1802 = vpop.f32.mrf.mxu0
        %v1803 = vpop.f32.mrf.mxu0
        %1804 = vdwg.mxu0
        %1806 = vrot.lane.b32.xlu0 %v1708, 8
        %v1807 = vpop.permute.xlu0 %1806
        %1810 = vrot.lane.b32.xlu0 %v1754, 16
        %v1811 = vpop.permute.xlu0 %1810
        %1814 = vrot.lane.b32.xlu0 %v1800, 24
        %v1815 = vpop.permute.xlu0 %1814
        %v1817 = vsel %vm1374, %v1662, %v1807
        %vm1818 = vcmask 130048
        %v1819 = vsel %vm1818, %v1817, %v1811
        %vm1820 = vcmask 195584
        %v1821 = vsel %vm1820, %v1819, %v1815
        %v1822 = vpack.c.bf16 %v1821, %v1821
        %v1824 = vlaneseq
        %v1825 = vshrl.u32 %v1824, 7
        %v1826 = vsub.s32 0, %v1825
        %v1827 = vrot.slane %v1052, %v1826
        %v1830 = vsel %vm1076, %v1822, 0
        %1832 = vmatprep.subr.bf16.mxu0 0
        %1833 = vmatpush1.bf16.msra.mxu0 0
        %1834 = vmatprep.subr.bf16.mxu0 0
        %1835 = vmatpush1.bf16.msra.mxu0 0
        %1836 = vmatprep.subr.bf16.mxu0 0
        %1837 = vmatpush1.bf16.msra.mxu0 0
        %1838 = vmatprep.subr.bf16.mxu0 0
        %1839 = vmatpush1.bf16.msra.mxu0 0
        %1840 = vmatprep.subr.bf16.mxu0 0
        %1841 = vmatpush1.bf16.msra.mxu0 0
        %1842 = vmatprep.subr.bf16.mxu0 0
        %1843 = vmatpush1.bf16.msra.mxu0 0
        %1844 = vmatprep.subr.bf16.mxu0 0
        %1845 = vmatpush1.bf16.msra.mxu0 %v1007
        %1846 = vmatprep.subr.bf16.mxu0 0
        %1847 = vmatpush1.bf16.msra.mxu0 %v1006
        %1848 = vmatprep.subr.bf16.mxu0 0
        %1849 = vmatpush2.bf16.msra.mxu0 0
        %1850 = vmatprep.subr.bf16.mxu0 0
        %1851 = vmatpush2.bf16.msra.mxu0 0
        %1852 = vmatprep.subr.bf16.mxu0 0
        %1853 = vmatpush2.bf16.msra.mxu0 0
        %1854 = vmatprep.subr.bf16.mxu0 0
        %1855 = vmatpush2.bf16.msra.mxu0 0
        %1856 = vmatprep.subr.bf16.mxu0 0
        %1857 = vmatpush2.bf16.msra.mxu0 0
        %1858 = vmatprep.subr.bf16.mxu0 0
        %1859 = vmatpush2.bf16.msra.mxu0 0
        %1860 = vmatprep.subr.bf16.mxu0 0
        %1861 = vmatpush2.bf16.msra.mxu0 0
        %1862 = vmatprep.subr.bf16.mxu0 0
        %1863 = vmatpush2.bf16.msra.mxu0 0
        %1864 = vmatprep.mubr.bf16.mxu0 0
        %1865 = vmatmul.mubr.bf16.gmra.mxu0 %v1830
        %v1866 = vpop.f32.mrf.mxu0
        %v1867 = vadd.f32 %v1827, %v1866
        %v1868 = vpop.f32.mrf.mxu0
        %v1869 = vpop.f32.mrf.mxu0
        %v1870 = vpop.f32.mrf.mxu0
        %1871 = vdwg.mxu0
        %v1872 = vadd.f32 %v1226, %v1867
        %v1873 = vsel %vm1076, %v1872, 0.0
        %1874 = vadd.xlane.f32.xlu0 %v1873
        %v1875 = vpop.xlane.xlu0 %1874
        %v1876 = vrcp.pop 32.0
        %v1877 = vmul.f32 %v1875, %v1876
        %v1878 = vsub.f32 %v1872, %v1877
        %v1879 = vmul.f32 %v1878, %v1878
        %v1880 = vsel %vm1076, %v1879, 0.0
        %1881 = vadd.xlane.f32.xlu0 %v1880
        %v1882 = vpop.xlane.xlu0 %1881
        %v1883 = vmul.f32 %v1882, %v1876
        %v1884 = vadd.f32 %v1883, 1e-05
        %v1885 = vrsqrt.pop %v1884
        %v1886 = vmul.f32 %v1878, %v1885
        %v1888 = vlaneseq
        %v1889 = vshrl.u32 %v1888, 7
        %v1890 = vsub.s32 0, %v1889
        %v1891 = vrot.slane %v1059, %v1890
        %v1893 = vmul.f32 %v1886, %v1891
        %v1895 = vlaneseq
        %v1896 = vshrl.u32 %v1895, 7
        %v1897 = vsub.s32 0, %v1896
        %v1898 = vrot.slane %v1060, %v1897
        %v1900 = vadd.f32 %v1893, %v1898
        %v1901 = vadd.f32 %v1900, %v985
        %v1902 = vpack.c.bf16 %v1901, %v1901
        %v1904 = vlaneseq
        %v1905 = vshrl.u32 %v1904, 7
        %v1906 = vsub.s32 0, %v1905
        %v1907 = vrot.slane %v1053, %v1906
        %v1910 = vsel %vm1076, %v1902, 0
        %1912 = vmatprep.subr.bf16.mxu0 0
        %1913 = vmatpush1.bf16.msra.mxu0 0
        %1914 = vmatprep.subr.bf16.mxu0 0
        %1915 = vmatpush1.bf16.msra.mxu0 0
        %1916 = vmatprep.subr.bf16.mxu0 0
        %1917 = vmatpush1.bf16.msra.mxu0 0
        %1918 = vmatprep.subr.bf16.mxu0 0
        %1919 = vmatpush1.bf16.msra.mxu0 0
        %1920 = vmatprep.subr.bf16.mxu0 0
        %1921 = vmatpush1.bf16.msra.mxu0 0
        %1922 = vmatprep.subr.bf16.mxu0 0
        %1923 = vmatpush1.bf16.msra.mxu0 0
        %1924 = vmatprep.subr.bf16.mxu0 0
        %1925 = vmatpush1.bf16.msra.mxu0 %v1013
        %1926 = vmatprep.subr.bf16.mxu0 0
        %1927 = vmatpush1.bf16.msra.mxu0 %v1012
        %1928 = vmatprep.subr.bf16.mxu0 0
        %1929 = vmatpush2.bf16.msra.mxu0 0
        %1930 = vmatprep.subr.bf16.mxu0 0
        %1931 = vmatpush2.bf16.msra.mxu0 0
        %1932 = vmatprep.subr.bf16.mxu0 0
        %1933 = vmatpush2.bf16.msra.mxu0 0
        %1934 = vmatprep.subr.bf16.mxu0 0
        %1935 = vmatpush2.bf16.msra.mxu0 0
        %1936 = vmatprep.subr.bf16.mxu0 0
        %1937 = vmatpush2.bf16.msra.mxu0 0
        %1938 = vmatprep.subr.bf16.mxu0 0
        %1939 = vmatpush2.bf16.msra.mxu0 0
        %1940 = vmatprep.subr.bf16.mxu0 0
        %1941 = vmatpush2.bf16.msra.mxu0 0
        %1942 = vmatprep.subr.bf16.mxu0 0
        %1943 = vmatpush2.bf16.msra.mxu0 0
        %1944 = vmatprep.mubr.bf16.mxu0 0
        %1945 = vmatmul.mubr.bf16.gmra.mxu0 %v1910
        %v1946 = vpop.f32.mrf.mxu0
        %v1947 = vadd.f32 %v1907, %v1946
        %v1948 = vpop.f32.mrf.mxu0
        %v1949 = vpop.f32.mrf.mxu0
        %v1950 = vpop.f32.mrf.mxu0
        %1951 = vdwg.mxu0
        %v1952 = vmul.f32 %v1947, 0.35355338
        %1954 = vrot.lane.b32.xlu0 %v1952, 120
        %v1955 = vpop.permute.xlu0 %1954
        %1957 = vrot.lane.b32.xlu0 %v1952, 112
        %v1958 = vpop.permute.xlu0 %1957
        %1960 = vrot.lane.b32.xlu0 %v1952, 104
        %v1961 = vpop.permute.xlu0 %1960
        %v1963 = vpack.c.bf16 %v1952, %v1952
        %v1964 = vpack.c.bf16 %v1955, %v1955
        %v1965 = vpack.c.bf16 %v1958, %v1958
        %v1966 = vpack.c.bf16 %v1961, %v1961
        %v1968 = vsel %vm1374, %v1963, 0
        %v1971 = vsel %vm1374, %v1141, 0
        %1973 = vmatprep.subr.bf16.mxu0 0
        %1974 = vmatpush1.bf16.xpose.msra.mxu0 0
        %1975 = vmatprep.subr.bf16.mxu0 0
        %1976 = vmatpush1.bf16.xpose.msra.mxu0 0
        %1977 = vmatprep.subr.bf16.mxu0 0
        %1978 = vmatpush1.bf16.xpose.msra.mxu0 0
        %1979 = vmatprep.subr.bf16.mxu0 0
        %1980 = vmatpush1.bf16.xpose.msra.mxu0 0
        %1981 = vmatprep.subr.bf16.mxu0 0
        %1982 = vmatpush1.bf16.xpose.msra.mxu0 0
        %1983 = vmatprep.subr.bf16.mxu0 0
        %1984 = vmatpush1.bf16.xpose.msra.mxu0 0
        %1985 = vmatprep.subr.bf16.mxu0 0
        %1986 = vmatpush1.bf16.xpose.msra.mxu0 0
        %1987 = vmatprep.subr.bf16.mxu0 0
        %1988 = vmatpush1.bf16.xpose.msra.mxu0 %v1971
        %1989 = vmatprep.subr.bf16.mxu0 0
        %1990 = vmatpush2.bf16.xpose.msra.mxu0 0
        %1991 = vmatprep.subr.bf16.mxu0 0
        %1992 = vmatpush2.bf16.xpose.msra.mxu0 0
        %1993 = vmatprep.subr.bf16.mxu0 0
        %1994 = vmatpush2.bf16.xpose.msra.mxu0 0
        %1995 = vmatprep.subr.bf16.mxu0 0
        %1996 = vmatpush2.bf16.xpose.msra.mxu0 0
        %1997 = vmatprep.subr.bf16.mxu0 0
        %1998 = vmatpush2.bf16.xpose.msra.mxu0 0
        %1999 = vmatprep.subr.bf16.mxu0 0
        %2000 = vmatpush2.bf16.xpose.msra.mxu0 0
        %2001 = vmatprep.subr.bf16.mxu0 0
        %2002 = vmatpush2.bf16.xpose.msra.mxu0 0
        %2003 = vmatprep.subr.bf16.mxu0 0
        %2004 = vmatpush2.bf16.xpose.msra.mxu0 0
        %2005 = vmatprep.mubr.bf16.mxu0 0
        %2006 = vmatmul.mubr.bf16.gmra.mxu0 %v1968
        %v2007 = vpop.f32.mrf.mxu0
        %v2008 = vadd.f32 0.0, %v2007
        %v2009 = vpop.f32.mrf.mxu0
        %v2010 = vpop.f32.mrf.mxu0
        %v2011 = vpop.f32.mrf.mxu0
        %2012 = vdwg.mxu0
        %v2014 = vsel %vm1374, %v1964, 0
        %v2017 = vsel %vm1374, %v1142, 0
        %2019 = vmatprep.subr.bf16.mxu0 0
        %2020 = vmatpush1.bf16.xpose.msra.mxu0 0
        %2021 = vmatprep.subr.bf16.mxu0 0
        %2022 = vmatpush1.bf16.xpose.msra.mxu0 0
        %2023 = vmatprep.subr.bf16.mxu0 0
        %2024 = vmatpush1.bf16.xpose.msra.mxu0 0
        %2025 = vmatprep.subr.bf16.mxu0 0
        %2026 = vmatpush1.bf16.xpose.msra.mxu0 0
        %2027 = vmatprep.subr.bf16.mxu0 0
        %2028 = vmatpush1.bf16.xpose.msra.mxu0 0
        %2029 = vmatprep.subr.bf16.mxu0 0
        %2030 = vmatpush1.bf16.xpose.msra.mxu0 0
        %2031 = vmatprep.subr.bf16.mxu0 0
        %2032 = vmatpush1.bf16.xpose.msra.mxu0 0
        %2033 = vmatprep.subr.bf16.mxu0 0
        %2034 = vmatpush1.bf16.xpose.msra.mxu0 %v2017
        %2035 = vmatprep.subr.bf16.mxu0 0
        %2036 = vmatpush2.bf16.xpose.msra.mxu0 0
        %2037 = vmatprep.subr.bf16.mxu0 0
        %2038 = vmatpush2.bf16.xpose.msra.mxu0 0
        %2039 = vmatprep.subr.bf16.mxu0 0
        %2040 = vmatpush2.bf16.xpose.msra.mxu0 0
        %2041 = vmatprep.subr.bf16.mxu0 0
        %2042 = vmatpush2.bf16.xpose.msra.mxu0 0
        %2043 = vmatprep.subr.bf16.mxu0 0
        %2044 = vmatpush2.bf16.xpose.msra.mxu0 0
        %2045 = vmatprep.subr.bf16.mxu0 0
        %2046 = vmatpush2.bf16.xpose.msra.mxu0 0
        %2047 = vmatprep.subr.bf16.mxu0 0
        %2048 = vmatpush2.bf16.xpose.msra.mxu0 0
        %2049 = vmatprep.subr.bf16.mxu0 0
        %2050 = vmatpush2.bf16.xpose.msra.mxu0 0
        %2051 = vmatprep.mubr.bf16.mxu0 0
        %2052 = vmatmul.mubr.bf16.gmra.mxu0 %v2014
        %v2053 = vpop.f32.mrf.mxu0
        %v2054 = vadd.f32 0.0, %v2053
        %v2055 = vpop.f32.mrf.mxu0
        %v2056 = vpop.f32.mrf.mxu0
        %v2057 = vpop.f32.mrf.mxu0
        %2058 = vdwg.mxu0
        %v2060 = vsel %vm1374, %v1965, 0
        %v2063 = vsel %vm1374, %v1143, 0
        %2065 = vmatprep.subr.bf16.mxu0 0
        %2066 = vmatpush1.bf16.xpose.msra.mxu0 0
        %2067 = vmatprep.subr.bf16.mxu0 0
        %2068 = vmatpush1.bf16.xpose.msra.mxu0 0
        %2069 = vmatprep.subr.bf16.mxu0 0
        %2070 = vmatpush1.bf16.xpose.msra.mxu0 0
        %2071 = vmatprep.subr.bf16.mxu0 0
        %2072 = vmatpush1.bf16.xpose.msra.mxu0 0
        %2073 = vmatprep.subr.bf16.mxu0 0
        %2074 = vmatpush1.bf16.xpose.msra.mxu0 0
        %2075 = vmatprep.subr.bf16.mxu0 0
        %2076 = vmatpush1.bf16.xpose.msra.mxu0 0
        %2077 = vmatprep.subr.bf16.mxu0 0
        %2078 = vmatpush1.bf16.xpose.msra.mxu0 0
        %2079 = vmatprep.subr.bf16.mxu0 0
        %2080 = vmatpush1.bf16.xpose.msra.mxu0 %v2063
        %2081 = vmatprep.subr.bf16.mxu0 0
        %2082 = vmatpush2.bf16.xpose.msra.mxu0 0
        %2083 = vmatprep.subr.bf16.mxu0 0
        %2084 = vmatpush2.bf16.xpose.msra.mxu0 0
        %2085 = vmatprep.subr.bf16.mxu0 0
        %2086 = vmatpush2.bf16.xpose.msra.mxu0 0
        %2087 = vmatprep.subr.bf16.mxu0 0
        %2088 = vmatpush2.bf16.xpose.msra.mxu0 0
        %2089 = vmatprep.subr.bf16.mxu0 0
        %2090 = vmatpush2.bf16.xpose.msra.mxu0 0
        %2091 = vmatprep.subr.bf16.mxu0 0
        %2092 = vmatpush2.bf16.xpose.msra.mxu0 0
        %2093 = vmatprep.subr.bf16.mxu0 0
        %2094 = vmatpush2.bf16.xpose.msra.mxu0 0
        %2095 = vmatprep.subr.bf16.mxu0 0
        %2096 = vmatpush2.bf16.xpose.msra.mxu0 0
        %2097 = vmatprep.mubr.bf16.mxu0 0
        %2098 = vmatmul.mubr.bf16.gmra.mxu0 %v2060
        %v2099 = vpop.f32.mrf.mxu0
        %v2100 = vadd.f32 0.0, %v2099
        %v2101 = vpop.f32.mrf.mxu0
        %v2102 = vpop.f32.mrf.mxu0
        %v2103 = vpop.f32.mrf.mxu0
        %2104 = vdwg.mxu0
        %v2106 = vsel %vm1374, %v1966, 0
        %v2109 = vsel %vm1374, %v1144, 0
        %2111 = vmatprep.subr.bf16.mxu0 0
        %2112 = vmatpush1.bf16.xpose.msra.mxu0 0
        %2113 = vmatprep.subr.bf16.mxu0 0
        %2114 = vmatpush1.bf16.xpose.msra.mxu0 0
        %2115 = vmatprep.subr.bf16.mxu0 0
        %2116 = vmatpush1.bf16.xpose.msra.mxu0 0
        %2117 = vmatprep.subr.bf16.mxu0 0
        %2118 = vmatpush1.bf16.xpose.msra.mxu0 0
        %2119 = vmatprep.subr.bf16.mxu0 0
        %2120 = vmatpush1.bf16.xpose.msra.mxu0 0
        %2121 = vmatprep.subr.bf16.mxu0 0
        %2122 = vmatpush1.bf16.xpose.msra.mxu0 0
        %2123 = vmatprep.subr.bf16.mxu0 0
        %2124 = vmatpush1.bf16.xpose.msra.mxu0 0
        %2125 = vmatprep.subr.bf16.mxu0 0
        %2126 = vmatpush1.bf16.xpose.msra.mxu0 %v2109
        %2127 = vmatprep.subr.bf16.mxu0 0
        %2128 = vmatpush2.bf16.xpose.msra.mxu0 0
        %2129 = vmatprep.subr.bf16.mxu0 0
        %2130 = vmatpush2.bf16.xpose.msra.mxu0 0
        %2131 = vmatprep.subr.bf16.mxu0 0
        %2132 = vmatpush2.bf16.xpose.msra.mxu0 0
        %2133 = vmatprep.subr.bf16.mxu0 0
        %2134 = vmatpush2.bf16.xpose.msra.mxu0 0
        %2135 = vmatprep.subr.bf16.mxu0 0
        %2136 = vmatpush2.bf16.xpose.msra.mxu0 0
        %2137 = vmatprep.subr.bf16.mxu0 0
        %2138 = vmatpush2.bf16.xpose.msra.mxu0 0
        %2139 = vmatprep.subr.bf16.mxu0 0
        %2140 = vmatpush2.bf16.xpose.msra.mxu0 0
        %2141 = vmatprep.subr.bf16.mxu0 0
        %2142 = vmatpush2.bf16.xpose.msra.mxu0 0
        %2143 = vmatprep.mubr.bf16.mxu0 0
        %2144 = vmatmul.mubr.bf16.gmra.mxu0 %v2106
        %v2145 = vpop.f32.mrf.mxu0
        %v2146 = vadd.f32 0.0, %v2145
        %v2147 = vpop.f32.mrf.mxu0
        %v2148 = vpop.f32.mrf.mxu0
        %v2149 = vpop.f32.mrf.mxu0
        %2150 = vdwg.mxu0
        %v2151 = vsel %vm1818, %v2008, -inf
        %2152 = vmax.xlane.f32.xlu0 %v2151
        %v2153 = vpop.xlane.xlu0 %2152
        %v2154 = vsel %vm1818, %v2054, -inf
        %2155 = vmax.xlane.f32.xlu0 %v2154
        %v2156 = vpop.xlane.xlu0 %2155
        %v2157 = vsel %vm1818, %v2100, -inf
        %2158 = vmax.xlane.f32.xlu0 %v2157
        %v2159 = vpop.xlane.xlu0 %2158
        %v2160 = vsel %vm1818, %v2146, -inf
        %2161 = vmax.xlane.f32.xlu0 %v2160
        %v2162 = vpop.xlane.xlu0 %2161
        %v2163 = vsub.f32 %v2008, %v2153
        %v2164 = vsub.f32 %v2054, %v2156
        %v2165 = vsub.f32 %v2100, %v2159
        %v2166 = vsub.f32 %v2146, %v2162
        %v2167 = vmul.f32 %v2163, 1.442695
        %v2168 = vpow.pop %v2167
        %v2169 = vmul.f32 %v2164, 1.442695
        %v2170 = vpow.pop %v2169
        %v2171 = vmul.f32 %v2165, 1.442695
        %v2172 = vpow.pop %v2171
        %v2173 = vmul.f32 %v2166, 1.442695
        %v2174 = vpow.pop %v2173
        %v2175 = vsel %vm1818, %v2168, 0.0
        %2176 = vadd.xlane.f32.xlu0 %v2175
        %v2177 = vpop.xlane.xlu0 %2176
        %v2178 = vsel %vm1818, %v2170, 0.0
        %2179 = vadd.xlane.f32.xlu0 %v2178
        %v2180 = vpop.xlane.xlu0 %2179
        %v2181 = vsel %vm1818, %v2172, 0.0
        %2182 = vadd.xlane.f32.xlu0 %v2181
        %v2183 = vpop.xlane.xlu0 %2182
        %v2184 = vsel %vm1818, %v2174, 0.0
        %2185 = vadd.xlane.f32.xlu0 %v2184
        %v2186 = vpop.xlane.xlu0 %2185
        %v2187 = vrcp.pop %v2177
        %v2188 = vmul.f32 1.0, %v2187
        %v2189 = vrcp.pop %v2180
        %v2190 = vmul.f32 1.0, %v2189
        %v2191 = vrcp.pop %v2183
        %v2192 = vmul.f32 1.0, %v2191
        %v2193 = vrcp.pop %v2186
        %v2194 = vmul.f32 1.0, %v2193
        %v2195 = vmul.f32 %v2168, %v2188
        %v2196 = vmul.f32 %v2170, %v2190
        %v2197 = vmul.f32 %v2172, %v2192
        %v2198 = vmul.f32 %v2174, %v2194
        %v2199 = vpack.c.bf16 %v2195, %v2195
        %v2200 = vpack.c.bf16 %v2196, %v2196
        %v2201 = vpack.c.bf16 %v2197, %v2197
        %v2202 = vpack.c.bf16 %v2198, %v2198
        %v2204 = vsel %vm1818, %v2199, 0
        %2206 = vmatprep.subr.bf16.mxu0 0
        %2207 = vmatpush1.bf16.msra.mxu0 0
        %2208 = vmatprep.subr.bf16.mxu0 0
        %2209 = vmatpush1.bf16.msra.mxu0 0
        %2210 = vmatprep.subr.bf16.mxu0 0
        %2211 = vmatpush1.bf16.msra.mxu0 0
        %2212 = vmatprep.subr.bf16.mxu0 0
        %2213 = vmatpush1.bf16.msra.mxu0 0
        %2214 = vmatprep.subr.bf16.mxu0 0
        %2215 = vmatpush1.bf16.msra.mxu0 0
        %2216 = vmatprep.subr.bf16.mxu0 0
        %2217 = vmatpush1.bf16.msra.mxu0 0
        %2218 = vmatprep.subr.bf16.mxu0 0
        %2219 = vmatpush1.bf16.msra.mxu0 0
        %2220 = vmatprep.subr.bf16.mxu0 0
        %2221 = vmatpush1.bf16.msra.mxu0 %v1216
        %2222 = vmatprep.subr.bf16.mxu0 0
        %2223 = vmatpush2.bf16.msra.mxu0 0
        %2224 = vmatprep.subr.bf16.mxu0 0
        %2225 = vmatpush2.bf16.msra.mxu0 0
        %2226 = vmatprep.subr.bf16.mxu0 0
        %2227 = vmatpush2.bf16.msra.mxu0 0
        %2228 = vmatprep.subr.bf16.mxu0 0
        %2229 = vmatpush2.bf16.msra.mxu0 0
        %2230 = vmatprep.subr.bf16.mxu0 0
        %2231 = vmatpush2.bf16.msra.mxu0 0
        %2232 = vmatprep.subr.bf16.mxu0 0
        %2233 = vmatpush2.bf16.msra.mxu0 0
        %2234 = vmatprep.subr.bf16.mxu0 0
        %2235 = vmatpush2.bf16.msra.mxu0 0
        %2236 = vmatprep.subr.bf16.mxu0 0
        %2237 = vmatpush2.bf16.msra.mxu0 0
        %2238 = vmatprep.mubr.bf16.mxu0 0
        %2239 = vmatmul.mubr.bf16.gmra.mxu0 %v2204
        %v2240 = vpop.f32.mrf.mxu0
        %v2241 = vadd.f32 0.0, %v2240
        %v2242 = vpop.f32.mrf.mxu0
        %v2243 = vpop.f32.mrf.mxu0
        %v2244 = vpop.f32.mrf.mxu0
        %2245 = vdwg.mxu0
        %v2247 = vsel %vm1818, %v2200, 0
        %2249 = vmatprep.subr.bf16.mxu0 0
        %2250 = vmatpush1.bf16.msra.mxu0 0
        %2251 = vmatprep.subr.bf16.mxu0 0
        %2252 = vmatpush1.bf16.msra.mxu0 0
        %2253 = vmatprep.subr.bf16.mxu0 0
        %2254 = vmatpush1.bf16.msra.mxu0 0
        %2255 = vmatprep.subr.bf16.mxu0 0
        %2256 = vmatpush1.bf16.msra.mxu0 0
        %2257 = vmatprep.subr.bf16.mxu0 0
        %2258 = vmatpush1.bf16.msra.mxu0 0
        %2259 = vmatprep.subr.bf16.mxu0 0
        %2260 = vmatpush1.bf16.msra.mxu0 0
        %2261 = vmatprep.subr.bf16.mxu0 0
        %2262 = vmatpush1.bf16.msra.mxu0 0
        %2263 = vmatprep.subr.bf16.mxu0 0
        %2264 = vmatpush1.bf16.msra.mxu0 %v1217
        %2265 = vmatprep.subr.bf16.mxu0 0
        %2266 = vmatpush2.bf16.msra.mxu0 0
        %2267 = vmatprep.subr.bf16.mxu0 0
        %2268 = vmatpush2.bf16.msra.mxu0 0
        %2269 = vmatprep.subr.bf16.mxu0 0
        %2270 = vmatpush2.bf16.msra.mxu0 0
        %2271 = vmatprep.subr.bf16.mxu0 0
        %2272 = vmatpush2.bf16.msra.mxu0 0
        %2273 = vmatprep.subr.bf16.mxu0 0
        %2274 = vmatpush2.bf16.msra.mxu0 0
        %2275 = vmatprep.subr.bf16.mxu0 0
        %2276 = vmatpush2.bf16.msra.mxu0 0
        %2277 = vmatprep.subr.bf16.mxu0 0
        %2278 = vmatpush2.bf16.msra.mxu0 0
        %2279 = vmatprep.subr.bf16.mxu0 0
        %2280 = vmatpush2.bf16.msra.mxu0 0
        %2281 = vmatprep.mubr.bf16.mxu0 0
        %2282 = vmatmul.mubr.bf16.gmra.mxu0 %v2247
        %v2283 = vpop.f32.mrf.mxu0
        %v2284 = vadd.f32 0.0, %v2283
        %v2285 = vpop.f32.mrf.mxu0
        %v2286 = vpop.f32.mrf.mxu0
        %v2287 = vpop.f32.mrf.mxu0
        %2288 = vdwg.mxu0
        %v2290 = vsel %vm1818, %v2201, 0
        %2292 = vmatprep.subr.bf16.mxu0 0
        %2293 = vmatpush1.bf16.msra.mxu0 0
        %2294 = vmatprep.subr.bf16.mxu0 0
        %2295 = vmatpush1.bf16.msra.mxu0 0
        %2296 = vmatprep.subr.bf16.mxu0 0
        %2297 = vmatpush1.bf16.msra.mxu0 0
        %2298 = vmatprep.subr.bf16.mxu0 0
        %2299 = vmatpush1.bf16.msra.mxu0 0
        %2300 = vmatprep.subr.bf16.mxu0 0
        %2301 = vmatpush1.bf16.msra.mxu0 0
        %2302 = vmatprep.subr.bf16.mxu0 0
        %2303 = vmatpush1.bf16.msra.mxu0 0
        %2304 = vmatprep.subr.bf16.mxu0 0
        %2305 = vmatpush1.bf16.msra.mxu0 0
        %2306 = vmatprep.subr.bf16.mxu0 0
        %2307 = vmatpush1.bf16.msra.mxu0 %v1218
        %2308 = vmatprep.subr.bf16.mxu0 0
        %2309 = vmatpush2.bf16.msra.mxu0 0
        %2310 = vmatprep.subr.bf16.mxu0 0
        %2311 = vmatpush2.bf16.msra.mxu0 0
        %2312 = vmatprep.subr.bf16.mxu0 0
        %2313 = vmatpush2.bf16.msra.mxu0 0
        %2314 = vmatprep.subr.bf16.mxu0 0
        %2315 = vmatpush2.bf16.msra.mxu0 0
        %2316 = vmatprep.subr.bf16.mxu0 0
        %2317 = vmatpush2.bf16.msra.mxu0 0
        %2318 = vmatprep.subr.bf16.mxu0 0
        %2319 = vmatpush2.bf16.msra.mxu0 0
        %2320 = vmatprep.subr.bf16.mxu0 0
        %2321 = vmatpush2.bf16.msra.mxu0 0
        %2322 = vmatprep.subr.bf16.mxu0 0
        %2323 = vmatpush2.bf16.msra.mxu0 0
        %2324 = vmatprep.mubr.bf16.mxu0 0
        %2325 = vmatmul.mubr.bf16.gmra.mxu0 %v2290
        %v2326 = vpop.f32.mrf.mxu0
        %v2327 = vadd.f32 0.0, %v2326
        %v2328 = vpop.f32.mrf.mxu0
        %v2329 = vpop.f32.mrf.mxu0
        %v2330 = vpop.f32.mrf.mxu0
        %2331 = vdwg.mxu0
        %v2333 = vsel %vm1818, %v2202, 0
        %2335 = vmatprep.subr.bf16.mxu0 0
        %2336 = vmatpush1.bf16.msra.mxu0 0
        %2337 = vmatprep.subr.bf16.mxu0 0
        %2338 = vmatpush1.bf16.msra.mxu0 0
        %2339 = vmatprep.subr.bf16.mxu0 0
        %2340 = vmatpush1.bf16.msra.mxu0 0
        %2341 = vmatprep.subr.bf16.mxu0 0
        %2342 = vmatpush1.bf16.msra.mxu0 0
        %2343 = vmatprep.subr.bf16.mxu0 0
        %2344 = vmatpush1.bf16.msra.mxu0 0
        %2345 = vmatprep.subr.bf16.mxu0 0
        %2346 = vmatpush1.bf16.msra.mxu0 0
        %2347 = vmatprep.subr.bf16.mxu0 0
        %2348 = vmatpush1.bf16.msra.mxu0 0
        %2349 = vmatprep.subr.bf16.mxu0 0
        %2350 = vmatpush1.bf16.msra.mxu0 %v1219
        %2351 = vmatprep.subr.bf16.mxu0 0
        %2352 = vmatpush2.bf16.msra.mxu0 0
        %2353 = vmatprep.subr.bf16.mxu0 0
        %2354 = vmatpush2.bf16.msra.mxu0 0
        %2355 = vmatprep.subr.bf16.mxu0 0
        %2356 = vmatpush2.bf16.msra.mxu0 0
        %2357 = vmatprep.subr.bf16.mxu0 0
        %2358 = vmatpush2.bf16.msra.mxu0 0
        %2359 = vmatprep.subr.bf16.mxu0 0
        %2360 = vmatpush2.bf16.msra.mxu0 0
        %2361 = vmatprep.subr.bf16.mxu0 0
        %2362 = vmatpush2.bf16.msra.mxu0 0
        %2363 = vmatprep.subr.bf16.mxu0 0
        %2364 = vmatpush2.bf16.msra.mxu0 0
        %2365 = vmatprep.subr.bf16.mxu0 0
        %2366 = vmatpush2.bf16.msra.mxu0 0
        %2367 = vmatprep.mubr.bf16.mxu0 0
        %2368 = vmatmul.mubr.bf16.gmra.mxu0 %v2333
        %v2369 = vpop.f32.mrf.mxu0
        %v2370 = vadd.f32 0.0, %v2369
        %v2371 = vpop.f32.mrf.mxu0
        %v2372 = vpop.f32.mrf.mxu0
        %v2373 = vpop.f32.mrf.mxu0
        %2374 = vdwg.mxu0
        %2376 = vrot.lane.b32.xlu0 %v2284, 8
        %v2377 = vpop.permute.xlu0 %2376
        %2380 = vrot.lane.b32.xlu0 %v2327, 16
        %v2381 = vpop.permute.xlu0 %2380
        %2384 = vrot.lane.b32.xlu0 %v2370, 24
        %v2385 = vpop.permute.xlu0 %2384
        %v2387 = vsel %vm1374, %v2241, %v2377
        %v2388 = vsel %vm1818, %v2387, %v2381
        %v2389 = vsel %vm1820, %v2388, %v2385
        %v2390 = vpack.c.bf16 %v2389, %v2389
        %v2392 = vlaneseq
        %v2393 = vshrl.u32 %v2392, 7
        %v2394 = vsub.s32 0, %v2393
        %v2395 = vrot.slane %v1056, %v2394
        %v2398 = vsel %vm1076, %v2390, 0
        %2400 = vmatprep.subr.bf16.mxu0 0
        %2401 = vmatpush1.bf16.msra.mxu0 0
        %2402 = vmatprep.subr.bf16.mxu0 0
        %2403 = vmatpush1.bf16.msra.mxu0 0
        %2404 = vmatprep.subr.bf16.mxu0 0
        %2405 = vmatpush1.bf16.msra.mxu0 0
        %2406 = vmatprep.subr.bf16.mxu0 0
        %2407 = vmatpush1.bf16.msra.mxu0 0
        %2408 = vmatprep.subr.bf16.mxu0 0
        %2409 = vmatpush1.bf16.msra.mxu0 0
        %2410 = vmatprep.subr.bf16.mxu0 0
        %2411 = vmatpush1.bf16.msra.mxu0 0
        %2412 = vmatprep.subr.bf16.mxu0 0
        %2413 = vmatpush1.bf16.msra.mxu0 %v1031
        %2414 = vmatprep.subr.bf16.mxu0 0
        %2415 = vmatpush1.bf16.msra.mxu0 %v1030
        %2416 = vmatprep.subr.bf16.mxu0 0
        %2417 = vmatpush2.bf16.msra.mxu0 0
        %2418 = vmatprep.subr.bf16.mxu0 0
        %2419 = vmatpush2.bf16.msra.mxu0 0
        %2420 = vmatprep.subr.bf16.mxu0 0
        %2421 = vmatpush2.bf16.msra.mxu0 0
        %2422 = vmatprep.subr.bf16.mxu0 0
        %2423 = vmatpush2.bf16.msra.mxu0 0
        %2424 = vmatprep.subr.bf16.mxu0 0
        %2425 = vmatpush2.bf16.msra.mxu0 0
        %2426 = vmatprep.subr.bf16.mxu0 0
        %2427 = vmatpush2.bf16.msra.mxu0 0
        %2428 = vmatprep.subr.bf16.mxu0 0
        %2429 = vmatpush2.bf16.msra.mxu0 0
        %2430 = vmatprep.subr.bf16.mxu0 0
        %2431 = vmatpush2.bf16.msra.mxu0 0
        %2432 = vmatprep.mubr.bf16.mxu0 0
        %2433 = vmatmul.mubr.bf16.gmra.mxu0 %v2398
        %v2434 = vpop.f32.mrf.mxu0
        %v2435 = vadd.f32 %v2395, %v2434
        %v2436 = vpop.f32.mrf.mxu0
        %v2437 = vpop.f32.mrf.mxu0
        %v2438 = vpop.f32.mrf.mxu0
        %2439 = vdwg.mxu0
        %v2440 = vadd.f32 %v1900, %v2435
        %v2441 = vsel %vm1076, %v2440, 0.0
        %2442 = vadd.xlane.f32.xlu0 %v2441
        %v2443 = vpop.xlane.xlu0 %2442
        %v2444 = vmul.f32 %v2443, %v1876
        %v2445 = vsub.f32 %v2440, %v2444
        %v2446 = vmul.f32 %v2445, %v2445
        %v2447 = vsel %vm1076, %v2446, 0.0
        %2448 = vadd.xlane.f32.xlu0 %v2447
        %v2449 = vpop.xlane.xlu0 %2448
        %v2450 = vmul.f32 %v2449, %v1876
        %v2451 = vadd.f32 %v2450, 1e-05
        %v2452 = vrsqrt.pop %v2451
        %v2453 = vmul.f32 %v2445, %v2452
        %v2455 = vlaneseq
        %v2456 = vshrl.u32 %v2455, 7
        %v2457 = vsub.s32 0, %v2456
        %v2458 = vrot.slane %v1061, %v2457
        %v2460 = vmul.f32 %v2453, %v2458
        %v2462 = vlaneseq
        %v2463 = vshrl.u32 %v2462, 7
        %v2464 = vsub.s32 0, %v2463
        %v2465 = vrot.slane %v1062, %v2464
        %v2467 = vadd.f32 %v2460, %v2465
        %v2468 = vpack.c.bf16 %v2467, %v2467
        %v2470 = vlaneseq
        %v2471 = vshrl.u32 %v2470, 7
        %v2472 = vsub.s32 0, %v2471
        %v2473 = vrot.slane %v1057, %v2472
        %v2476 = vsel %vm1076, %v2468, 0
        %2478 = vmatprep.subr.bf16.mxu0 0
        %2479 = vmatpush1.bf16.msra.mxu0 0
        %2480 = vmatprep.subr.bf16.mxu0 0
        %2481 = vmatpush1.bf16.msra.mxu0 0
        %2482 = vmatprep.subr.bf16.mxu0 0
        %2483 = vmatpush1.bf16.msra.mxu0 0
        %2484 = vmatprep.subr.bf16.mxu0 0
        %2485 = vmatpush1.bf16.msra.mxu0 0
        %2486 = vmatprep.subr.bf16.mxu0 0
        %2487 = vmatpush1.bf16.msra.mxu0 0
        %2488 = vmatprep.subr.bf16.mxu0 0
        %2489 = vmatpush1.bf16.msra.mxu0 0
        %2490 = vmatprep.subr.bf16.mxu0 0
        %2491 = vmatpush1.bf16.msra.mxu0 %v1037
        %2492 = vmatprep.subr.bf16.mxu0 0
        %2493 = vmatpush1.bf16.msra.mxu0 %v1036
        %2494 = vmatprep.subr.bf16.mxu0 0
        %2495 = vmatpush2.bf16.msra.mxu0 0
        %2496 = vmatprep.subr.bf16.mxu0 0
        %2497 = vmatpush2.bf16.msra.mxu0 0
        %2498 = vmatprep.subr.bf16.mxu0 0
        %2499 = vmatpush2.bf16.msra.mxu0 0
        %2500 = vmatprep.subr.bf16.mxu0 0
        %2501 = vmatpush2.bf16.msra.mxu0 0
        %2502 = vmatprep.subr.bf16.mxu0 0
        %2503 = vmatpush2.bf16.msra.mxu0 0
        %2504 = vmatprep.subr.bf16.mxu0 0
        %2505 = vmatpush2.bf16.msra.mxu0 0
        %2506 = vmatprep.subr.bf16.mxu0 0
        %2507 = vmatpush2.bf16.msra.mxu0 0
        %2508 = vmatprep.subr.bf16.mxu0 0
        %2509 = vmatpush2.bf16.msra.mxu0 0
        %2510 = vmatprep.mubr.bf16.mxu0 0
        %2511 = vmatmul.mubr.bf16.gmra.mxu0 %v2476
        %v2512 = vpop.f32.mrf.mxu0
        %v2513 = vadd.f32 %v2473, %v2512
        %v2514 = vpop.f32.mrf.mxu0
        %v2515 = vpop.f32.mrf.mxu0
        %v2516 = vpop.f32.mrf.mxu0
        %2517 = vdwg.mxu0
        %v2518 = vmax.f32 %v2513, 0.0
        %v2519 = vpack.c.bf16 %v2518, %v2518
        %v2521 = vlaneseq
        %v2522 = vshrl.u32 %v2521, 7
        %v2523 = vsub.s32 0, %v2522
        %v2524 = vrot.slane %v1058, %v2523
        %vm2526 = vcmask 523264
        %v2528 = vsel %vm2526, %v2519, 0
        %2530 = vmatprep.subr.bf16.mxu0 0
        %2531 = vmatpush1.bf16.msra.mxu0 0
        %2532 = vmatprep.subr.bf16.mxu0 0
        %2533 = vmatpush1.bf16.msra.mxu0 0
        %2534 = vmatprep.subr.bf16.mxu0 0
        %2535 = vmatpush1.bf16.msra.mxu0 0
        %2536 = vmatprep.subr.bf16.mxu0 0
        %2537 = vmatpush1.bf16.msra.mxu0 0
        %2538 = vmatprep.subr.bf16.mxu0 0
        %2539 = vmatpush1.bf16.msra.mxu0 %v1049
        %2540 = vmatprep.subr.bf16.mxu0 0
        %2541 = vmatpush1.bf16.msra.mxu0 %v1048
        %2542 = vmatprep.subr.bf16.mxu0 0
        %2543 = vmatpush1.bf16.msra.mxu0 %v1047
        %2544 = vmatprep.subr.bf16.mxu0 0
        %2545 = vmatpush1.bf16.msra.mxu0 %v1046
        %2546 = vmatprep.subr.bf16.mxu0 0
        %2547 = vmatpush2.bf16.msra.mxu0 0
        %2548 = vmatprep.subr.bf16.mxu0 0
        %2549 = vmatpush2.bf16.msra.mxu0 0
        %2550 = vmatprep.subr.bf16.mxu0 0
        %2551 = vmatpush2.bf16.msra.mxu0 0
        %2552 = vmatprep.subr.bf16.mxu0 0
        %2553 = vmatpush2.bf16.msra.mxu0 0
        %2554 = vmatprep.subr.bf16.mxu0 0
        %2555 = vmatpush2.bf16.msra.mxu0 0
        %2556 = vmatprep.subr.bf16.mxu0 0
        %2557 = vmatpush2.bf16.msra.mxu0 0
        %2558 = vmatprep.subr.bf16.mxu0 0
        %2559 = vmatpush2.bf16.msra.mxu0 0
        %2560 = vmatprep.subr.bf16.mxu0 0
        %2561 = vmatpush2.bf16.msra.mxu0 0
        %2562 = vmatprep.mubr.bf16.mxu0 0
        %2563 = vmatmul.mubr.bf16.gmra.mxu0 %v2528
        %v2564 = vpop.f32.mrf.mxu0
        %v2565 = vadd.f32 %v2524, %v2564
        %v2566 = vpop.f32.mrf.mxu0
        %v2567 = vpop.f32.mrf.mxu0
        %v2568 = vpop.f32.mrf.mxu0
        %2569 = vdwg.mxu0
        %v2570 = vadd.f32 %v2467, %v2565
        %v2571 = vsel %vm1076, %v2570, 0.0
        %2572 = vadd.xlane.f32.xlu0 %v2571
        %v2573 = vpop.xlane.xlu0 %2572
        %v2574 = vmul.f32 %v2573, %v1876
        %v2575 = vsub.f32 %v2570, %v2574
        %v2576 = vmul.f32 %v2575, %v2575
        %v2577 = vsel %vm1076, %v2576, 0.0
        %2578 = vadd.xlane.f32.xlu0 %v2577
        %v2579 = vpop.xlane.xlu0 %2578
        %v2580 = vmul.f32 %v2579, %v1876
        %v2581 = vadd.f32 %v2580, 1e-05
        %v2582 = vrsqrt.pop %v2581
        %v2583 = vmul.f32 %v2575, %v2582
        %v2585 = vlaneseq
        %v2586 = vshrl.u32 %v2585, 7
        %v2587 = vsub.s32 0, %v2586
        %v2588 = vrot.slane %v1063, %v2587
        %v2590 = vmul.f32 %v2583, %v2588
        %v2592 = vlaneseq
        %v2593 = vshrl.u32 %v2592, 7
        %v2594 = vsub.s32 0, %v2593
        %v2595 = vrot.slane %v1064, %v2594
        %v2597 = vadd.f32 %v2590, %v2595
      $region145: #{transformer_decoder.1} parent=139 // loop_footer
        %s1225 = sadd.s32 1, %s1221
      $region146: #{transformer_decoder.1} parent=139 // loop_footer_branch
        %1220 = sbr.rel target = $region142
      $region147: #{transformer_decoder.1} parent=139 // loop_exit
        _
      %v2598 = vsel %vm1076, %v1226, 0.0
      %2599 = vadd.xlane.f32.xlu0 %v2598
      %v2600 = vpop.xlane.xlu0 %2599
      %v2601 = vrcp.pop 32.0
      %v2602 = vmul.f32 %v2600, %v2601
      %v2603 = vsub.f32 %v1226, %v2602
      %v2604 = vmul.f32 %v2603, %v2603
      %v2605 = vsel %vm1076, %v2604, 0.0
      %2606 = vadd.xlane.f32.xlu0 %v2605
      %v2607 = vpop.xlane.xlu0 %2606
      %v2608 = vmul.f32 %v2607, %v2601
      %v2609 = vadd.f32 %v2608, 1e-05
      %v2610 = vrsqrt.pop %v2609
      %v2611 = vmul.f32 %v2603, %v2610
      %v2613 = vlaneseq
      %v2614 = vshrl.u32 %v2613, 7
      %v2615 = vsub.s32 0, %v2614
      %v2616 = vrot.slane %v1065, %v2615
      %v2618 = vmul.f32 %v2611, %v2616
      %v2620 = vlaneseq
      %v2621 = vshrl.u32 %v2620, 7
      %v2622 = vsub.s32 0, %v2621
      %v2623 = vrot.slane %v1066, %v2622
      %v2625 = vadd.f32 %v2618, %v2623
      %2626 = vst.msk [vmem:[%s982] sm:$0xff] %vm1076, %v2625
      %p2627 = scmp.lt.s32.totalorder %s72, 1
      %s2628 = scalar_select %p2627, %s72, 1
      %s2629 = smul.addr %s2628, 8
      %s2630 = scalar_lea.vmem %s61, %s2629
      // Predicated region
      $region148: #{transformer_decoder.1} parent=139 // pred_check
        %p2631 = pneg %p740
      $region149: #{transformer_decoder.1} parent=139 // pred_check_branch
        %2633 = sbr.rel (%p2631) target = $region151
      $region150: #{transformer_decoder.1} parent=139 // pred_region
        _
      $region151: #{transformer_decoder.1} parent=139 // pred_fallthru
        _
    $region140: #{transformer_decoder.1} parent=5 // pred_fallthru
      _
    %p2634 = scmp.le.s32.totalorder 2, %s67
    // Predicated region
    $region152: #{transformer_decoder.1} parent=5 // pred_check
      %p2635 = pneg %p2634
    $region153: #{transformer_decoder.1} parent=5 // pred_check_branch
      %2637 = sbr.rel (%p2635) target = $region155
    $region154: #{transformer_decoder.1} parent=5 // pred_region
      %s2638 = ssub.s32 %s67, 2
      // Predicated region
      $region156: #{transformer_decoder.1} parent=154 // pred_check
        %p2639 = pneg %p746
      $region157: #{transformer_decoder.1} parent=154 // pred_check_branch
        %2641 = sbr.rel (%p2639) target = $region159
      $region158: #{transformer_decoder.1} parent=154 // pred_region
        %p2642 = scmp.lt.s32.totalorder %s73, 1
        %s2643 = scalar_select %p2642, %s73, 1
        %s2644 = smul.addr %s2643, 8
        %s2645 = scalar_lea.vmem %s61, %s2644
      $region159: #{transformer_decoder.1} parent=154 // pred_fallthru
        _
    $region155: #{transformer_decoder.1} parent=5 // pred_fallthru
      _
  $region6: #{transformer_decoder.1} parent=0 // loop_footer
    %s71 = sadd.s32 1, %s67
  $region7: #{transformer_decoder.1} parent=0 // loop_footer_branch
    %66 = sbr.rel target = $region3
  $region8: #{transformer_decoder.1} parent=0 // loop_exit
    _

</llo_original>
